<compile_context>
chip_gen: v7x
topology: tpu7x:2x2x1
jax: 0.10.0
libtpu: 0.0.40
codegen_flags: <defaults>
</compile_context>

<pallas_src>
import functools
import math

import jax
import jax.numpy as jnp
from jax.experimental import pallas as pl
from jax.experimental.pallas import tpu as pltpu


def _round_up(v, m):
    return (v + m - 1) // m * m


# ------------------ fused GroupNorm -> Swish -> Conv3x3 kernel ---------------

def _fused_block_kernel(*refs, H, W, eps, has_noise, res_kind):
    it = iter(refs)
    x_ref = next(it)          # (1, H*W, Cin)   bf16
    gamma_ref = next(it)      # (1, Cin)        f32
    beta_ref = next(it)       # (1, Cin)        f32
    gmap_ref = next(it)       # (Cin, G)        f32   channel -> group one-hot
    gmapt_ref = next(it)      # (G, Cin)        f32   group -> channel one-hot
    w_ref = next(it)          # (9*Cin, Cout)   bf16  taps (dy, dx) row-major
    b_ref = next(it)          # (1, Cout)       f32
    t_ref = next(it) if has_noise else None     # (1, 1, Dn)   bf16
    nw_ref = next(it) if has_noise else None    # (Dn, Cout)   bf16
    nb_ref = next(it) if has_noise else None    # (1, Cout)    f32
    skip_ref = next(it) if res_kind is not None else None   # (1, HW, Cs) bf16
    rw_ref = next(it) if res_kind == "conv" else None       # (Cs, Cout)  bf16
    rb_ref = next(it) if res_kind == "conv" else None       # (1, Cout)   f32
    o_ref = next(it)          # (1, HW, Cout)   bf16
    z_ref = next(it)          # VMEM scratch (Rz, 3*Cin) f32

    HW = H * W
    Cin = x_ref.shape[-1]
    Cout = o_ref.shape[-1]
    Rz = z_ref.shape[0]
    count = float(HW * (Cin // gmap_ref.shape[-1]))

    # -------- GroupNorm: single-sweep sum / sum-of-squares stats (f32) -------
    x2d = x_ref[0].astype(jnp.float32)                               # (HW, Cin)
    s_c = jnp.sum(x2d, axis=0, keepdims=True)                        # (1, Cin)
    ss_c = jnp.sum(x2d * x2d, axis=0, keepdims=True)                 # (1, Cin)
    inv_n = 1.0 / count
    mean_g = jnp.dot(s_c, gmap_ref[...],
                     preferred_element_type=jnp.float32) * inv_n     # (1, G)
    ex2_g = jnp.dot(ss_c, gmap_ref[...],
                    preferred_element_type=jnp.float32) * inv_n      # (1, G)
    var_g = jnp.maximum(ex2_g - mean_g * mean_g, 0.0)
    inv_g = jax.lax.rsqrt(var_g + eps)
    mean_c = jnp.dot(mean_g, gmapt_ref[...],
                     preferred_element_type=jnp.float32)             # (1, Cin)
    inv_c = jnp.dot(inv_g, gmapt_ref[...],
                    preferred_element_type=jnp.float32)              # (1, Cin)
    scale_c = inv_c * gamma_ref[...]
    shift_c = beta_ref[...] - mean_c * scale_c
    y = x2d * scale_c + shift_c
    y = y * jax.nn.sigmoid(y)                                        # Swish

    # ---- stage dx-folded, border-masked activation in row-padded scratch ----
    # Column block dx holds y shifted so that, for every dy, the single slab
    # z[dy*W : dy*W + HW, :] is exactly the (HW, 3*Cin) patch of conv row dy.
    # Left/right image borders are zeroed at staging (w'=W-1 for dx=0 block,
    # w'=0 for dx=2 block); top/bottom borders come from the zeroed pad rows.
    z_ref[0:W + 1, :] = jnp.zeros((W + 1, 3 * Cin), jnp.float32)
    z_ref[HW + W - 1:Rz, :] = jnp.zeros((Rz - (HW + W - 1), 3 * Cin),
                                        jnp.float32)
    col = jax.lax.broadcasted_iota(jnp.int32, (HW, 1), 0) % W
    zero = jnp.zeros_like(y)
    z_ref[W + 1:W + 1 + HW, 0:Cin] = jnp.where(col != W - 1, y, zero)       # dx=0
    z_ref[W:W + HW, Cin:2 * Cin] = y                                         # dx=1
    z_ref[W - 1:W - 1 + HW, 2 * Cin:3 * Cin] = jnp.where(col != 0, y, zero)  # dx=2

    # -------- 3x3 conv: 3 MXU matmuls (one per dy) with K = 3*Cin ------------
    acc = jnp.zeros((HW, Cout), jnp.float32)
    for dy in range(3):
        patch = z_ref[dy * W:dy * W + HW, :].astype(jnp.bfloat16)
        acc = acc + jnp.dot(patch, w_ref[dy * 3 * Cin:(dy + 1) * 3 * Cin, :],
                            preferred_element_type=jnp.float32)
    acc = acc + b_ref[...]

    # ------------------------------ fused epilogues --------------------------
    if has_noise:   # FeatureWiseAffine (use_affine_level=False): + Linear(t)
        nvec = jnp.dot(t_ref[0], nw_ref[...],
                       preferred_element_type=jnp.float32) + nb_ref[...]
        acc = acc + nvec
    if res_kind == "identity":
        acc = acc + skip_ref[0].astype(jnp.float32)
    elif res_kind == "conv":      # fused 1x1 res_conv
        acc = acc + (jnp.dot(skip_ref[0], rw_ref[...],
                             preferred_element_type=jnp.float32) + rb_ref[...])

    o_ref[0] = acc.astype(o_ref.dtype)


def fused_block(x, gamma, beta, groups, conv_w, conv_b, *,
                noise_emb=None, noise_w=None, noise_b=None,
                skip=None, res_w=None, res_b=None,
                eps=1e-5, out_dtype=jnp.bfloat16):
    """Fused GroupNorm -> Swish -> Conv3x3(pad=1) with optional fused adds.

    x:         (B, H, W, Cin) NHWC
    conv_w:    (9*Cin, Cout) with taps ordered (dy, dx) row-major, channel minor
               (== torch Conv2d weight .permute(2, 3, 1, 0).reshape(9*Cin, Cout))
    noise_emb: (B, Dn) noise embedding; noise_w/noise_b define the fused Linear
               whose output is broadcast-added over space (block1 epilogue).
    skip:      (B, H, W, Cs) residual source, added through a fused 1x1 conv if
               res_w/res_b are given, else directly (requires Cs == Cout).
    """
    B, H, W, Cin = x.shape
    HW = H * W
    Cout = conv_w.shape[-1]
    assert conv_w.shape[0] == 9 * Cin
    assert Cin % groups == 0
    cg = Cin // groups
    gmap = (jnp.arange(Cin)[:, None] // cg ==
            jnp.arange(groups)[None, :]).astype(jnp.float32)          # (Cin, G)

    operands = [
        x.reshape(B, HW, Cin).astype(jnp.bfloat16),
        gamma.reshape(1, Cin).astype(jnp.float32),
        beta.reshape(1, Cin).astype(jnp.float32),
        gmap,
        gmap.T,
        conv_w.astype(jnp.bfloat16),
        conv_b.reshape(1, Cout).astype(jnp.float32),
    ]
    in_specs = [
        pl.BlockSpec((1, HW, Cin), lambda b: (b, 0, 0)),
        pl.BlockSpec((1, Cin), lambda b: (0, 0)),
        pl.BlockSpec((1, Cin), lambda b: (0, 0)),
        pl.BlockSpec((Cin, groups), lambda b: (0, 0)),
        pl.BlockSpec((groups, Cin), lambda b: (0, 0)),
        pl.BlockSpec((9 * Cin, Cout), lambda b: (0, 0)),
        pl.BlockSpec((1, Cout), lambda b: (0, 0)),
    ]

    has_noise = noise_emb is not None
    if has_noise:
        Dn = noise_emb.shape[-1]
        operands += [
            noise_emb.reshape(B, 1, Dn).astype(jnp.bfloat16),
            noise_w.astype(jnp.bfloat16),
            noise_b.reshape(1, Cout).astype(jnp.float32),
        ]
        in_specs += [
            pl.BlockSpec((1, 1, Dn), lambda b: (b, 0, 0)),
            pl.BlockSpec((Dn, Cout), lambda b: (0, 0)),
            pl.BlockSpec((1, Cout), lambda b: (0, 0)),
        ]

    res_kind = None
    if skip is not None:
        Cs = skip.shape[-1]
        res_kind = "conv" if res_w is not None else "identity"
        if res_kind == "identity":
            assert Cs == Cout
        operands.append(skip.reshape(B, HW, Cs).astype(jnp.bfloat16))
        in_specs.append(pl.BlockSpec((1, HW, Cs), lambda b: (b, 0, 0)))
        if res_kind == "conv":
            operands += [res_w.astype(jnp.bfloat16),
                         res_b.reshape(1, Cout).astype(jnp.float32)]
            in_specs += [pl.BlockSpec((Cs, Cout), lambda b: (0, 0)),
                         pl.BlockSpec((1, Cout), lambda b: (0, 0))]

    # Row-padded staging scratch: data rows per column block start at W+1-dx,
    # every per-dy read slab starts at dy*W; 2W+HW rows cover all reads.
    Rz = _round_up(HW + 2 * W, 8)
    scratch_bytes = Rz * 3 * Cin * 4

    # Scoped-VMEM budget: double-buffered input/output blocks + scratch, with
    # generous headroom (clipped so it is safe on every TPU generation).
    blk_bytes = scratch_bytes + 2 * HW * Cout * jnp.dtype(out_dtype).itemsize
    for op, spec in zip(operands, in_specs):
        blk_bytes += 2 * math.prod(spec.block_shape) * op.dtype.itemsize
    vmem_limit = int(min(48 * 2**20, max(32 * 2**20, 4 * blk_bytes)))

    kernel = functools.partial(_fused_block_kernel, H=H, W=W, eps=eps,
                               has_noise=has_noise, res_kind=res_kind)
    out = pl.pallas_call(
        kernel,
        out_shape=jax.ShapeDtypeStruct((B, HW, Cout), out_dtype),
        grid=(B,),
        in_specs=in_specs,
        out_specs=pl.BlockSpec((1, HW, Cout), lambda b: (b, 0, 0)),
        scratch_shapes=[pltpu.VMEM((Rz, 3 * Cin), jnp.float32)],
        compiler_params=pltpu.CompilerParams(
            dimension_semantics=("parallel",),
            vmem_limit_bytes=vmem_limit),
    )(*operands)
    return out.reshape(B, H, W, Cout)


# ------------------------------ module forward -------------------------------

def resnet_block_forward(params, x_nchw, time_emb, groups):
    """Pallas forward of SR3 ResnetBlock. NCHW in / NCHW out (PyTorch layout)."""
    x = jnp.transpose(x_nchw, (0, 2, 3, 1))                          # NHWC

    # block1 (GN -> Swish -> Conv3x3) with the FeatureWiseAffine noise Linear
    # and its broadcast add fused into the kernel epilogue.
    h = fused_block(x, params["gn1_gamma"], params["gn1_beta"], groups,
                    params["conv1_w"], params["conv1_b"],
                    noise_emb=time_emb, noise_w=params["noise_w"],
                    noise_b=params["noise_b"])

    # block2 with the residual path (fused 1x1 res_conv since dim != dim_out).
    out = fused_block(h, params["gn2_gamma"], params["gn2_beta"], groups,
                      params["conv2_w"], params["conv2_b"],
                      skip=x, res_w=params.get("res_w"),
                      res_b=params.get("res_b"))
    return jnp.transpose(out, (0, 3, 1, 2)).astype(jnp.float32)      # NCHW


# ------------------------- pure-JAX reference (checks) -----------------------

def resnet_block_reference(params, x_nchw, time_emb, groups, eps=1e-5):
    """Pure-JAX reference that mirrors the kernels' bf16 storage points."""
    hp = jax.lax.Precision.HIGHEST
    q = lambda v: v.astype(jnp.bfloat16).astype(jnp.float32)
    x = q(jnp.transpose(x_nchw, (0, 2, 3, 1)))                       # NHWC

    def gn_swish(v, gamma, beta):
        b_, h_, w_, c_ = v.shape
        vg = v.reshape(b_, h_ * w_, groups, c_ // groups)
        mean = vg.mean(axis=(1, 3), keepdims=True)
        var = jnp.mean((vg - mean) ** 2, axis=(1, 3), keepdims=True)
        y = ((vg - mean) * jax.lax.rsqrt(var + eps)).reshape(v.shape)
        y = y * gamma + beta
        return y * jax.nn.sigmoid(y)

    def conv3x3(v, w, b):
        c_ = v.shape[-1]
        return jax.lax.conv_general_dilated(
            v, q(w).reshape(3, 3, c_, -1), (1, 1), ((1, 1), (1, 1)),
            dimension_numbers=("NHWC", "HWIO", "NHWC"), precision=hp) + b

    noise = jnp.dot(q(time_emb), q(params["noise_w"]), precision=hp) \
        + params["noise_b"]
    h = conv3x3(q(gn_swish(x, params["gn1_gamma"], params["gn1_beta"])),
                params["conv1_w"], params["conv1_b"])
    h = q(h + noise[:, None, None, :])
    out = conv3x3(q(gn_swish(h, params["gn2_gamma"], params["gn2_beta"])),
                  params["conv2_w"], params["conv2_b"])
    if "res_w" in params:
        res = jnp.dot(x, q(params["res_w"]), precision=hp) + params["res_b"]
    else:
        res = x
    return jnp.transpose(q(out + res), (0, 3, 1, 2))


# ------------------------------------ main -----------------------------------

if __name__ == "__main__":
    B, H, W = 2, 16, 16
    dim, dim_out, noise_dim, groups = 32, 64, 32, 8

    root = jax.random.PRNGKey(0)
    keys = jax.random.split(root, 16)
    x_nchw = jax.random.normal(keys[0], (B, dim, H, W), dtype=jnp.float32)
    time_emb = jax.random.normal(keys[1], (B, noise_dim), dtype=jnp.float32)

    def n(k, shape, scale=0.1):
        return scale * jax.random.normal(k, shape, dtype=jnp.float32)

    params = {
        "noise_w": n(keys[2], (noise_dim, dim_out)),
        "noise_b": n(keys[3], (dim_out,)),
        "gn1_gamma": 1.0 + n(keys[4], (dim,), 0.05),
        "gn1_beta": n(keys[5], (dim,), 0.05),
        "conv1_w": n(keys[6], (9 * dim, dim_out)),
        "conv1_b": n(keys[7], (dim_out,)),
        "gn2_gamma": 1.0 + n(keys[8], (dim_out,), 0.05),
        "gn2_beta": n(keys[9], (dim_out,), 0.05),
        "conv2_w": n(keys[10], (9 * dim_out, dim_out)),
        "conv2_b": n(keys[11], (dim_out,)),
        # dim != dim_out -> res_conv is a 1x1 convolution
        "res_w": n(keys[12], (dim, dim_out)),
        "res_b": n(keys[13], (dim_out,)),
    }

    out = resnet_block_forward(params, x_nchw, time_emb, groups)
    out = jax.block_until_ready(out)
    assert out.shape == (B, dim_out, H, W), out.shape
    assert bool(jnp.all(jnp.isfinite(out)))

    ref = resnet_block_reference(params, x_nchw, time_emb, groups)
    max_err = float(jnp.max(jnp.abs(out - ref)))
    assert max_err < 1e-1, f"mismatch vs pure-JAX reference: {max_err}"

    print("KERNEL_OK")
</pallas_src>

<mosaic_0001>
module attributes {stable_mosaic.version = 11 : i64} {
  func.func @_fused_block_kernel(%arg0: i32, %arg1: memref<1x256x32xbf16, #tpu.memory_space<vmem>>, %arg2: memref<1x32xf32, #tpu.memory_space<vmem>>, %arg3: memref<1x32xf32, #tpu.memory_space<vmem>>, %arg4: memref<32x8xf32, #tpu.memory_space<vmem>>, %arg5: memref<8x32xf32, #tpu.memory_space<vmem>>, %arg6: memref<288x64xbf16, #tpu.memory_space<vmem>>, %arg7: memref<1x64xf32, #tpu.memory_space<vmem>>, %arg8: memref<1x1x32xbf16, #tpu.memory_space<vmem>>, %arg9: memref<32x64xbf16, #tpu.memory_space<vmem>>, %arg10: memref<1x64xf32, #tpu.memory_space<vmem>>, %arg11: memref<1x256x64xbf16, #tpu.memory_space<vmem>>, %arg12: memref<288x96xf32, #tpu.memory_space<vmem>>) attributes {dimension_semantics = [#tpu.dimension_semantics<parallel>], iteration_bounds = array<i64: 2>, scalar_prefetch = 0 : i64, scratch_operands = 1 : i64, tpu.core_type = #tpu.core_type<tc>, window_params = [{transform_indices = @transform_0, window_bounds = array<i64: 1, 256, 32>}, {pipeline_mode = #tpu.pipeline_mode<synchronous>, transform_indices = @transform_1, window_bounds = array<i64: 1, 32>}, {pipeline_mode = #tpu.pipeline_mode<synchronous>, transform_indices = @transform_2, window_bounds = array<i64: 1, 32>}, {pipeline_mode = #tpu.pipeline_mode<synchronous>, transform_indices = @transform_3, window_bounds = array<i64: 32, 8>}, {pipeline_mode = #tpu.pipeline_mode<synchronous>, transform_indices = @transform_4, window_bounds = array<i64: 8, 32>}, {pipeline_mode = #tpu.pipeline_mode<synchronous>, transform_indices = @transform_5, window_bounds = array<i64: 288, 64>}, {pipeline_mode = #tpu.pipeline_mode<synchronous>, transform_indices = @transform_6, window_bounds = array<i64: 1, 64>}, {transform_indices = @transform_7, window_bounds = array<i64: 1, 1, 32>}, {pipeline_mode = #tpu.pipeline_mode<synchronous>, transform_indices = @transform_8, window_bounds = array<i64: 32, 64>}, {pipeline_mode = #tpu.pipeline_mode<synchronous>, transform_indices = @transform_9, window_bounds = array<i64: 1, 64>}, {transform_indices = @transform_10, window_bounds = array<i64: 1, 256, 64>}]} {
    %c0 = arith.constant 0 : index
    %c0_0 = arith.constant 0 : index
    %c0_1 = arith.constant 0 : index
    %0 = vector.load %arg1[%c0, %c0_0, %c0_1] : memref<1x256x32xbf16, #tpu.memory_space<vmem>>, vector<1x256x32xbf16>
    %1 = vector.shape_cast %0 : vector<1x256x32xbf16> to vector<256x32xbf16>
    %2 = arith.extf %1 : vector<256x32xbf16> to vector<256x32xf32>
    %cst = arith.constant dense<0.000000e+00> : vector<32xf32>
    %3 = vector.multi_reduction <add>, %2, %cst [0] : vector<256x32xf32> to vector<32xf32>
    %4 = vector.shape_cast %3 : vector<32xf32> to vector<1x32xf32>
    %5 = arith.mulf %2, %2 : vector<256x32xf32>
    %cst_2 = arith.constant dense<0.000000e+00> : vector<32xf32>
    %6 = vector.multi_reduction <add>, %5, %cst_2 [0] : vector<256x32xf32> to vector<32xf32>
    %7 = vector.shape_cast %6 : vector<32xf32> to vector<1x32xf32>
    %c0_3 = arith.constant 0 : index
    %c0_4 = arith.constant 0 : index
    %8 = vector.load %arg4[%c0_3, %c0_4] : memref<32x8xf32, #tpu.memory_space<vmem>>, vector<32x8xf32>
    %cst_5 = arith.constant dense<0.000000e+00> : vector<1x8xf32>
    %9 = tpu.matmul %4, %8, %cst_5 {dimension_numbers = #tpu.dot_dimension_numbers<[1], [0], [0], [1], [0, 0, 1, 1], [], []>} : vector<1x32xf32>, vector<32x8xf32>, vector<1x8xf32> -> vector<1x8xf32>
    %cst_6 = arith.constant 9.765625E-4 : f32
    %10 = vector.broadcast %cst_6 : f32 to vector<1x8xf32>
    %11 = arith.mulf %9, %10 : vector<1x8xf32>
    %c0_7 = arith.constant 0 : index
    %c0_8 = arith.constant 0 : index
    %12 = vector.load %arg4[%c0_7, %c0_8] : memref<32x8xf32, #tpu.memory_space<vmem>>, vector<32x8xf32>
    %cst_9 = arith.constant dense<0.000000e+00> : vector<1x8xf32>
    %13 = tpu.matmul %7, %12, %cst_9 {dimension_numbers = #tpu.dot_dimension_numbers<[1], [0], [0], [1], [0, 0, 1, 1], [], []>} : vector<1x32xf32>, vector<32x8xf32>, vector<1x8xf32> -> vector<1x8xf32>
    %cst_10 = arith.constant 9.765625E-4 : f32
    %14 = vector.broadcast %cst_10 : f32 to vector<1x8xf32>
    %15 = arith.mulf %13, %14 : vector<1x8xf32>
    %16 = arith.mulf %11, %11 : vector<1x8xf32>
    %17 = arith.subf %15, %16 : vector<1x8xf32>
    %cst_11 = arith.constant 0.000000e+00 : f32
    %18 = vector.broadcast %cst_11 : f32 to vector<1x8xf32>
    %19 = arith.maximumf %17, %18 : vector<1x8xf32>
    %cst_12 = arith.constant 9.99999974E-6 : f32
    %20 = vector.broadcast %cst_12 : f32 to vector<1x8xf32>
    %21 = arith.addf %19, %20 : vector<1x8xf32>
    %22 = math.rsqrt %21 : vector<1x8xf32>
    %c0_13 = arith.constant 0 : index
    %c0_14 = arith.constant 0 : index
    %23 = vector.load %arg5[%c0_13, %c0_14] : memref<8x32xf32, #tpu.memory_space<vmem>>, vector<8x32xf32>
    %cst_15 = arith.constant dense<0.000000e+00> : vector<1x32xf32>
    %24 = tpu.matmul %11, %23, %cst_15 {dimension_numbers = #tpu.dot_dimension_numbers<[1], [0], [0], [1], [0, 0, 1, 1], [], []>} : vector<1x8xf32>, vector<8x32xf32>, vector<1x32xf32> -> vector<1x32xf32>
    %c0_16 = arith.constant 0 : index
    %c0_17 = arith.constant 0 : index
    %25 = vector.load %arg5[%c0_16, %c0_17] : memref<8x32xf32, #tpu.memory_space<vmem>>, vector<8x32xf32>
    %cst_18 = arith.constant dense<0.000000e+00> : vector<1x32xf32>
    %26 = tpu.matmul %22, %25, %cst_18 {dimension_numbers = #tpu.dot_dimension_numbers<[1], [0], [0], [1], [0, 0, 1, 1], [], []>} : vector<1x8xf32>, vector<8x32xf32>, vector<1x32xf32> -> vector<1x32xf32>
    %c0_19 = arith.constant 0 : index
    %c0_20 = arith.constant 0 : index
    %27 = vector.load %arg2[%c0_19, %c0_20] : memref<1x32xf32, #tpu.memory_space<vmem>>, vector<1x32xf32>
    %28 = arith.mulf %26, %27 : vector<1x32xf32>
    %c0_21 = arith.constant 0 : index
    %c0_22 = arith.constant 0 : index
    %29 = vector.load %arg3[%c0_21, %c0_22] : memref<1x32xf32, #tpu.memory_space<vmem>>, vector<1x32xf32>
    %30 = arith.mulf %24, %28 : vector<1x32xf32>
    %31 = arith.subf %29, %30 : vector<1x32xf32>
    %32 = vector.broadcast %28 : vector<1x32xf32> to vector<256x32xf32>
    %33 = arith.mulf %2, %32 : vector<256x32xf32>
    %34 = vector.broadcast %31 : vector<1x32xf32> to vector<256x32xf32>
    %35 = arith.addf %33, %34 : vector<256x32xf32>
    %36 = arith.negf %35 : vector<256x32xf32>
    %37 = math.exp %36 : vector<256x32xf32>
    %cst_23 = arith.constant 1.000000e+00 : f32
    %38 = vector.broadcast %cst_23 : f32 to vector<256x32xf32>
    %39 = arith.addf %38, %37 : vector<256x32xf32>
    %40 = arith.divf %38, %39 : vector<256x32xf32>
    %41 = arith.mulf %35, %40 : vector<256x32xf32>
    %cst_24 = arith.constant 0.000000e+00 : f32
    %42 = vector.broadcast %cst_24 : f32 to vector<17x96xf32>
    %c0_25 = arith.constant 0 : index
    %c0_26 = arith.constant 0 : index
    %43 = vector.load %arg12[%c0_25, %c0_26] : memref<288x96xf32, #tpu.memory_space<vmem>>, vector<17x96xf32>
    tpu.vector_store %arg12[%c0_25, %c0_26], %42 {strides = array<i32>} : memref<288x96xf32, #tpu.memory_space<vmem>>, vector<17x96xf32>,
    %cst_27 = arith.constant 0.000000e+00 : f32
    %44 = vector.broadcast %cst_27 : f32 to vector<17x96xf32>
    %c271 = arith.constant 271 : index
    %c0_28 = arith.constant 0 : index
    %45 = vector.load %arg12[%c271, %c0_28] : memref<288x96xf32, #tpu.memory_space<vmem>>, vector<17x96xf32>
    tpu.vector_store %arg12[%c271, %c0_28], %44 {strides = array<i32>} : memref<288x96xf32, #tpu.memory_space<vmem>>, vector<17x96xf32>,
    %46 = tpu.iota {dimensions = array<i32: 0>} : vector<256x1xi32>
    %c16_i32 = arith.constant 16 : i32
    %c0_i32 = arith.constant 0 : i32
    %47 = arith.cmpi eq, %c16_i32, %c0_i32 : i32
    %c1_i32 = arith.constant 1 : i32
    %48 = arith.select %47, %c1_i32, %c16_i32 : i32
    %49 = vector.broadcast %48 : i32 to vector<256x1xi32>
    %50 = arith.remsi %46, %49 : vector<256x1xi32>
    %c0_i32_29 = arith.constant 0 : i32
    %51 = vector.broadcast %c0_i32_29 : i32 to vector<256x1xi32>
    %52 = arith.cmpi ne, %50, %51 : vector<256x1xi32>
    %c0_i32_30 = arith.constant 0 : i32
    %53 = vector.broadcast %c0_i32_30 : i32 to vector<256x1xi32>
    %54 = arith.cmpi slt, %50, %53 : vector<256x1xi32>
    %c0_i32_31 = arith.constant 0 : i32
    %55 = arith.cmpi slt, %48, %c0_i32_31 : i32
    %56 = vector.broadcast %55 : i1 to vector<256x1xi1>
    %57 = vector.broadcast %56 : vector<256x1xi1> to vector<256x1xi1>
    %58 = arith.xori %54, %57 : vector<256x1xi1>
    %59 = arith.andi %58, %52 : vector<256x1xi1>
    %60 = vector.broadcast %48 : i32 to vector<256x1xi32>
    %61 = arith.addi %50, %60 : vector<256x1xi32>
    %62 = arith.select %59, %61, %50 : vector<256x1xi1>, vector<256x1xi32>
    %cst_32 = arith.constant 0.000000e+00 : f32
    %63 = vector.broadcast %cst_32 : f32 to vector<256x32xf32>
    %c15_i32 = arith.constant 15 : i32
    %64 = vector.broadcast %c15_i32 : i32 to vector<256x1xi32>
    %65 = arith.cmpi ne, %62, %64 : vector<256x1xi32>
    %66 = vector.shape_cast %65 : vector<256x1xi1> to vector<256x1xi1>
    %67 = vector.broadcast %66 : vector<256x1xi1> to vector<256x32xi1>
    %68 = arith.select %67, %41, %63 : vector<256x32xi1>, vector<256x32xf32>
    %c17 = arith.constant 17 : index
    %c0_33 = arith.constant 0 : index
    %69 = vector.load %arg12[%c17, %c0_33] : memref<288x96xf32, #tpu.memory_space<vmem>>, vector<256x32xf32>
    tpu.vector_store %arg12[%c17, %c0_33], %68 {strides = array<i32>} : memref<288x96xf32, #tpu.memory_space<vmem>>, vector<256x32xf32>,
    %c16 = arith.constant 16 : index
    %c32 = arith.constant 32 : index
    %70 = vector.load %arg12[%c16, %c32] : memref<288x96xf32, #tpu.memory_space<vmem>>, vector<256x32xf32>
    tpu.vector_store %arg12[%c16, %c32], %41 {strides = array<i32>} : memref<288x96xf32, #tpu.memory_space<vmem>>, vector<256x32xf32>,
    %c0_i32_34 = arith.constant 0 : i32
    %71 = vector.broadcast %c0_i32_34 : i32 to vector<256x1xi32>
    %72 = arith.cmpi ne, %62, %71 : vector<256x1xi32>
    %73 = vector.shape_cast %72 : vector<256x1xi1> to vector<256x1xi1>
    %74 = vector.broadcast %73 : vector<256x1xi1> to vector<256x32xi1>
    %75 = arith.select %74, %41, %63 : vector<256x32xi1>, vector<256x32xf32>
    %c15 = arith.constant 15 : index
    %c64 = arith.constant 64 : index
    %76 = vector.load %arg12[%c15, %c64] : memref<288x96xf32, #tpu.memory_space<vmem>>, vector<256x32xf32>
    tpu.vector_store %arg12[%c15, %c64], %75 {strides = array<i32>} : memref<288x96xf32, #tpu.memory_space<vmem>>, vector<256x32xf32>,
    %cst_35 = arith.constant 0.000000e+00 : f32
    %77 = vector.broadcast %cst_35 : f32 to vector<256x64xf32>
    %c0_36 = arith.constant 0 : index
    %c0_37 = arith.constant 0 : index
    %78 = vector.load %arg12[%c0_36, %c0_37] : memref<288x96xf32, #tpu.memory_space<vmem>>, vector<256x96xf32>
    %79 = arith.truncf %78 : vector<256x96xf32> to vector<256x96xbf16>
    %c0_38 = arith.constant 0 : index
    %c0_39 = arith.constant 0 : index
    %80 = vector.load %arg6[%c0_38, %c0_39] : memref<288x64xbf16, #tpu.memory_space<vmem>>, vector<96x64xbf16>
    %cst_40 = arith.constant dense<0.000000e+00> : vector<256x64xf32>
    %81 = tpu.matmul %79, %80, %cst_40 {dimension_numbers = #tpu.dot_dimension_numbers<[1], [0], [0], [1], [0, 0, 1, 1], [], []>} : vector<256x96xbf16>, vector<96x64xbf16>, vector<256x64xf32> -> vector<256x64xf32>
    %82 = arith.addf %77, %81 : vector<256x64xf32>
    %c16_41 = arith.constant 16 : index
    %c0_42 = arith.constant 0 : index
    %83 = vector.load %arg12[%c16_41, %c0_42] : memref<288x96xf32, #tpu.memory_space<vmem>>, vector<256x96xf32>
    %84 = arith.truncf %83 : vector<256x96xf32> to vector<256x96xbf16>
    %c96 = arith.constant 96 : index
    %c0_43 = arith.constant 0 : index
    %85 = vector.load %arg6[%c96, %c0_43] : memref<288x64xbf16, #tpu.memory_space<vmem>>, vector<96x64xbf16>
    %cst_44 = arith.constant dense<0.000000e+00> : vector<256x64xf32>
    %86 = tpu.matmul %84, %85, %cst_44 {dimension_numbers = #tpu.dot_dimension_numbers<[1], [0], [0], [1], [0, 0, 1, 1], [], []>} : vector<256x96xbf16>, vector<96x64xbf16>, vector<256x64xf32> -> vector<256x64xf32>
    %87 = arith.addf %82, %86 : vector<256x64xf32>
    %c32_45 = arith.constant 32 : index
    %c0_46 = arith.constant 0 : index
    %88 = vector.load %arg12[%c32_45, %c0_46] : memref<288x96xf32, #tpu.memory_space<vmem>>, vector<256x96xf32>
    %89 = arith.truncf %88 : vector<256x96xf32> to vector<256x96xbf16>
    %c192 = arith.constant 192 : index
    %c0_47 = arith.constant 0 : index
    %90 = vector.load %arg6[%c192, %c0_47] : memref<288x64xbf16, #tpu.memory_space<vmem>>, vector<96x64xbf16>
    %cst_48 = arith.constant dense<0.000000e+00> : vector<256x64xf32>
    %91 = tpu.matmul %89, %90, %cst_48 {dimension_numbers = #tpu.dot_dimension_numbers<[1], [0], [0], [1], [0, 0, 1, 1], [], []>} : vector<256x96xbf16>, vector<96x64xbf16>, vector<256x64xf32> -> vector<256x64xf32>
    %92 = arith.addf %87, %91 : vector<256x64xf32>
    %c0_49 = arith.constant 0 : index
    %c0_50 = arith.constant 0 : index
    %93 = vector.load %arg7[%c0_49, %c0_50] : memref<1x64xf32, #tpu.memory_space<vmem>>, vector<1x64xf32>
    %94 = vector.broadcast %93 : vector<1x64xf32> to vector<256x64xf32>
    %95 = arith.addf %92, %94 : vector<256x64xf32>
    %c0_51 = arith.constant 0 : index
    %c0_52 = arith.constant 0 : index
    %c0_53 = arith.constant 0 : index
    %96 = vector.load %arg8[%c0_51, %c0_52, %c0_53] : memref<1x1x32xbf16, #tpu.memory_space<vmem>>, vector<1x1x32xbf16>
    %97 = vector.shape_cast %96 : vector<1x1x32xbf16> to vector<1x32xbf16>
    %c0_54 = arith.constant 0 : index
    %c0_55 = arith.constant 0 : index
    %98 = vector.load %arg9[%c0_54, %c0_55] : memref<32x64xbf16, #tpu.memory_space<vmem>>, vector<32x64xbf16>
    %cst_56 = arith.constant dense<0.000000e+00> : vector<1x64xf32>
    %99 = tpu.matmul %97, %98, %cst_56 {dimension_numbers = #tpu.dot_dimension_numbers<[1], [0], [0], [1], [0, 0, 1, 1], [], []>} : vector<1x32xbf16>, vector<32x64xbf16>, vector<1x64xf32> -> vector<1x64xf32>
    %c0_57 = arith.constant 0 : index
    %c0_58 = arith.constant 0 : index
    %100 = vector.load %arg10[%c0_57, %c0_58] : memref<1x64xf32, #tpu.memory_space<vmem>>, vector<1x64xf32>
    %101 = arith.addf %99, %100 : vector<1x64xf32>
    %102 = vector.broadcast %101 : vector<1x64xf32> to vector<256x64xf32>
    %103 = arith.addf %95, %102 : vector<256x64xf32>
    %104 = arith.truncf %103 : vector<256x64xf32> to vector<256x64xbf16>
    %c0_59 = arith.constant 0 : index
    %c0_60 = arith.constant 0 : index
    %c0_61 = arith.constant 0 : index
    %105 = vector.load %arg11[%c0_59, %c0_60, %c0_61] : memref<1x256x64xbf16, #tpu.memory_space<vmem>>, vector<1x256x64xbf16>
    %106 = vector.shape_cast %105 : vector<1x256x64xbf16> to vector<256x64xbf16>
    %107 = vector.shape_cast %104 : vector<256x64xbf16> to vector<1x256x64xbf16>
    tpu.vector_store %arg11[%c0_59, %c0_60, %c0_61], %107 {strides = array<i32>} : memref<1x256x64xbf16, #tpu.memory_space<vmem>>, vector<1x256x64xbf16>,
    return
  }
  func.func @transform_0(%arg0: i32) -> (i32, i32, i32) {
    %c0_i32 = arith.constant 0 : i32
    %c0_i32_0 = arith.constant 0 : i32
    %c0_i32_1 = arith.constant 0 : i32
    return %arg0, %c0_i32, %c0_i32_0 : i32, i32, i32
  }
  func.func @transform_1(%arg0: i32) -> (i32, i32) {
    %c0_i32 = arith.constant 0 : i32
    %c0_i32_0 = arith.constant 0 : i32
    %c0_i32_1 = arith.constant 0 : i32
    return %c0_i32, %c0_i32_0 : i32, i32
  }
  func.func @transform_2(%arg0: i32) -> (i32, i32) {
    %c0_i32 = arith.constant 0 : i32
    %c0_i32_0 = arith.constant 0 : i32
    %c0_i32_1 = arith.constant 0 : i32
    return %c0_i32, %c0_i32_0 : i32, i32
  }
  func.func @transform_3(%arg0: i32) -> (i32, i32) {
    %c0_i32 = arith.constant 0 : i32
    %c0_i32_0 = arith.constant 0 : i32
    %c0_i32_1 = arith.constant 0 : i32
    return %c0_i32, %c0_i32_0 : i32, i32
  }
  func.func @transform_4(%arg0: i32) -> (i32, i32) {
    %c0_i32 = arith.constant 0 : i32
    %c0_i32_0 = arith.constant 0 : i32
    %c0_i32_1 = arith.constant 0 : i32
    return %c0_i32, %c0_i32_0 : i32, i32
  }
  func.func @transform_5(%arg0: i32) -> (i32, i32) {
    %c0_i32 = arith.constant 0 : i32
    %c0_i32_0 = arith.constant 0 : i32
    %c0_i32_1 = arith.constant 0 : i32
    return %c0_i32, %c0_i32_0 : i32, i32
  }
  func.func @transform_6(%arg0: i32) -> (i32, i32) {
    %c0_i32 = arith.constant 0 : i32
    %c0_i32_0 = arith.constant 0 : i32
    %c0_i32_1 = arith.constant 0 : i32
    return %c0_i32, %c0_i32_0 : i32, i32
  }
  func.func @transform_7(%arg0: i32) -> (i32, i32, i32) {
    %c0_i32 = arith.constant 0 : i32
    %c0_i32_0 = arith.constant 0 : i32
    %c0_i32_1 = arith.constant 0 : i32
    return %arg0, %c0_i32, %c0_i32_0 : i32, i32, i32
  }
  func.func @transform_8(%arg0: i32) -> (i32, i32) {
    %c0_i32 = arith.constant 0 : i32
    %c0_i32_0 = arith.constant 0 : i32
    %c0_i32_1 = arith.constant 0 : i32
    return %c0_i32, %c0_i32_0 : i32, i32
  }
  func.func @transform_9(%arg0: i32) -> (i32, i32) {
    %c0_i32 = arith.constant 0 : i32
    %c0_i32_0 = arith.constant 0 : i32
    %c0_i32_1 = arith.constant 0 : i32
    return %c0_i32, %c0_i32_0 : i32, i32
  }
  func.func @transform_10(%arg0: i32) -> (i32, i32, i32) {
    %c0_i32 = arith.constant 0 : i32
    %c0_i32_0 = arith.constant 0 : i32
    %c0_i32_1 = arith.constant 0 : i32
    return %arg0, %c0_i32, %c0_i32_0 : i32, i32, i32
  }
}

</mosaic_0001>

<llo_original>
// kernel: tpu_custom_call.1
$region0: #{tpu_custom_call.1}
  #allocation0 [shape = 'u32[]', space=smem, size = 0x4, offset = 0x4, fixed_abs, tag = 'smem constant byte address 0x4 - core index']
  #allocation1 [shape = 'u32[144,128]{1,0:T(1,128)}', space=vmem, size = 0x12000, scoped, tag = 'internal scratch']
  #allocation2 [shape = 'f32[288,96]{1,0:T(8,128)}', space=vmem, size = 0x24000, scoped, tag = 'scratch operand']
  %s0 = inlined_call_operand.vmem [shape: bf16[2,256,32], index: 0, kind: input, shape index: {}]
  %s1 = inlined_call_operand.vmem [shape: f32[1,32], index: 1, kind: input, shape index: {}]
  %s2 = inlined_call_operand.vmem [shape: f32[1,32], index: 2, kind: input, shape index: {}]
  %s3 = inlined_call_operand.vmem [shape: f32[32,8], index: 3, kind: input, shape index: {}]
  %s4 = inlined_call_operand.vmem [shape: f32[8,32], index: 4, kind: input, shape index: {}]
  %s5 = inlined_call_operand.vmem [shape: bf16[288,64], index: 5, kind: input, shape index: {}]
  %s6 = inlined_call_operand.vmem [shape: f32[1,64], index: 6, kind: input, shape index: {}]
  %s7 = inlined_call_operand.vmem [shape: bf16[2,1,32], index: 7, kind: input, shape index: {}]
  %s8 = inlined_call_operand.vmem [shape: bf16[32,64], index: 8, kind: input, shape index: {}]
  %s9 = inlined_call_operand.vmem [shape: f32[1,64], index: 9, kind: input, shape index: {}]
  %s10 = inlined_call_operand.vmem [shape: bf16[2,256,64], index: 10, kind: output, shape index: {}]
  %s11 = sld [smem:[#allocation0]]
  $region73: #{tpu_custom_call.1} parent=0
    _
  %s13 = ssub.s32 1, %s11
  %s14 = scalar_select 0, %s13, %s11
  loop: start=0, step=1, limit=4
  $region2: #{tpu_custom_call.1} parent=0 // loop_pre_header
    _
  $region3: #{tpu_custom_call.1} parent=0 // loop_header
    %s16 = sphi 0, %s20
    %p17 = scmp.ge.s32.totalorder %s16, 4
    %s26 = sphi 0, %s28
    %s29 = sphi 0, %s26
    %s30 = sphi 0, %s29
    %s46 = sphi 0, %s30
    %s50 = sphi 0, %s50
    %s52 = sphi 0, %s50
    %s53 = sphi 0, %s52
    %s67 = sphi 0, %s53
    %s71 = sphi 0, %s71
    %s73 = sphi 0, %s71
    %s74 = sphi 0, %s73
    %s88 = sphi 0, %s74
    %s92 = sphi 0, %s92
    %s94 = sphi 0, %s92
    %s95 = sphi 0, %s94
    %s109 = sphi 0, %s95
    %s113 = sphi 0, %s113
    %s115 = sphi 0, %s113
    %s116 = sphi 0, %s115
    %s130 = sphi 0, %s116
    %s134 = sphi 0, %s134
    %s136 = sphi 0, %s134
    %s137 = sphi 0, %s136
    %s151 = sphi 0, %s137
    %s155 = sphi 0, %s155
    %s157 = sphi 0, %s155
    %s158 = sphi 0, %s157
    %s172 = sphi 0, %s158
    %s178 = sphi 0, %s180
    %s181 = sphi 0, %s178
    %s182 = sphi 0, %s181
    %s198 = sphi 0, %s182
    %s202 = sphi 0, %s202
    %s204 = sphi 0, %s202
    %s205 = sphi 0, %s204
    %s219 = sphi 0, %s205
    %s223 = sphi 0, %s223
    %s225 = sphi 0, %s223
    %s226 = sphi 0, %s225
    %s240 = sphi 0, %s226
    %s246 = sphi 0, %s248
    %s249 = sphi 0, %s246
    %s250 = sphi 0, %s249
    %s266 = sphi 0, %s250
  $region4: #{tpu_custom_call.1} parent=0 // loop_header_branch
    %19 = sbr.rel (%p17) target = $region8
  $region5: #{tpu_custom_call.1} parent=0 // loop_body
    %s21 = ssub.s32 %s16, 1
    %s22 = ssub.s32 %s16, 2
    %s23 = sadd.s32 %s16, 1
    %s24 = ssub.s32 %s16, %s23
    %p25 = scmp.eq.s32.totalorder %s24, 0
    %s27 = sadd.s32 %s26, 1
    %s28 = scalar_select %p25, %s26, %s27
    %p31 = pneg %p25
    %p32 = scmp.eq.s32.totalorder %s16, 1
    %p33 = por %p31, %p32
    %p34 = scmp.ne.s32.totalorder %s26, %s29
    %p35 = scmp.eq.s32.totalorder %s16, 0
    %p36 = por %p34, %p35
    %p37 = scmp.ne.s32.totalorder %s26, %s29
    %p38 = scmp.eq.s32.totalorder %s21, 1
    %p39 = por %p37, %p38
    %p40 = scmp.ne.s32.totalorder %s29, %s30
    %p41 = scmp.eq.s32.totalorder %s21, 0
    %p42 = por %p40, %p41
    %p43 = scmp.ne.s32.totalorder %s29, %s30
    %p44 = scmp.eq.s32.totalorder %s22, 1
    %p45 = por %p43, %p44
    %p47 = scmp.ne.s32.totalorder %s30, %s46
    %p48 = scmp.eq.s32.totalorder %s22, 0
    %p49 = por %p47, %p48
    %s51 = sadd.s32 %s50, 1
    %p54 = scmp.eq.s32.totalorder %s16, 1
    %p55 = scmp.ne.s32.totalorder %s50, %s52
    %p56 = scmp.eq.s32.totalorder %s16, 0
    %p57 = por %p55, %p56
    %p58 = scmp.ne.s32.totalorder %s50, %s52
    %p59 = scmp.eq.s32.totalorder %s21, 1
    %p60 = por %p58, %p59
    %p61 = scmp.ne.s32.totalorder %s52, %s53
    %p62 = scmp.eq.s32.totalorder %s21, 0
    %p63 = por %p61, %p62
    %p64 = scmp.ne.s32.totalorder %s52, %s53
    %p65 = scmp.eq.s32.totalorder %s22, 1
    %p66 = por %p64, %p65
    %p68 = scmp.ne.s32.totalorder %s53, %s67
    %p69 = scmp.eq.s32.totalorder %s22, 0
    %p70 = por %p68, %p69
    %s72 = sadd.s32 %s71, 1
    %p75 = scmp.eq.s32.totalorder %s16, 1
    %p76 = scmp.ne.s32.totalorder %s71, %s73
    %p77 = scmp.eq.s32.totalorder %s16, 0
    %p78 = por %p76, %p77
    %p79 = scmp.ne.s32.totalorder %s71, %s73
    %p80 = scmp.eq.s32.totalorder %s21, 1
    %p81 = por %p79, %p80
    %p82 = scmp.ne.s32.totalorder %s73, %s74
    %p83 = scmp.eq.s32.totalorder %s21, 0
    %p84 = por %p82, %p83
    %p85 = scmp.ne.s32.totalorder %s73, %s74
    %p86 = scmp.eq.s32.totalorder %s22, 1
    %p87 = por %p85, %p86
    %p89 = scmp.ne.s32.totalorder %s74, %s88
    %p90 = scmp.eq.s32.totalorder %s22, 0
    %p91 = por %p89, %p90
    %s93 = sadd.s32 %s92, 1
    %p96 = scmp.eq.s32.totalorder %s16, 1
    %p97 = scmp.ne.s32.totalorder %s92, %s94
    %p98 = scmp.eq.s32.totalorder %s16, 0
    %p99 = por %p97, %p98
    %p100 = scmp.ne.s32.totalorder %s92, %s94
    %p101 = scmp.eq.s32.totalorder %s21, 1
    %p102 = por %p100, %p101
    %p103 = scmp.ne.s32.totalorder %s94, %s95
    %p104 = scmp.eq.s32.totalorder %s21, 0
    %p105 = por %p103, %p104
    %p106 = scmp.ne.s32.totalorder %s94, %s95
    %p107 = scmp.eq.s32.totalorder %s22, 1
    %p108 = por %p106, %p107
    %p110 = scmp.ne.s32.totalorder %s95, %s109
    %p111 = scmp.eq.s32.totalorder %s22, 0
    %p112 = por %p110, %p111
    %s114 = sadd.s32 %s113, 1
    %p117 = scmp.eq.s32.totalorder %s16, 1
    %p118 = scmp.ne.s32.totalorder %s113, %s115
    %p119 = scmp.eq.s32.totalorder %s16, 0
    %p120 = por %p118, %p119
    %p121 = scmp.ne.s32.totalorder %s113, %s115
    %p122 = scmp.eq.s32.totalorder %s21, 1
    %p123 = por %p121, %p122
    %p124 = scmp.ne.s32.totalorder %s115, %s116
    %p125 = scmp.eq.s32.totalorder %s21, 0
    %p126 = por %p124, %p125
    %p127 = scmp.ne.s32.totalorder %s115, %s116
    %p128 = scmp.eq.s32.totalorder %s22, 1
    %p129 = por %p127, %p128
    %p131 = scmp.ne.s32.totalorder %s116, %s130
    %p132 = scmp.eq.s32.totalorder %s22, 0
    %p133 = por %p131, %p132
    %s135 = sadd.s32 %s134, 1
    %p138 = scmp.eq.s32.totalorder %s16, 1
    %p139 = scmp.ne.s32.totalorder %s134, %s136
    %p140 = scmp.eq.s32.totalorder %s16, 0
    %p141 = por %p139, %p140
    %p142 = scmp.ne.s32.totalorder %s134, %s136
    %p143 = scmp.eq.s32.totalorder %s21, 1
    %p144 = por %p142, %p143
    %p145 = scmp.ne.s32.totalorder %s136, %s137
    %p146 = scmp.eq.s32.totalorder %s21, 0
    %p147 = por %p145, %p146
    %p148 = scmp.ne.s32.totalorder %s136, %s137
    %p149 = scmp.eq.s32.totalorder %s22, 1
    %p150 = por %p148, %p149
    %p152 = scmp.ne.s32.totalorder %s137, %s151
    %p153 = scmp.eq.s32.totalorder %s22, 0
    %p154 = por %p152, %p153
    %s156 = sadd.s32 %s155, 1
    %p159 = scmp.eq.s32.totalorder %s16, 1
    %p160 = scmp.ne.s32.totalorder %s155, %s157
    %p161 = scmp.eq.s32.totalorder %s16, 0
    %p162 = por %p160, %p161
    %p163 = scmp.ne.s32.totalorder %s155, %s157
    %p164 = scmp.eq.s32.totalorder %s21, 1
    %p165 = por %p163, %p164
    %p166 = scmp.ne.s32.totalorder %s157, %s158
    %p167 = scmp.eq.s32.totalorder %s21, 0
    %p168 = por %p166, %p167
    %p169 = scmp.ne.s32.totalorder %s157, %s158
    %p170 = scmp.eq.s32.totalorder %s22, 1
    %p171 = por %p169, %p170
    %p173 = scmp.ne.s32.totalorder %s158, %s172
    %p174 = scmp.eq.s32.totalorder %s22, 0
    %p175 = por %p173, %p174
    %s176 = ssub.s32 %s16, %s23
    %p177 = scmp.eq.s32.totalorder %s176, 0
    %s179 = sadd.s32 %s178, 1
    %s180 = scalar_select %p177, %s178, %s179
    %p183 = pneg %p177
    %p184 = scmp.eq.s32.totalorder %s16, 1
    %p185 = por %p183, %p184
    %p186 = scmp.ne.s32.totalorder %s178, %s181
    %p187 = scmp.eq.s32.totalorder %s16, 0
    %p188 = por %p186, %p187
    %p189 = scmp.ne.s32.totalorder %s178, %s181
    %p190 = scmp.eq.s32.totalorder %s21, 1
    %p191 = por %p189, %p190
    %p192 = scmp.ne.s32.totalorder %s181, %s182
    %p193 = scmp.eq.s32.totalorder %s21, 0
    %p194 = por %p192, %p193
    %p195 = scmp.ne.s32.totalorder %s181, %s182
    %p196 = scmp.eq.s32.totalorder %s22, 1
    %p197 = por %p195, %p196
    %p199 = scmp.ne.s32.totalorder %s182, %s198
    %p200 = scmp.eq.s32.totalorder %s22, 0
    %p201 = por %p199, %p200
    %s203 = sadd.s32 %s202, 1
    %p206 = scmp.eq.s32.totalorder %s16, 1
    %p207 = scmp.ne.s32.totalorder %s202, %s204
    %p208 = scmp.eq.s32.totalorder %s16, 0
    %p209 = por %p207, %p208
    %p210 = scmp.ne.s32.totalorder %s202, %s204
    %p211 = scmp.eq.s32.totalorder %s21, 1
    %p212 = por %p210, %p211
    %p213 = scmp.ne.s32.totalorder %s204, %s205
    %p214 = scmp.eq.s32.totalorder %s21, 0
    %p215 = por %p213, %p214
    %p216 = scmp.ne.s32.totalorder %s204, %s205
    %p217 = scmp.eq.s32.totalorder %s22, 1
    %p218 = por %p216, %p217
    %p220 = scmp.ne.s32.totalorder %s205, %s219
    %p221 = scmp.eq.s32.totalorder %s22, 0
    %p222 = por %p220, %p221
    %s224 = sadd.s32 %s223, 1
    %p227 = scmp.eq.s32.totalorder %s16, 1
    %p228 = scmp.ne.s32.totalorder %s223, %s225
    %p229 = scmp.eq.s32.totalorder %s16, 0
    %p230 = por %p228, %p229
    %p231 = scmp.ne.s32.totalorder %s223, %s225
    %p232 = scmp.eq.s32.totalorder %s21, 1
    %p233 = por %p231, %p232
    %p234 = scmp.ne.s32.totalorder %s225, %s226
    %p235 = scmp.eq.s32.totalorder %s21, 0
    %p236 = por %p234, %p235
    %p237 = scmp.ne.s32.totalorder %s225, %s226
    %p238 = scmp.eq.s32.totalorder %s22, 1
    %p239 = por %p237, %p238
    %p241 = scmp.ne.s32.totalorder %s226, %s240
    %p242 = scmp.eq.s32.totalorder %s22, 0
    %p243 = por %p241, %p242
    %s244 = ssub.s32 %s16, %s23
    %p245 = scmp.eq.s32.totalorder %s244, 0
    %s247 = sadd.s32 %s246, 1
    %s248 = scalar_select %p245, %s246, %s247
    %p251 = pneg %p245
    %p252 = scmp.eq.s32.totalorder %s16, 1
    %p253 = por %p251, %p252
    %p254 = scmp.ne.s32.totalorder %s246, %s249
    %p255 = scmp.eq.s32.totalorder %s16, 0
    %p256 = por %p254, %p255
    %p257 = scmp.ne.s32.totalorder %s246, %s249
    %p258 = scmp.eq.s32.totalorder %s21, 1
    %p259 = por %p257, %p258
    %p260 = scmp.ne.s32.totalorder %s249, %s250
    %p261 = scmp.eq.s32.totalorder %s21, 0
    %p262 = por %p260, %p261
    %p263 = scmp.ne.s32.totalorder %s249, %s250
    %p264 = scmp.eq.s32.totalorder %s22, 1
    %p265 = por %p263, %p264
    %p267 = scmp.ne.s32.totalorder %s250, %s266
    %p268 = scmp.eq.s32.totalorder %s22, 0
    %p269 = por %p267, %p268
    %p270 = scmp.le.s32.totalorder 1, %s16
    %p271 = scmp.lt.s32.totalorder %s16, 3
    %p272 = pnand %p270, %p271
    %p273 = pneg %p272
    // Predicated region
    $region9: #{tpu_custom_call.1} parent=5 // pred_check
      _
    $region10: #{tpu_custom_call.1} parent=5 // pred_check_branch
      %275 = sbr.rel (%p272) target = $region12
    $region11: #{tpu_custom_call.1} parent=5 // pred_region
      %s276 = ssub.s32 %s16, 1
      // Predicated region
      $region13: #{tpu_custom_call.1} parent=11 // pred_check
        %p277 = pneg %p63
      $region14: #{tpu_custom_call.1} parent=11 // pred_check_branch
        %279 = sbr.rel (%p277) target = $region16
      $region15: #{tpu_custom_call.1} parent=11 // pred_region
        _
      $region16: #{tpu_custom_call.1} parent=11 // pred_fallthru
        _
      // Predicated region
      $region17: #{tpu_custom_call.1} parent=11 // pred_check
        %p280 = pneg %p84
      $region18: #{tpu_custom_call.1} parent=11 // pred_check_branch
        %282 = sbr.rel (%p280) target = $region20
      $region19: #{tpu_custom_call.1} parent=11 // pred_region
        _
      $region20: #{tpu_custom_call.1} parent=11 // pred_fallthru
        _
      // Predicated region
      $region21: #{tpu_custom_call.1} parent=11 // pred_check
        %p283 = pneg %p105
      $region22: #{tpu_custom_call.1} parent=11 // pred_check_branch
        %285 = sbr.rel (%p283) target = $region24
      $region23: #{tpu_custom_call.1} parent=11 // pred_region
        _
      $region24: #{tpu_custom_call.1} parent=11 // pred_fallthru
        _
      // Predicated region
      $region25: #{tpu_custom_call.1} parent=11 // pred_check
        %p286 = pneg %p126
      $region26: #{tpu_custom_call.1} parent=11 // pred_check_branch
        %288 = sbr.rel (%p286) target = $region28
      $region27: #{tpu_custom_call.1} parent=11 // pred_region
        _
      $region28: #{tpu_custom_call.1} parent=11 // pred_fallthru
        _
      // Predicated region
      $region29: #{tpu_custom_call.1} parent=11 // pred_check
        %p289 = pneg %p147
      $region30: #{tpu_custom_call.1} parent=11 // pred_check_branch
        %291 = sbr.rel (%p289) target = $region32
      $region31: #{tpu_custom_call.1} parent=11 // pred_region
        _
      $region32: #{tpu_custom_call.1} parent=11 // pred_fallthru
        _
      // Predicated region
      $region33: #{tpu_custom_call.1} parent=11 // pred_check
        %p292 = pneg %p168
      $region34: #{tpu_custom_call.1} parent=11 // pred_check_branch
        %294 = sbr.rel (%p292) target = $region36
      $region35: #{tpu_custom_call.1} parent=11 // pred_region
        _
      $region36: #{tpu_custom_call.1} parent=11 // pred_fallthru
        _
      // Predicated region
      $region37: #{tpu_custom_call.1} parent=11 // pred_check
        %p295 = pneg %p215
      $region38: #{tpu_custom_call.1} parent=11 // pred_check_branch
        %297 = sbr.rel (%p295) target = $region40
      $region39: #{tpu_custom_call.1} parent=11 // pred_region
        _
      $region40: #{tpu_custom_call.1} parent=11 // pred_fallthru
        _
      // Predicated region
      $region41: #{tpu_custom_call.1} parent=11 // pred_check
        %p298 = pneg %p236
      $region42: #{tpu_custom_call.1} parent=11 // pred_check_branch
        %300 = sbr.rel (%p298) target = $region44
      $region43: #{tpu_custom_call.1} parent=11 // pred_region
        _
      $region44: #{tpu_custom_call.1} parent=11 // pred_fallthru
        _
    $region12: #{tpu_custom_call.1} parent=5 // pred_fallthru
      _
    %p301 = scmp.lt.s32.totalorder %s16, 2
    // Predicated region
    $region45: #{tpu_custom_call.1} parent=5 // pred_check
      %p302 = pneg %p301
    $region46: #{tpu_custom_call.1} parent=5 // pred_check_branch
      %304 = sbr.rel (%p302) target = $region48
    $region47: #{tpu_custom_call.1} parent=5 // pred_region
      // Predicated region
      $region49: #{tpu_custom_call.1} parent=47 // pred_check
        %p305 = pneg %p36
      $region50: #{tpu_custom_call.1} parent=47 // pred_check_branch
        %307 = sbr.rel (%p305) target = $region52
      $region51: #{tpu_custom_call.1} parent=47 // pred_region
        %p308 = scmp.lt.s32.totalorder %s16, 1
        %s309 = scalar_select %p308, %s16, 1
        %s310 = smul.addr %s309, 32
        %s311 = smul.addr %s310, 4
        %s312 = scalar_lea.vmem %s0, %s311
      $region52: #{tpu_custom_call.1} parent=47 // pred_fallthru
        _
      // Predicated region
      $region53: #{tpu_custom_call.1} parent=47 // pred_check
        %p313 = pneg %p188
      $region54: #{tpu_custom_call.1} parent=47 // pred_check_branch
        %315 = sbr.rel (%p313) target = $region56
      $region55: #{tpu_custom_call.1} parent=47 // pred_region
        %p316 = scmp.lt.s32.totalorder %s16, 1
        %s317 = scalar_select %p316, %s16, 1
        %s318 = scalar_lea.vmem %s7, %s317
      $region56: #{tpu_custom_call.1} parent=47 // pred_fallthru
        _
    $region48: #{tpu_custom_call.1} parent=5 // pred_fallthru
      _
    %p319 = scmp.le.s32.totalorder 1, %s16
    %p320 = scmp.lt.s32.totalorder %s16, 3
    %p321 = pnand %p319, %p320
    %p322 = pneg %p321
    // Predicated region
    $region57: #{tpu_custom_call.1} parent=5 // pred_check
      _
    $region58: #{tpu_custom_call.1} parent=5 // pred_check_branch
      %324 = sbr.rel (%p321) target = $region60
    $region59: #{tpu_custom_call.1} parent=5 // pred_region
      %s325 = ssub.s32 %s16, 1
      %p326 = scmp.lt.s32.totalorder %s21, 1
      %s327 = scalar_select %p326, %s21, 1
      %s328 = smul.addr %s327, 32
      %s329 = smul.addr %s328, 4
      %s330 = scalar_lea.vmem %s0, %s329
      %p331 = pneg %p42
      %p332 = pneg %p39
      %p333 = pneg %p63
      %p334 = pneg %p60
      %p335 = pneg %p84
      %p336 = pneg %p81
      %p337 = pneg %p105
      %p338 = pneg %p102
      %p339 = pneg %p126
      %p340 = pneg %p123
      %p341 = pneg %p147
      %p342 = pneg %p144
      %p343 = pneg %p168
      %p344 = pneg %p165
      %p345 = scmp.lt.s32.totalorder %s21, 1
      %s346 = scalar_select %p345, %s21, 1
      %s347 = scalar_lea.vmem %s7, %s346
      %p348 = pneg %p194
      %p349 = pneg %p191
      %p350 = pneg %p215
      %p351 = pneg %p212
      %p352 = pneg %p236
      %p353 = pneg %p233
      %p354 = pneg %p262
      %p355 = pneg %p259
      %p356 = scmp.lt.s32.totalorder %s21, 1
      %s357 = scalar_select %p356, %s21, 1
      %s358 = smul.addr %s357, 32
      %s359 = smul.addr %s358, 4
      %s360 = scalar_lea.vmem %s10, %s359
      %p361 = scmp.lt.s32.totalorder %s21, 1
      %s362 = scalar_select %p361, %s21, 1
      %s363 = smul.addr %s362, 32
      %s364 = smul.addr %s363, 4
      %s365 = scalar_lea.vmem %s0, %s364
      %p366 = scmp.lt.s32.totalorder %s21, 1
      %s367 = scalar_select %p366, %s21, 1
      %s368 = scalar_lea.vmem %s7, %s367
      %p369 = scmp.lt.s32.totalorder %s21, 1
      %s370 = scalar_select %p369, %s21, 1
      %s371 = smul.addr %s370, 32
      %s372 = smul.addr %s371, 4
      %s373 = scalar_lea.vmem %s10, %s372
      %v375 = vld [vmem:[%s365] sm:$0xf]
      %v376 = vld [vmem:[%s365 + $0x4] sm:$0xf]
      %v377 = vld [vmem:[%s365 + $0x8] sm:$0xf]
      %v378 = vld [vmem:[%s365 + $0xc] sm:$0xf]
      %v379 = vld [vmem:[%s365 + $0x10] sm:$0xf]
      %v380 = vld [vmem:[%s365 + $0x14] sm:$0xf]
      %v381 = vld [vmem:[%s365 + $0x18] sm:$0xf]
      %v382 = vld [vmem:[%s365 + $0x1c] sm:$0xf]
      %v383 = vld [vmem:[%s365 + $0x20] sm:$0xf]
      %v384 = vld [vmem:[%s365 + $0x24] sm:$0xf]
      %v385 = vld [vmem:[%s365 + $0x28] sm:$0xf]
      %v386 = vld [vmem:[%s365 + $0x2c] sm:$0xf]
      %v387 = vld [vmem:[%s365 + $0x30] sm:$0xf]
      %v388 = vld [vmem:[%s365 + $0x34] sm:$0xf]
      %v389 = vld [vmem:[%s365 + $0x38] sm:$0xf]
      %v390 = vld [vmem:[%s365 + $0x3c] sm:$0xf]
      %v391 = vld [vmem:[%s365 + $0x40] sm:$0xf]
      %v392 = vld [vmem:[%s365 + $0x44] sm:$0xf]
      %v393 = vld [vmem:[%s365 + $0x48] sm:$0xf]
      %v394 = vld [vmem:[%s365 + $0x4c] sm:$0xf]
      %v395 = vld [vmem:[%s365 + $0x50] sm:$0xf]
      %v396 = vld [vmem:[%s365 + $0x54] sm:$0xf]
      %v397 = vld [vmem:[%s365 + $0x58] sm:$0xf]
      %v398 = vld [vmem:[%s365 + $0x5c] sm:$0xf]
      %v399 = vld [vmem:[%s365 + $0x60] sm:$0xf]
      %v400 = vld [vmem:[%s365 + $0x64] sm:$0xf]
      %v401 = vld [vmem:[%s365 + $0x68] sm:$0xf]
      %v402 = vld [vmem:[%s365 + $0x6c] sm:$0xf]
      %v403 = vld [vmem:[%s365 + $0x70] sm:$0xf]
      %v404 = vld [vmem:[%s365 + $0x74] sm:$0xf]
      %v405 = vld [vmem:[%s365 + $0x78] sm:$0xf]
      %v406 = vld [vmem:[%s365 + $0x7c] sm:$0xf]
      %v407 = vunpack.c.l.bf16 %v375
      %v408 = vunpack.c.l.bf16 %v376
      %v409 = vunpack.c.l.bf16 %v377
      %v410 = vunpack.c.l.bf16 %v378
      %v411 = vunpack.c.l.bf16 %v379
      %v412 = vunpack.c.l.bf16 %v380
      %v413 = vunpack.c.l.bf16 %v381
      %v414 = vunpack.c.l.bf16 %v382
      %v415 = vunpack.c.l.bf16 %v383
      %v416 = vunpack.c.l.bf16 %v384
      %v417 = vunpack.c.l.bf16 %v385
      %v418 = vunpack.c.l.bf16 %v386
      %v419 = vunpack.c.l.bf16 %v387
      %v420 = vunpack.c.l.bf16 %v388
      %v421 = vunpack.c.l.bf16 %v389
      %v422 = vunpack.c.l.bf16 %v390
      %v423 = vunpack.c.l.bf16 %v391
      %v424 = vunpack.c.l.bf16 %v392
      %v425 = vunpack.c.l.bf16 %v393
      %v426 = vunpack.c.l.bf16 %v394
      %v427 = vunpack.c.l.bf16 %v395
      %v428 = vunpack.c.l.bf16 %v396
      %v429 = vunpack.c.l.bf16 %v397
      %v430 = vunpack.c.l.bf16 %v398
      %v431 = vunpack.c.l.bf16 %v399
      %v432 = vunpack.c.l.bf16 %v400
      %v433 = vunpack.c.l.bf16 %v401
      %v434 = vunpack.c.l.bf16 %v402
      %v435 = vunpack.c.l.bf16 %v403
      %v436 = vunpack.c.l.bf16 %v404
      %v437 = vunpack.c.l.bf16 %v405
      %v438 = vunpack.c.l.bf16 %v406
      %vm439 = vcmask 261120
      %v440 = vsel %vm439, %v407, 0.0
      %v441 = vsel %vm439, %v408, 0.0
      %v442 = vadd.f32 %v440, %v441
      %v443 = vsel %vm439, %v409, 0.0
      %v444 = vadd.f32 %v442, %v443
      %v445 = vsel %vm439, %v410, 0.0
      %v446 = vadd.f32 %v444, %v445
      %v447 = vsel %vm439, %v411, 0.0
      %v448 = vadd.f32 %v446, %v447
      %v449 = vsel %vm439, %v412, 0.0
      %v450 = vadd.f32 %v448, %v449
      %v451 = vsel %vm439, %v413, 0.0
      %v452 = vadd.f32 %v450, %v451
      %v453 = vsel %vm439, %v414, 0.0
      %v454 = vadd.f32 %v452, %v453
      %v455 = vsel %vm439, %v415, 0.0
      %v456 = vadd.f32 %v454, %v455
      %v457 = vsel %vm439, %v416, 0.0
      %v458 = vadd.f32 %v456, %v457
      %v459 = vsel %vm439, %v417, 0.0
      %v460 = vadd.f32 %v458, %v459
      %v461 = vsel %vm439, %v418, 0.0
      %v462 = vadd.f32 %v460, %v461
      %v463 = vsel %vm439, %v419, 0.0
      %v464 = vadd.f32 %v462, %v463
      %v465 = vsel %vm439, %v420, 0.0
      %v466 = vadd.f32 %v464, %v465
      %v467 = vsel %vm439, %v421, 0.0
      %v468 = vadd.f32 %v466, %v467
      %v469 = vsel %vm439, %v422, 0.0
      %v470 = vadd.f32 %v468, %v469
      %v471 = vsel %vm439, %v423, 0.0
      %v472 = vadd.f32 %v470, %v471
      %v473 = vsel %vm439, %v424, 0.0
      %v474 = vadd.f32 %v472, %v473
      %v475 = vsel %vm439, %v425, 0.0
      %v476 = vadd.f32 %v474, %v475
      %v477 = vsel %vm439, %v426, 0.0
      %v478 = vadd.f32 %v476, %v477
      %v479 = vsel %vm439, %v427, 0.0
      %v480 = vadd.f32 %v478, %v479
      %v481 = vsel %vm439, %v428, 0.0
      %v482 = vadd.f32 %v480, %v481
      %v483 = vsel %vm439, %v429, 0.0
      %v484 = vadd.f32 %v482, %v483
      %v485 = vsel %vm439, %v430, 0.0
      %v486 = vadd.f32 %v484, %v485
      %v487 = vsel %vm439, %v431, 0.0
      %v488 = vadd.f32 %v486, %v487
      %v489 = vsel %vm439, %v432, 0.0
      %v490 = vadd.f32 %v488, %v489
      %v491 = vsel %vm439, %v433, 0.0
      %v492 = vadd.f32 %v490, %v491
      %v493 = vsel %vm439, %v434, 0.0
      %v494 = vadd.f32 %v492, %v493
      %v495 = vsel %vm439, %v435, 0.0
      %v496 = vadd.f32 %v494, %v495
      %v497 = vsel %vm439, %v436, 0.0
      %v498 = vadd.f32 %v496, %v497
      %v499 = vsel %vm439, %v437, 0.0
      %v500 = vadd.f32 %v498, %v499
      %v501 = vsel %vm439, %v438, 0.0
      %v502 = vadd.f32 %v500, %v501
      %v503 = vrot.slane %v502, 4
      %v504 = vadd.f32 %v502, %v503
      %v505 = vrot.slane %v504, 2
      %v506 = vadd.f32 %v504, %v505
      %v507 = vrot.slane %v506, 1
      %v508 = vadd.f32 %v506, %v507
      %v509 = vmul.f32 %v407, %v407
      %v510 = vmul.f32 %v408, %v408
      %v511 = vmul.f32 %v409, %v409
      %v512 = vmul.f32 %v410, %v410
      %v513 = vmul.f32 %v411, %v411
      %v514 = vmul.f32 %v412, %v412
      %v515 = vmul.f32 %v413, %v413
      %v516 = vmul.f32 %v414, %v414
      %v517 = vmul.f32 %v415, %v415
      %v518 = vmul.f32 %v416, %v416
      %v519 = vmul.f32 %v417, %v417
      %v520 = vmul.f32 %v418, %v418
      %v521 = vmul.f32 %v419, %v419
      %v522 = vmul.f32 %v420, %v420
      %v523 = vmul.f32 %v421, %v421
      %v524 = vmul.f32 %v422, %v422
      %v525 = vmul.f32 %v423, %v423
      %v526 = vmul.f32 %v424, %v424
      %v527 = vmul.f32 %v425, %v425
      %v528 = vmul.f32 %v426, %v426
      %v529 = vmul.f32 %v427, %v427
      %v530 = vmul.f32 %v428, %v428
      %v531 = vmul.f32 %v429, %v429
      %v532 = vmul.f32 %v430, %v430
      %v533 = vmul.f32 %v431, %v431
      %v534 = vmul.f32 %v432, %v432
      %v535 = vmul.f32 %v433, %v433
      %v536 = vmul.f32 %v434, %v434
      %v537 = vmul.f32 %v435, %v435
      %v538 = vmul.f32 %v436, %v436
      %v539 = vmul.f32 %v437, %v437
      %v540 = vmul.f32 %v438, %v438
      %v541 = vsel %vm439, %v509, 0.0
      %v542 = vsel %vm439, %v510, 0.0
      %v543 = vadd.f32 %v541, %v542
      %v544 = vsel %vm439, %v511, 0.0
      %v545 = vadd.f32 %v543, %v544
      %v546 = vsel %vm439, %v512, 0.0
      %v547 = vadd.f32 %v545, %v546
      %v548 = vsel %vm439, %v513, 0.0
      %v549 = vadd.f32 %v547, %v548
      %v550 = vsel %vm439, %v514, 0.0
      %v551 = vadd.f32 %v549, %v550
      %v552 = vsel %vm439, %v515, 0.0
      %v553 = vadd.f32 %v551, %v552
      %v554 = vsel %vm439, %v516, 0.0
      %v555 = vadd.f32 %v553, %v554
      %v556 = vsel %vm439, %v517, 0.0
      %v557 = vadd.f32 %v555, %v556
      %v558 = vsel %vm439, %v518, 0.0
      %v559 = vadd.f32 %v557, %v558
      %v560 = vsel %vm439, %v519, 0.0
      %v561 = vadd.f32 %v559, %v560
      %v562 = vsel %vm439, %v520, 0.0
      %v563 = vadd.f32 %v561, %v562
      %v564 = vsel %vm439, %v521, 0.0
      %v565 = vadd.f32 %v563, %v564
      %v566 = vsel %vm439, %v522, 0.0
      %v567 = vadd.f32 %v565, %v566
      %v568 = vsel %vm439, %v523, 0.0
      %v569 = vadd.f32 %v567, %v568
      %v570 = vsel %vm439, %v524, 0.0
      %v571 = vadd.f32 %v569, %v570
      %v572 = vsel %vm439, %v525, 0.0
      %v573 = vadd.f32 %v571, %v572
      %v574 = vsel %vm439, %v526, 0.0
      %v575 = vadd.f32 %v573, %v574
      %v576 = vsel %vm439, %v527, 0.0
      %v577 = vadd.f32 %v575, %v576
      %v578 = vsel %vm439, %v528, 0.0
      %v579 = vadd.f32 %v577, %v578
      %v580 = vsel %vm439, %v529, 0.0
      %v581 = vadd.f32 %v579, %v580
      %v582 = vsel %vm439, %v530, 0.0
      %v583 = vadd.f32 %v581, %v582
      %v584 = vsel %vm439, %v531, 0.0
      %v585 = vadd.f32 %v583, %v584
      %v586 = vsel %vm439, %v532, 0.0
      %v587 = vadd.f32 %v585, %v586
      %v588 = vsel %vm439, %v533, 0.0
      %v589 = vadd.f32 %v587, %v588
      %v590 = vsel %vm439, %v534, 0.0
      %v591 = vadd.f32 %v589, %v590
      %v592 = vsel %vm439, %v535, 0.0
      %v593 = vadd.f32 %v591, %v592
      %v594 = vsel %vm439, %v536, 0.0
      %v595 = vadd.f32 %v593, %v594
      %v596 = vsel %vm439, %v537, 0.0
      %v597 = vadd.f32 %v595, %v596
      %v598 = vsel %vm439, %v538, 0.0
      %v599 = vadd.f32 %v597, %v598
      %v600 = vsel %vm439, %v539, 0.0
      %v601 = vadd.f32 %v599, %v600
      %v602 = vsel %vm439, %v540, 0.0
      %v603 = vadd.f32 %v601, %v602
      %v604 = vrot.slane %v603, 4
      %v605 = vadd.f32 %v603, %v604
      %v606 = vrot.slane %v605, 2
      %v607 = vadd.f32 %v605, %v606
      %v608 = vrot.slane %v607, 1
      %v609 = vadd.f32 %v607, %v608
      %v610 = vld [vmem:[%s3] sm:$0xff]
      %v611 = vld [vmem:[%s3 + $0x8] sm:$0xff]
      %v612 = vld [vmem:[%s3 + $0x10] sm:$0xff]
      %v613 = vld [vmem:[%s3 + $0x18] sm:$0xff]
      %v615 = vsel %vm439, %v508, 0
      %617 = vmatprep.subr.mxu0 0.0
      %618 = vmatpush1.msra.mxu0 %v610
      %619 = vmatprep.subr.mxu0 0.0
      %620 = vmatpush1.msra.mxu0 %v611
      %621 = vmatprep.subr.mxu0 0.0
      %622 = vmatpush1.msra.mxu0 %v612
      %623 = vmatprep.subr.mxu0 0.0
      %624 = vmatpush1.msra.mxu0 %v613
      %625 = vmatprep.subr.mxu0 0.0
      %626 = vmatpush1.msra.mxu0 0.0
      %627 = vmatprep.subr.mxu0 0.0
      %628 = vmatpush1.msra.mxu0 0.0
      %629 = vmatprep.subr.mxu0 0.0
      %630 = vmatpush1.msra.mxu0 0.0
      %631 = vmatprep.subr.mxu0 0.0
      %632 = vmatpush1.msra.mxu0 0.0
      %633 = vmatprep.subr.mxu0 0.0
      %634 = vmatpush1.msra.mxu0 0.0
      %635 = vmatprep.subr.mxu0 0.0
      %636 = vmatpush1.msra.mxu0 0.0
      %637 = vmatprep.subr.mxu0 0.0
      %638 = vmatpush1.msra.mxu0 0.0
      %639 = vmatprep.subr.mxu0 0.0
      %640 = vmatpush1.msra.mxu0 0.0
      %641 = vmatprep.subr.mxu0 0.0
      %642 = vmatpush1.msra.mxu0 0.0
      %643 = vmatprep.subr.mxu0 0.0
      %644 = vmatpush1.msra.mxu0 0.0
      %645 = vmatprep.subr.mxu0 0.0
      %646 = vmatpush1.msra.mxu0 0.0
      %647 = vmatprep.subr.mxu0 0.0
      %648 = vmatpush1.msra.mxu0 0.0
      %649 = vmatprep.subr.mxu0 0.0
      %650 = vmatpush1.msra.mxu0 0.0
      %651 = vmatprep.subr.mxu0 0.0
      %652 = vmatpush1.msra.mxu0 0.0
      %653 = vmatprep.subr.mxu0 0.0
      %654 = vmatpush1.msra.mxu0 0.0
      %655 = vmatprep.subr.mxu0 0.0
      %656 = vmatpush1.msra.mxu0 0.0
      %657 = vmatprep.subr.mxu0 0.0
      %658 = vmatpush1.msra.mxu0 0.0
      %659 = vmatprep.subr.mxu0 0.0
      %660 = vmatpush1.msra.mxu0 0.0
      %661 = vmatprep.subr.mxu0 0.0
      %662 = vmatpush1.msra.mxu0 0.0
      %663 = vmatprep.subr.mxu0 0.0
      %664 = vmatpush1.msra.mxu0 0.0
      %665 = vmatprep.subr.mxu0 0.0
      %666 = vmatpush1.msra.mxu0 0.0
      %667 = vmatprep.subr.mxu0 0.0
      %668 = vmatpush1.msra.mxu0 0.0
      %669 = vmatprep.subr.mxu0 0.0
      %670 = vmatpush1.msra.mxu0 0.0
      %671 = vmatprep.subr.mxu0 0.0
      %672 = vmatpush1.msra.mxu0 0.0
      %673 = vmatprep.subr.mxu0 0.0
      %674 = vmatpush1.msra.mxu0 0.0
      %675 = vmatprep.subr.mxu0 0.0
      %676 = vmatpush1.msra.mxu0 0.0
      %677 = vmatprep.subr.mxu0 0.0
      %678 = vmatpush1.msra.mxu0 0.0
      %679 = vmatprep.subr.mxu0 0.0
      %680 = vmatpush1.msra.mxu0 0.0
      %681 = vmatprep.mubr.f32.mxu0 0.0
      %682 = vmatmul.mubr.f32.gmra.mrb[0].mxu0 %v615
      %v683 = vpop.f32.mrb[0].mxu0
      %v684 = vadd.f32 0.0, %v683
      %v685 = vpop.f32.mrb[0].mxu0
      %686 = vdwg.mxu0
      %v687 = vmul.f32 %v684, 0.0009765625
      %v689 = vsel %vm439, %v609, 0
      %691 = vmatprep.subr.mxu0 0.0
      %692 = vmatpush1.msra.mxu0 %v610
      %693 = vmatprep.subr.mxu0 0.0
      %694 = vmatpush1.msra.mxu0 %v611
      %695 = vmatprep.subr.mxu0 0.0
      %696 = vmatpush1.msra.mxu0 %v612
      %697 = vmatprep.subr.mxu0 0.0
      %698 = vmatpush1.msra.mxu0 %v613
      %699 = vmatprep.subr.mxu0 0.0
      %700 = vmatpush1.msra.mxu0 0.0
      %701 = vmatprep.subr.mxu0 0.0
      %702 = vmatpush1.msra.mxu0 0.0
      %703 = vmatprep.subr.mxu0 0.0
      %704 = vmatpush1.msra.mxu0 0.0
      %705 = vmatprep.subr.mxu0 0.0
      %706 = vmatpush1.msra.mxu0 0.0
      %707 = vmatprep.subr.mxu0 0.0
      %708 = vmatpush1.msra.mxu0 0.0
      %709 = vmatprep.subr.mxu0 0.0
      %710 = vmatpush1.msra.mxu0 0.0
      %711 = vmatprep.subr.mxu0 0.0
      %712 = vmatpush1.msra.mxu0 0.0
      %713 = vmatprep.subr.mxu0 0.0
      %714 = vmatpush1.msra.mxu0 0.0
      %715 = vmatprep.subr.mxu0 0.0
      %716 = vmatpush1.msra.mxu0 0.0
      %717 = vmatprep.subr.mxu0 0.0
      %718 = vmatpush1.msra.mxu0 0.0
      %719 = vmatprep.subr.mxu0 0.0
      %720 = vmatpush1.msra.mxu0 0.0
      %721 = vmatprep.subr.mxu0 0.0
      %722 = vmatpush1.msra.mxu0 0.0
      %723 = vmatprep.subr.mxu0 0.0
      %724 = vmatpush1.msra.mxu0 0.0
      %725 = vmatprep.subr.mxu0 0.0
      %726 = vmatpush1.msra.mxu0 0.0
      %727 = vmatprep.subr.mxu0 0.0
      %728 = vmatpush1.msra.mxu0 0.0
      %729 = vmatprep.subr.mxu0 0.0
      %730 = vmatpush1.msra.mxu0 0.0
      %731 = vmatprep.subr.mxu0 0.0
      %732 = vmatpush1.msra.mxu0 0.0
      %733 = vmatprep.subr.mxu0 0.0
      %734 = vmatpush1.msra.mxu0 0.0
      %735 = vmatprep.subr.mxu0 0.0
      %736 = vmatpush1.msra.mxu0 0.0
      %737 = vmatprep.subr.mxu0 0.0
      %738 = vmatpush1.msra.mxu0 0.0
      %739 = vmatprep.subr.mxu0 0.0
      %740 = vmatpush1.msra.mxu0 0.0
      %741 = vmatprep.subr.mxu0 0.0
      %742 = vmatpush1.msra.mxu0 0.0
      %743 = vmatprep.subr.mxu0 0.0
      %744 = vmatpush1.msra.mxu0 0.0
      %745 = vmatprep.subr.mxu0 0.0
      %746 = vmatpush1.msra.mxu0 0.0
      %747 = vmatprep.subr.mxu0 0.0
      %748 = vmatpush1.msra.mxu0 0.0
      %749 = vmatprep.subr.mxu0 0.0
      %750 = vmatpush1.msra.mxu0 0.0
      %751 = vmatprep.subr.mxu0 0.0
      %752 = vmatpush1.msra.mxu0 0.0
      %753 = vmatprep.subr.mxu0 0.0
      %754 = vmatpush1.msra.mxu0 0.0
      %755 = vmatprep.mubr.f32.mxu0 0.0
      %756 = vmatmul.mubr.f32.gmra.mrb[0].mxu0 %v689
      %v757 = vpop.f32.mrb[0].mxu0
      %v758 = vadd.f32 0.0, %v757
      %v759 = vpop.f32.mrb[0].mxu0
      %760 = vdwg.mxu0
      %v761 = vmul.f32 %v758, 0.0009765625
      %v762 = vmul.f32 %v687, %v687
      %v763 = vsub.f32 %v761, %v762
      %v764 = vmax.f32 %v763, 0.0
      %v765 = vadd.f32 %v764, 1e-05
      %v766 = vrsqrt.pop %v765
      %v767 = vld [vmem:[%s4] sm:$0xff]
      %vm768 = vcmask 64512
      %v770 = vsel %vm768, %v687, 0
      %772 = vmatprep.subr.mxu0 0.0
      %773 = vmatpush1.msra.mxu0 %v767
      %774 = vmatprep.subr.mxu0 0.0
      %775 = vmatpush1.msra.mxu0 0.0
      %776 = vmatprep.subr.mxu0 0.0
      %777 = vmatpush1.msra.mxu0 0.0
      %778 = vmatprep.subr.mxu0 0.0
      %779 = vmatpush1.msra.mxu0 0.0
      %780 = vmatprep.subr.mxu0 0.0
      %781 = vmatpush1.msra.mxu0 0.0
      %782 = vmatprep.subr.mxu0 0.0
      %783 = vmatpush1.msra.mxu0 0.0
      %784 = vmatprep.subr.mxu0 0.0
      %785 = vmatpush1.msra.mxu0 0.0
      %786 = vmatprep.subr.mxu0 0.0
      %787 = vmatpush1.msra.mxu0 0.0
      %788 = vmatprep.subr.mxu0 0.0
      %789 = vmatpush1.msra.mxu0 0.0
      %790 = vmatprep.subr.mxu0 0.0
      %791 = vmatpush1.msra.mxu0 0.0
      %792 = vmatprep.subr.mxu0 0.0
      %793 = vmatpush1.msra.mxu0 0.0
      %794 = vmatprep.subr.mxu0 0.0
      %795 = vmatpush1.msra.mxu0 0.0
      %796 = vmatprep.subr.mxu0 0.0
      %797 = vmatpush1.msra.mxu0 0.0
      %798 = vmatprep.subr.mxu0 0.0
      %799 = vmatpush1.msra.mxu0 0.0
      %800 = vmatprep.subr.mxu0 0.0
      %801 = vmatpush1.msra.mxu0 0.0
      %802 = vmatprep.subr.mxu0 0.0
      %803 = vmatpush1.msra.mxu0 0.0
      %804 = vmatprep.subr.mxu0 0.0
      %805 = vmatpush1.msra.mxu0 0.0
      %806 = vmatprep.subr.mxu0 0.0
      %807 = vmatpush1.msra.mxu0 0.0
      %808 = vmatprep.subr.mxu0 0.0
      %809 = vmatpush1.msra.mxu0 0.0
      %810 = vmatprep.subr.mxu0 0.0
      %811 = vmatpush1.msra.mxu0 0.0
      %812 = vmatprep.subr.mxu0 0.0
      %813 = vmatpush1.msra.mxu0 0.0
      %814 = vmatprep.subr.mxu0 0.0
      %815 = vmatpush1.msra.mxu0 0.0
      %816 = vmatprep.subr.mxu0 0.0
      %817 = vmatpush1.msra.mxu0 0.0
      %818 = vmatprep.subr.mxu0 0.0
      %819 = vmatpush1.msra.mxu0 0.0
      %820 = vmatprep.subr.mxu0 0.0
      %821 = vmatpush1.msra.mxu0 0.0
      %822 = vmatprep.subr.mxu0 0.0
      %823 = vmatpush1.msra.mxu0 0.0
      %824 = vmatprep.subr.mxu0 0.0
      %825 = vmatpush1.msra.mxu0 0.0
      %826 = vmatprep.subr.mxu0 0.0
      %827 = vmatpush1.msra.mxu0 0.0
      %828 = vmatprep.subr.mxu0 0.0
      %829 = vmatpush1.msra.mxu0 0.0
      %830 = vmatprep.subr.mxu0 0.0
      %831 = vmatpush1.msra.mxu0 0.0
      %832 = vmatprep.subr.mxu0 0.0
      %833 = vmatpush1.msra.mxu0 0.0
      %834 = vmatprep.subr.mxu0 0.0
      %835 = vmatpush1.msra.mxu0 0.0
      %836 = vmatprep.mubr.f32.mxu0 0.0
      %837 = vmatmul.mubr.f32.gmra.mrb[0].mxu0 %v770
      %v838 = vpop.f32.mrb[0].mxu0
      %v839 = vadd.f32 0.0, %v838
      %v840 = vpop.f32.mrb[0].mxu0
      %841 = vdwg.mxu0
      %v843 = vsel %vm768, %v766, 0
      %845 = vmatprep.subr.mxu0 0.0
      %846 = vmatpush1.msra.mxu0 %v767
      %847 = vmatprep.subr.mxu0 0.0
      %848 = vmatpush1.msra.mxu0 0.0
      %849 = vmatprep.subr.mxu0 0.0
      %850 = vmatpush1.msra.mxu0 0.0
      %851 = vmatprep.subr.mxu0 0.0
      %852 = vmatpush1.msra.mxu0 0.0
      %853 = vmatprep.subr.mxu0 0.0
      %854 = vmatpush1.msra.mxu0 0.0
      %855 = vmatprep.subr.mxu0 0.0
      %856 = vmatpush1.msra.mxu0 0.0
      %857 = vmatprep.subr.mxu0 0.0
      %858 = vmatpush1.msra.mxu0 0.0
      %859 = vmatprep.subr.mxu0 0.0
      %860 = vmatpush1.msra.mxu0 0.0
      %861 = vmatprep.subr.mxu0 0.0
      %862 = vmatpush1.msra.mxu0 0.0
      %863 = vmatprep.subr.mxu0 0.0
      %864 = vmatpush1.msra.mxu0 0.0
      %865 = vmatprep.subr.mxu0 0.0
      %866 = vmatpush1.msra.mxu0 0.0
      %867 = vmatprep.subr.mxu0 0.0
      %868 = vmatpush1.msra.mxu0 0.0
      %869 = vmatprep.subr.mxu0 0.0
      %870 = vmatpush1.msra.mxu0 0.0
      %871 = vmatprep.subr.mxu0 0.0
      %872 = vmatpush1.msra.mxu0 0.0
      %873 = vmatprep.subr.mxu0 0.0
      %874 = vmatpush1.msra.mxu0 0.0
      %875 = vmatprep.subr.mxu0 0.0
      %876 = vmatpush1.msra.mxu0 0.0
      %877 = vmatprep.subr.mxu0 0.0
      %878 = vmatpush1.msra.mxu0 0.0
      %879 = vmatprep.subr.mxu0 0.0
      %880 = vmatpush1.msra.mxu0 0.0
      %881 = vmatprep.subr.mxu0 0.0
      %882 = vmatpush1.msra.mxu0 0.0
      %883 = vmatprep.subr.mxu0 0.0
      %884 = vmatpush1.msra.mxu0 0.0
      %885 = vmatprep.subr.mxu0 0.0
      %886 = vmatpush1.msra.mxu0 0.0
      %887 = vmatprep.subr.mxu0 0.0
      %888 = vmatpush1.msra.mxu0 0.0
      %889 = vmatprep.subr.mxu0 0.0
      %890 = vmatpush1.msra.mxu0 0.0
      %891 = vmatprep.subr.mxu0 0.0
      %892 = vmatpush1.msra.mxu0 0.0
      %893 = vmatprep.subr.mxu0 0.0
      %894 = vmatpush1.msra.mxu0 0.0
      %895 = vmatprep.subr.mxu0 0.0
      %896 = vmatpush1.msra.mxu0 0.0
      %897 = vmatprep.subr.mxu0 0.0
      %898 = vmatpush1.msra.mxu0 0.0
      %899 = vmatprep.subr.mxu0 0.0
      %900 = vmatpush1.msra.mxu0 0.0
      %901 = vmatprep.subr.mxu0 0.0
      %902 = vmatpush1.msra.mxu0 0.0
      %903 = vmatprep.subr.mxu0 0.0
      %904 = vmatpush1.msra.mxu0 0.0
      %905 = vmatprep.subr.mxu0 0.0
      %906 = vmatpush1.msra.mxu0 0.0
      %907 = vmatprep.subr.mxu0 0.0
      %908 = vmatpush1.msra.mxu0 0.0
      %909 = vmatprep.mubr.f32.mxu0 0.0
      %910 = vmatmul.mubr.f32.gmra.mrb[0].mxu0 %v843
      %v911 = vpop.f32.mrb[0].mxu0
      %v912 = vadd.f32 0.0, %v911
      %v913 = vpop.f32.mrb[0].mxu0
      %914 = vdwg.mxu0
      %v915 = vld [vmem:[%s1] sm:$0x1]
      %v916 = vmul.f32 %v912, %v915
      %v917 = vld [vmem:[%s2] sm:$0x1]
      %v918 = vmul.f32 %v839, %v916
      %v919 = vsub.f32 %v917, %v918
      %v920 = vlaneseq
      %v921 = vshrl.u32 %v920, 7
      %v922 = vsub.s32 0, %v921
      %v923 = vrot.slane %v916, %v922
      %v924 = vmul.f32 %v407, %v923
      %v925 = vmul.f32 %v408, %v923
      %v926 = vmul.f32 %v409, %v923
      %v927 = vmul.f32 %v410, %v923
      %v928 = vmul.f32 %v411, %v923
      %v929 = vmul.f32 %v412, %v923
      %v930 = vmul.f32 %v413, %v923
      %v931 = vmul.f32 %v414, %v923
      %v932 = vmul.f32 %v415, %v923
      %v933 = vmul.f32 %v416, %v923
      %v934 = vmul.f32 %v417, %v923
      %v935 = vmul.f32 %v418, %v923
      %v936 = vmul.f32 %v419, %v923
      %v937 = vmul.f32 %v420, %v923
      %v938 = vmul.f32 %v421, %v923
      %v939 = vmul.f32 %v422, %v923
      %v940 = vmul.f32 %v423, %v923
      %v941 = vmul.f32 %v424, %v923
      %v942 = vmul.f32 %v425, %v923
      %v943 = vmul.f32 %v426, %v923
      %v944 = vmul.f32 %v427, %v923
      %v945 = vmul.f32 %v428, %v923
      %v946 = vmul.f32 %v429, %v923
      %v947 = vmul.f32 %v430, %v923
      %v948 = vmul.f32 %v431, %v923
      %v949 = vmul.f32 %v432, %v923
      %v950 = vmul.f32 %v433, %v923
      %v951 = vmul.f32 %v434, %v923
      %v952 = vmul.f32 %v435, %v923
      %v953 = vmul.f32 %v436, %v923
      %v954 = vmul.f32 %v437, %v923
      %v955 = vmul.f32 %v438, %v923
      %v957 = vlaneseq
      %v958 = vshrl.u32 %v957, 7
      %v959 = vsub.s32 0, %v958
      %v960 = vrot.slane %v919, %v959
      %v962 = vadd.f32 %v924, %v960
      %v963 = vadd.f32 %v925, %v960
      %v964 = vadd.f32 %v926, %v960
      %v965 = vadd.f32 %v927, %v960
      %v966 = vadd.f32 %v928, %v960
      %v967 = vadd.f32 %v929, %v960
      %v968 = vadd.f32 %v930, %v960
      %v969 = vadd.f32 %v931, %v960
      %v970 = vadd.f32 %v932, %v960
      %v971 = vadd.f32 %v933, %v960
      %v972 = vadd.f32 %v934, %v960
      %v973 = vadd.f32 %v935, %v960
      %v974 = vadd.f32 %v936, %v960
      %v975 = vadd.f32 %v937, %v960
      %v976 = vadd.f32 %v938, %v960
      %v977 = vadd.f32 %v939, %v960
      %v978 = vadd.f32 %v940, %v960
      %v979 = vadd.f32 %v941, %v960
      %v980 = vadd.f32 %v942, %v960
      %v981 = vadd.f32 %v943, %v960
      %v982 = vadd.f32 %v944, %v960
      %v983 = vadd.f32 %v945, %v960
      %v984 = vadd.f32 %v946, %v960
      %v985 = vadd.f32 %v947, %v960
      %v986 = vadd.f32 %v948, %v960
      %v987 = vadd.f32 %v949, %v960
      %v988 = vadd.f32 %v950, %v960
      %v989 = vadd.f32 %v951, %v960
      %v990 = vadd.f32 %v952, %v960
      %v991 = vadd.f32 %v953, %v960
      %v992 = vadd.f32 %v954, %v960
      %v993 = vadd.f32 %v955, %v960
      %v994 = vxor.u32 %v962, 2147483648
      %v995 = vxor.u32 %v963, 2147483648
      %v996 = vxor.u32 %v964, 2147483648
      %v997 = vxor.u32 %v965, 2147483648
      %v998 = vxor.u32 %v966, 2147483648
      %v999 = vxor.u32 %v967, 2147483648
      %v1000 = vxor.u32 %v968, 2147483648
      %v1001 = vxor.u32 %v969, 2147483648
      %v1002 = vxor.u32 %v970, 2147483648
      %v1003 = vxor.u32 %v971, 2147483648
      %v1004 = vxor.u32 %v972, 2147483648
      %v1005 = vxor.u32 %v973, 2147483648
      %v1006 = vxor.u32 %v974, 2147483648
      %v1007 = vxor.u32 %v975, 2147483648
      %v1008 = vxor.u32 %v976, 2147483648
      %v1009 = vxor.u32 %v977, 2147483648
      %v1010 = vxor.u32 %v978, 2147483648
      %v1011 = vxor.u32 %v979, 2147483648
      %v1012 = vxor.u32 %v980, 2147483648
      %v1013 = vxor.u32 %v981, 2147483648
      %v1014 = vxor.u32 %v982, 2147483648
      %v1015 = vxor.u32 %v983, 2147483648
      %v1016 = vxor.u32 %v984, 2147483648
      %v1017 = vxor.u32 %v985, 2147483648
      %v1018 = vxor.u32 %v986, 2147483648
      %v1019 = vxor.u32 %v987, 2147483648
      %v1020 = vxor.u32 %v988, 2147483648
      %v1021 = vxor.u32 %v989, 2147483648
      %v1022 = vxor.u32 %v990, 2147483648
      %v1023 = vxor.u32 %v991, 2147483648
      %v1024 = vxor.u32 %v992, 2147483648
      %v1025 = vxor.u32 %v993, 2147483648
      %v1026 = vmul.f32 %v994, 1.442695
      %v1027 = vpow.pop %v1026
      %v1028 = vmul.f32 %v995, 1.442695
      %v1029 = vpow.pop %v1028
      %v1030 = vmul.f32 %v996, 1.442695
      %v1031 = vpow.pop %v1030
      %v1032 = vmul.f32 %v997, 1.442695
      %v1033 = vpow.pop %v1032
      %v1034 = vmul.f32 %v998, 1.442695
      %v1035 = vpow.pop %v1034
      %v1036 = vmul.f32 %v999, 1.442695
      %v1037 = vpow.pop %v1036
      %v1038 = vmul.f32 %v1000, 1.442695
      %v1039 = vpow.pop %v1038
      %v1040 = vmul.f32 %v1001, 1.442695
      %v1041 = vpow.pop %v1040
      %v1042 = vmul.f32 %v1002, 1.442695
      %v1043 = vpow.pop %v1042
      %v1044 = vmul.f32 %v1003, 1.442695
      %v1045 = vpow.pop %v1044
      %v1046 = vmul.f32 %v1004, 1.442695
      %v1047 = vpow.pop %v1046
      %v1048 = vmul.f32 %v1005, 1.442695
      %v1049 = vpow.pop %v1048
      %v1050 = vmul.f32 %v1006, 1.442695
      %v1051 = vpow.pop %v1050
      %v1052 = vmul.f32 %v1007, 1.442695
      %v1053 = vpow.pop %v1052
      %v1054 = vmul.f32 %v1008, 1.442695
      %v1055 = vpow.pop %v1054
      %v1056 = vmul.f32 %v1009, 1.442695
      %v1057 = vpow.pop %v1056
      %v1058 = vmul.f32 %v1010, 1.442695
      %v1059 = vpow.pop %v1058
      %v1060 = vmul.f32 %v1011, 1.442695
      %v1061 = vpow.pop %v1060
      %v1062 = vmul.f32 %v1012, 1.442695
      %v1063 = vpow.pop %v1062
      %v1064 = vmul.f32 %v1013, 1.442695
      %v1065 = vpow.pop %v1064
      %v1066 = vmul.f32 %v1014, 1.442695
      %v1067 = vpow.pop %v1066
      %v1068 = vmul.f32 %v1015, 1.442695
      %v1069 = vpow.pop %v1068
      %v1070 = vmul.f32 %v1016, 1.442695
      %v1071 = vpow.pop %v1070
      %v1072 = vmul.f32 %v1017, 1.442695
      %v1073 = vpow.pop %v1072
      %v1074 = vmul.f32 %v1018, 1.442695
      %v1075 = vpow.pop %v1074
      %v1076 = vmul.f32 %v1019, 1.442695
      %v1077 = vpow.pop %v1076
      %v1078 = vmul.f32 %v1020, 1.442695
      %v1079 = vpow.pop %v1078
      %v1080 = vmul.f32 %v1021, 1.442695
      %v1081 = vpow.pop %v1080
      %v1082 = vmul.f32 %v1022, 1.442695
      %v1083 = vpow.pop %v1082
      %v1084 = vmul.f32 %v1023, 1.442695
      %v1085 = vpow.pop %v1084
      %v1086 = vmul.f32 %v1024, 1.442695
      %v1087 = vpow.pop %v1086
      %v1088 = vmul.f32 %v1025, 1.442695
      %v1089 = vpow.pop %v1088
      %v1090 = vadd.f32 %v1027, 1.0
      %v1091 = vadd.f32 %v1029, 1.0
      %v1092 = vadd.f32 %v1031, 1.0
      %v1093 = vadd.f32 %v1033, 1.0
      %v1094 = vadd.f32 %v1035, 1.0
      %v1095 = vadd.f32 %v1037, 1.0
      %v1096 = vadd.f32 %v1039, 1.0
      %v1097 = vadd.f32 %v1041, 1.0
      %v1098 = vadd.f32 %v1043, 1.0
      %v1099 = vadd.f32 %v1045, 1.0
      %v1100 = vadd.f32 %v1047, 1.0
      %v1101 = vadd.f32 %v1049, 1.0
      %v1102 = vadd.f32 %v1051, 1.0
      %v1103 = vadd.f32 %v1053, 1.0
      %v1104 = vadd.f32 %v1055, 1.0
      %v1105 = vadd.f32 %v1057, 1.0
      %v1106 = vadd.f32 %v1059, 1.0
      %v1107 = vadd.f32 %v1061, 1.0
      %v1108 = vadd.f32 %v1063, 1.0
      %v1109 = vadd.f32 %v1065, 1.0
      %v1110 = vadd.f32 %v1067, 1.0
      %v1111 = vadd.f32 %v1069, 1.0
      %v1112 = vadd.f32 %v1071, 1.0
      %v1113 = vadd.f32 %v1073, 1.0
      %v1114 = vadd.f32 %v1075, 1.0
      %v1115 = vadd.f32 %v1077, 1.0
      %v1116 = vadd.f32 %v1079, 1.0
      %v1117 = vadd.f32 %v1081, 1.0
      %v1118 = vadd.f32 %v1083, 1.0
      %v1119 = vadd.f32 %v1085, 1.0
      %v1120 = vadd.f32 %v1087, 1.0
      %v1121 = vadd.f32 %v1089, 1.0
      %v1122 = vrcp.pop %v1090
      %v1123 = vmul.f32 1.0, %v1122
      %v1124 = vrcp.pop %v1091
      %v1125 = vmul.f32 1.0, %v1124
      %v1126 = vrcp.pop %v1092
      %v1127 = vmul.f32 1.0, %v1126
      %v1128 = vrcp.pop %v1093
      %v1129 = vmul.f32 1.0, %v1128
      %v1130 = vrcp.pop %v1094
      %v1131 = vmul.f32 1.0, %v1130
      %v1132 = vrcp.pop %v1095
      %v1133 = vmul.f32 1.0, %v1132
      %v1134 = vrcp.pop %v1096
      %v1135 = vmul.f32 1.0, %v1134
      %v1136 = vrcp.pop %v1097
      %v1137 = vmul.f32 1.0, %v1136
      %v1138 = vrcp.pop %v1098
      %v1139 = vmul.f32 1.0, %v1138
      %v1140 = vrcp.pop %v1099
      %v1141 = vmul.f32 1.0, %v1140
      %v1142 = vrcp.pop %v1100
      %v1143 = vmul.f32 1.0, %v1142
      %v1144 = vrcp.pop %v1101
      %v1145 = vmul.f32 1.0, %v1144
      %v1146 = vrcp.pop %v1102
      %v1147 = vmul.f32 1.0, %v1146
      %v1148 = vrcp.pop %v1103
      %v1149 = vmul.f32 1.0, %v1148
      %v1150 = vrcp.pop %v1104
      %v1151 = vmul.f32 1.0, %v1150
      %v1152 = vrcp.pop %v1105
      %v1153 = vmul.f32 1.0, %v1152
      %v1154 = vrcp.pop %v1106
      %v1155 = vmul.f32 1.0, %v1154
      %v1156 = vrcp.pop %v1107
      %v1157 = vmul.f32 1.0, %v1156
      %v1158 = vrcp.pop %v1108
      %v1159 = vmul.f32 1.0, %v1158
      %v1160 = vrcp.pop %v1109
      %v1161 = vmul.f32 1.0, %v1160
      %v1162 = vrcp.pop %v1110
      %v1163 = vmul.f32 1.0, %v1162
      %v1164 = vrcp.pop %v1111
      %v1165 = vmul.f32 1.0, %v1164
      %v1166 = vrcp.pop %v1112
      %v1167 = vmul.f32 1.0, %v1166
      %v1168 = vrcp.pop %v1113
      %v1169 = vmul.f32 1.0, %v1168
      %v1170 = vrcp.pop %v1114
      %v1171 = vmul.f32 1.0, %v1170
      %v1172 = vrcp.pop %v1115
      %v1173 = vmul.f32 1.0, %v1172
      %v1174 = vrcp.pop %v1116
      %v1175 = vmul.f32 1.0, %v1174
      %v1176 = vrcp.pop %v1117
      %v1177 = vmul.f32 1.0, %v1176
      %v1178 = vrcp.pop %v1118
      %v1179 = vmul.f32 1.0, %v1178
      %v1180 = vrcp.pop %v1119
      %v1181 = vmul.f32 1.0, %v1180
      %v1182 = vrcp.pop %v1120
      %v1183 = vmul.f32 1.0, %v1182
      %v1184 = vrcp.pop %v1121
      %v1185 = vmul.f32 1.0, %v1184
      %v1186 = vmul.f32 %v962, %v1123
      %v1187 = vmul.f32 %v963, %v1125
      %v1188 = vmul.f32 %v964, %v1127
      %v1189 = vmul.f32 %v965, %v1129
      %v1190 = vmul.f32 %v966, %v1131
      %v1191 = vmul.f32 %v967, %v1133
      %v1192 = vmul.f32 %v968, %v1135
      %v1193 = vmul.f32 %v969, %v1137
      %v1194 = vmul.f32 %v970, %v1139
      %v1195 = vmul.f32 %v971, %v1141
      %v1196 = vmul.f32 %v972, %v1143
      %v1197 = vmul.f32 %v973, %v1145
      %v1198 = vmul.f32 %v974, %v1147
      %v1199 = vmul.f32 %v975, %v1149
      %v1200 = vmul.f32 %v976, %v1151
      %v1201 = vmul.f32 %v977, %v1153
      %v1202 = vmul.f32 %v978, %v1155
      %v1203 = vmul.f32 %v979, %v1157
      %v1204 = vmul.f32 %v980, %v1159
      %v1205 = vmul.f32 %v981, %v1161
      %v1206 = vmul.f32 %v982, %v1163
      %v1207 = vmul.f32 %v983, %v1165
      %v1208 = vmul.f32 %v984, %v1167
      %v1209 = vmul.f32 %v985, %v1169
      %v1210 = vmul.f32 %v986, %v1171
      %v1211 = vmul.f32 %v987, %v1173
      %v1212 = vmul.f32 %v988, %v1175
      %v1213 = vmul.f32 %v989, %v1177
      %v1214 = vmul.f32 %v990, %v1179
      %v1215 = vmul.f32 %v991, %v1181
      %v1216 = vmul.f32 %v992, %v1183
      %v1217 = vmul.f32 %v993, %v1185
      %vm1218 = vcmask 785408
      %1219 = vst.msk [vmem:[#allocation2] sm:$0xff] %vm1218, 0.0
      %1220 = vst.msk [vmem:[#allocation2 + $0x8] sm:$0xff] %vm1218, 0.0
      %vm1221 = vcmask 778240
      %1222 = vst.msk [vmem:[#allocation2 + $0x10] sm:$0x1] %vm1221, 0.0
      %1223 = vst.msk [vmem:[#allocation2 + $0x10f] sm:$0xff] %vm1218, 0.0
      %1224 = vst.msk [vmem:[#allocation2 + $0x117] sm:$0xff] %vm1218, 0.0
      %1225 = vst.msk [vmem:[#allocation2 + $0x11f] sm:$0x1] %vm1221, 0.0
      %v1226 = vlaneseq
      %v1227 = vshrl.u32 %v1226, 7
      %v1228 = vadd.s32 %v1227, 8
      %v1229 = vadd.s32 %v1227, 16
      %v1230 = vadd.s32 %v1227, 24
      %v1231 = vadd.s32 %v1227, 32
      %v1232 = vadd.s32 %v1227, 40
      %v1233 = vadd.s32 %v1227, 48
      %v1234 = vadd.s32 %v1227, 56
      %v1235 = vadd.s32 %v1227, 64
      %v1236 = vadd.s32 %v1227, 72
      %v1237 = vadd.s32 %v1227, 80
      %v1238 = vadd.s32 %v1227, 88
      %v1239 = vadd.s32 %v1227, 96
      %v1240 = vadd.s32 %v1227, 104
      %v1241 = vadd.s32 %v1227, 112
      %v1242 = vadd.s32 %v1227, 120
      %v1243 = vadd.s32 %v1227, 128
      %v1244 = vadd.s32 %v1227, 136
      %v1245 = vadd.s32 %v1227, 144
      %v1246 = vadd.s32 %v1227, 152
      %v1247 = vadd.s32 %v1227, 160
      %v1248 = vadd.s32 %v1227, 168
      %v1249 = vadd.s32 %v1227, 176
      %v1250 = vadd.s32 %v1227, 184
      %v1251 = vadd.s32 %v1227, 192
      %v1252 = vadd.s32 %v1227, 200
      %v1253 = vadd.s32 %v1227, 208
      %v1254 = vadd.s32 %v1227, 216
      %v1255 = vadd.s32 %v1227, 224
      %v1256 = vadd.s32 %v1227, 232
      %v1257 = vadd.s32 %v1227, 240
      %v1258 = vadd.s32 %v1227, 248
      %vm1259 = vcmp.lt.s32.totalorder %v1227, 0
      %v1260 = vsub.s32 0, %v1227
      %v1261 = vsel %vm1259, %v1260, %v1227
      %v1262 = vshrl.u32 %v1261, 4
      %v1263 = vand.u32 %v1261, 15
      %v1264 = vsub.s32 0, %v1263
      %v1265 = vsel %vm1259, %v1264, %v1263
      %vm1266 = vcmp.lt.s32.totalorder %v1228, 0
      %v1267 = vsub.s32 0, %v1228
      %v1268 = vsel %vm1266, %v1267, %v1228
      %v1269 = vshrl.u32 %v1268, 4
      %v1270 = vand.u32 %v1268, 15
      %v1271 = vsub.s32 0, %v1270
      %v1272 = vsel %vm1266, %v1271, %v1270
      %vm1273 = vcmp.lt.s32.totalorder %v1229, 0
      %v1274 = vsub.s32 0, %v1229
      %v1275 = vsel %vm1273, %v1274, %v1229
      %v1276 = vshrl.u32 %v1275, 4
      %v1277 = vand.u32 %v1275, 15
      %v1278 = vsub.s32 0, %v1277
      %v1279 = vsel %vm1273, %v1278, %v1277
      %vm1280 = vcmp.lt.s32.totalorder %v1230, 0
      %v1281 = vsub.s32 0, %v1230
      %v1282 = vsel %vm1280, %v1281, %v1230
      %v1283 = vshrl.u32 %v1282, 4
      %v1284 = vand.u32 %v1282, 15
      %v1285 = vsub.s32 0, %v1284
      %v1286 = vsel %vm1280, %v1285, %v1284
      %vm1287 = vcmp.lt.s32.totalorder %v1231, 0
      %v1288 = vsub.s32 0, %v1231
      %v1289 = vsel %vm1287, %v1288, %v1231
      %v1290 = vshrl.u32 %v1289, 4
      %v1291 = vand.u32 %v1289, 15
      %v1292 = vsub.s32 0, %v1291
      %v1293 = vsel %vm1287, %v1292, %v1291
      %vm1294 = vcmp.lt.s32.totalorder %v1232, 0
      %v1295 = vsub.s32 0, %v1232
      %v1296 = vsel %vm1294, %v1295, %v1232
      %v1297 = vshrl.u32 %v1296, 4
      %v1298 = vand.u32 %v1296, 15
      %v1299 = vsub.s32 0, %v1298
      %v1300 = vsel %vm1294, %v1299, %v1298
      %vm1301 = vcmp.lt.s32.totalorder %v1233, 0
      %v1302 = vsub.s32 0, %v1233
      %v1303 = vsel %vm1301, %v1302, %v1233
      %v1304 = vshrl.u32 %v1303, 4
      %v1305 = vand.u32 %v1303, 15
      %v1306 = vsub.s32 0, %v1305
      %v1307 = vsel %vm1301, %v1306, %v1305
      %vm1308 = vcmp.lt.s32.totalorder %v1234, 0
      %v1309 = vsub.s32 0, %v1234
      %v1310 = vsel %vm1308, %v1309, %v1234
      %v1311 = vshrl.u32 %v1310, 4
      %v1312 = vand.u32 %v1310, 15
      %v1313 = vsub.s32 0, %v1312
      %v1314 = vsel %vm1308, %v1313, %v1312
      %vm1315 = vcmp.lt.s32.totalorder %v1235, 0
      %v1316 = vsub.s32 0, %v1235
      %v1317 = vsel %vm1315, %v1316, %v1235
      %v1318 = vshrl.u32 %v1317, 4
      %v1319 = vand.u32 %v1317, 15
      %v1320 = vsub.s32 0, %v1319
      %v1321 = vsel %vm1315, %v1320, %v1319
      %vm1322 = vcmp.lt.s32.totalorder %v1236, 0
      %v1323 = vsub.s32 0, %v1236
      %v1324 = vsel %vm1322, %v1323, %v1236
      %v1325 = vshrl.u32 %v1324, 4
      %v1326 = vand.u32 %v1324, 15
      %v1327 = vsub.s32 0, %v1326
      %v1328 = vsel %vm1322, %v1327, %v1326
      %vm1329 = vcmp.lt.s32.totalorder %v1237, 0
      %v1330 = vsub.s32 0, %v1237
      %v1331 = vsel %vm1329, %v1330, %v1237
      %v1332 = vshrl.u32 %v1331, 4
      %v1333 = vand.u32 %v1331, 15
      %v1334 = vsub.s32 0, %v1333
      %v1335 = vsel %vm1329, %v1334, %v1333
      %vm1336 = vcmp.lt.s32.totalorder %v1238, 0
      %v1337 = vsub.s32 0, %v1238
      %v1338 = vsel %vm1336, %v1337, %v1238
      %v1339 = vshrl.u32 %v1338, 4
      %v1340 = vand.u32 %v1338, 15
      %v1341 = vsub.s32 0, %v1340
      %v1342 = vsel %vm1336, %v1341, %v1340
      %vm1343 = vcmp.lt.s32.totalorder %v1239, 0
      %v1344 = vsub.s32 0, %v1239
      %v1345 = vsel %vm1343, %v1344, %v1239
      %v1346 = vshrl.u32 %v1345, 4
      %v1347 = vand.u32 %v1345, 15
      %v1348 = vsub.s32 0, %v1347
      %v1349 = vsel %vm1343, %v1348, %v1347
      %vm1350 = vcmp.lt.s32.totalorder %v1240, 0
      %v1351 = vsub.s32 0, %v1240
      %v1352 = vsel %vm1350, %v1351, %v1240
      %v1353 = vshrl.u32 %v1352, 4
      %v1354 = vand.u32 %v1352, 15
      %v1355 = vsub.s32 0, %v1354
      %v1356 = vsel %vm1350, %v1355, %v1354
      %vm1357 = vcmp.lt.s32.totalorder %v1241, 0
      %v1358 = vsub.s32 0, %v1241
      %v1359 = vsel %vm1357, %v1358, %v1241
      %v1360 = vshrl.u32 %v1359, 4
      %v1361 = vand.u32 %v1359, 15
      %v1362 = vsub.s32 0, %v1361
      %v1363 = vsel %vm1357, %v1362, %v1361
      %vm1364 = vcmp.lt.s32.totalorder %v1242, 0
      %v1365 = vsub.s32 0, %v1242
      %v1366 = vsel %vm1364, %v1365, %v1242
      %v1367 = vshrl.u32 %v1366, 4
      %v1368 = vand.u32 %v1366, 15
      %v1369 = vsub.s32 0, %v1368
      %v1370 = vsel %vm1364, %v1369, %v1368
      %vm1371 = vcmp.lt.s32.totalorder %v1243, 0
      %v1372 = vsub.s32 0, %v1243
      %v1373 = vsel %vm1371, %v1372, %v1243
      %v1374 = vshrl.u32 %v1373, 4
      %v1375 = vand.u32 %v1373, 15
      %v1376 = vsub.s32 0, %v1375
      %v1377 = vsel %vm1371, %v1376, %v1375
      %vm1378 = vcmp.lt.s32.totalorder %v1244, 0
      %v1379 = vsub.s32 0, %v1244
      %v1380 = vsel %vm1378, %v1379, %v1244
      %v1381 = vshrl.u32 %v1380, 4
      %v1382 = vand.u32 %v1380, 15
      %v1383 = vsub.s32 0, %v1382
      %v1384 = vsel %vm1378, %v1383, %v1382
      %vm1385 = vcmp.lt.s32.totalorder %v1245, 0
      %v1386 = vsub.s32 0, %v1245
      %v1387 = vsel %vm1385, %v1386, %v1245
      %v1388 = vshrl.u32 %v1387, 4
      %v1389 = vand.u32 %v1387, 15
      %v1390 = vsub.s32 0, %v1389
      %v1391 = vsel %vm1385, %v1390, %v1389
      %vm1392 = vcmp.lt.s32.totalorder %v1246, 0
      %v1393 = vsub.s32 0, %v1246
      %v1394 = vsel %vm1392, %v1393, %v1246
      %v1395 = vshrl.u32 %v1394, 4
      %v1396 = vand.u32 %v1394, 15
      %v1397 = vsub.s32 0, %v1396
      %v1398 = vsel %vm1392, %v1397, %v1396
      %vm1399 = vcmp.lt.s32.totalorder %v1247, 0
      %v1400 = vsub.s32 0, %v1247
      %v1401 = vsel %vm1399, %v1400, %v1247
      %v1402 = vshrl.u32 %v1401, 4
      %v1403 = vand.u32 %v1401, 15
      %v1404 = vsub.s32 0, %v1403
      %v1405 = vsel %vm1399, %v1404, %v1403
      %vm1406 = vcmp.lt.s32.totalorder %v1248, 0
      %v1407 = vsub.s32 0, %v1248
      %v1408 = vsel %vm1406, %v1407, %v1248
      %v1409 = vshrl.u32 %v1408, 4
      %v1410 = vand.u32 %v1408, 15
      %v1411 = vsub.s32 0, %v1410
      %v1412 = vsel %vm1406, %v1411, %v1410
      %vm1413 = vcmp.lt.s32.totalorder %v1249, 0
      %v1414 = vsub.s32 0, %v1249
      %v1415 = vsel %vm1413, %v1414, %v1249
      %v1416 = vshrl.u32 %v1415, 4
      %v1417 = vand.u32 %v1415, 15
      %v1418 = vsub.s32 0, %v1417
      %v1419 = vsel %vm1413, %v1418, %v1417
      %vm1420 = vcmp.lt.s32.totalorder %v1250, 0
      %v1421 = vsub.s32 0, %v1250
      %v1422 = vsel %vm1420, %v1421, %v1250
      %v1423 = vshrl.u32 %v1422, 4
      %v1424 = vand.u32 %v1422, 15
      %v1425 = vsub.s32 0, %v1424
      %v1426 = vsel %vm1420, %v1425, %v1424
      %vm1427 = vcmp.lt.s32.totalorder %v1251, 0
      %v1428 = vsub.s32 0, %v1251
      %v1429 = vsel %vm1427, %v1428, %v1251
      %v1430 = vshrl.u32 %v1429, 4
      %v1431 = vand.u32 %v1429, 15
      %v1432 = vsub.s32 0, %v1431
      %v1433 = vsel %vm1427, %v1432, %v1431
      %vm1434 = vcmp.lt.s32.totalorder %v1252, 0
      %v1435 = vsub.s32 0, %v1252
      %v1436 = vsel %vm1434, %v1435, %v1252
      %v1437 = vshrl.u32 %v1436, 4
      %v1438 = vand.u32 %v1436, 15
      %v1439 = vsub.s32 0, %v1438
      %v1440 = vsel %vm1434, %v1439, %v1438
      %vm1441 = vcmp.lt.s32.totalorder %v1253, 0
      %v1442 = vsub.s32 0, %v1253
      %v1443 = vsel %vm1441, %v1442, %v1253
      %v1444 = vshrl.u32 %v1443, 4
      %v1445 = vand.u32 %v1443, 15
      %v1446 = vsub.s32 0, %v1445
      %v1447 = vsel %vm1441, %v1446, %v1445
      %vm1448 = vcmp.lt.s32.totalorder %v1254, 0
      %v1449 = vsub.s32 0, %v1254
      %v1450 = vsel %vm1448, %v1449, %v1254
      %v1451 = vshrl.u32 %v1450, 4
      %v1452 = vand.u32 %v1450, 15
      %v1453 = vsub.s32 0, %v1452
      %v1454 = vsel %vm1448, %v1453, %v1452
      %vm1455 = vcmp.lt.s32.totalorder %v1255, 0
      %v1456 = vsub.s32 0, %v1255
      %v1457 = vsel %vm1455, %v1456, %v1255
      %v1458 = vshrl.u32 %v1457, 4
      %v1459 = vand.u32 %v1457, 15
      %v1460 = vsub.s32 0, %v1459
      %v1461 = vsel %vm1455, %v1460, %v1459
      %vm1462 = vcmp.lt.s32.totalorder %v1256, 0
      %v1463 = vsub.s32 0, %v1256
      %v1464 = vsel %vm1462, %v1463, %v1256
      %v1465 = vshrl.u32 %v1464, 4
      %v1466 = vand.u32 %v1464, 15
      %v1467 = vsub.s32 0, %v1466
      %v1468 = vsel %vm1462, %v1467, %v1466
      %vm1469 = vcmp.lt.s32.totalorder %v1257, 0
      %v1470 = vsub.s32 0, %v1257
      %v1471 = vsel %vm1469, %v1470, %v1257
      %v1472 = vshrl.u32 %v1471, 4
      %v1473 = vand.u32 %v1471, 15
      %v1474 = vsub.s32 0, %v1473
      %v1475 = vsel %vm1469, %v1474, %v1473
      %vm1476 = vcmp.lt.s32.totalorder %v1258, 0
      %v1477 = vsub.s32 0, %v1258
      %v1478 = vsel %vm1476, %v1477, %v1258
      %v1479 = vshrl.u32 %v1478, 4
      %v1480 = vand.u32 %v1478, 15
      %v1481 = vsub.s32 0, %v1480
      %v1482 = vsel %vm1476, %v1481, %v1480
      %vm1483 = vcmp.ne.s32.totalorder %v1265, 0
      %vm1484 = vcmp.ne.s32.totalorder %v1272, 0
      %vm1485 = vcmp.ne.s32.totalorder %v1279, 0
      %vm1486 = vcmp.ne.s32.totalorder %v1286, 0
      %vm1487 = vcmp.ne.s32.totalorder %v1293, 0
      %vm1488 = vcmp.ne.s32.totalorder %v1300, 0
      %vm1489 = vcmp.ne.s32.totalorder %v1307, 0
      %vm1490 = vcmp.ne.s32.totalorder %v1314, 0
      %vm1491 = vcmp.ne.s32.totalorder %v1321, 0
      %vm1492 = vcmp.ne.s32.totalorder %v1328, 0
      %vm1493 = vcmp.ne.s32.totalorder %v1335, 0
      %vm1494 = vcmp.ne.s32.totalorder %v1342, 0
      %vm1495 = vcmp.ne.s32.totalorder %v1349, 0
      %vm1496 = vcmp.ne.s32.totalorder %v1356, 0
      %vm1497 = vcmp.ne.s32.totalorder %v1363, 0
      %vm1498 = vcmp.ne.s32.totalorder %v1370, 0
      %vm1499 = vcmp.ne.s32.totalorder %v1377, 0
      %vm1500 = vcmp.ne.s32.totalorder %v1384, 0
      %vm1501 = vcmp.ne.s32.totalorder %v1391, 0
      %vm1502 = vcmp.ne.s32.totalorder %v1398, 0
      %vm1503 = vcmp.ne.s32.totalorder %v1405, 0
      %vm1504 = vcmp.ne.s32.totalorder %v1412, 0
      %vm1505 = vcmp.ne.s32.totalorder %v1419, 0
      %vm1506 = vcmp.ne.s32.totalorder %v1426, 0
      %vm1507 = vcmp.ne.s32.totalorder %v1433, 0
      %vm1508 = vcmp.ne.s32.totalorder %v1440, 0
      %vm1509 = vcmp.ne.s32.totalorder %v1447, 0
      %vm1510 = vcmp.ne.s32.totalorder %v1454, 0
      %vm1511 = vcmp.ne.s32.totalorder %v1461, 0
      %vm1512 = vcmp.ne.s32.totalorder %v1468, 0
      %vm1513 = vcmp.ne.s32.totalorder %v1475, 0
      %vm1514 = vcmp.ne.s32.totalorder %v1482, 0
      %vm1515 = vcmp.lt.s32.totalorder %v1265, 0
      %vm1516 = vcmp.lt.s32.totalorder %v1272, 0
      %vm1517 = vcmp.lt.s32.totalorder %v1279, 0
      %vm1518 = vcmp.lt.s32.totalorder %v1286, 0
      %vm1519 = vcmp.lt.s32.totalorder %v1293, 0
      %vm1520 = vcmp.lt.s32.totalorder %v1300, 0
      %vm1521 = vcmp.lt.s32.totalorder %v1307, 0
      %vm1522 = vcmp.lt.s32.totalorder %v1314, 0
      %vm1523 = vcmp.lt.s32.totalorder %v1321, 0
      %vm1524 = vcmp.lt.s32.totalorder %v1328, 0
      %vm1525 = vcmp.lt.s32.totalorder %v1335, 0
      %vm1526 = vcmp.lt.s32.totalorder %v1342, 0
      %vm1527 = vcmp.lt.s32.totalorder %v1349, 0
      %vm1528 = vcmp.lt.s32.totalorder %v1356, 0
      %vm1529 = vcmp.lt.s32.totalorder %v1363, 0
      %vm1530 = vcmp.lt.s32.totalorder %v1370, 0
      %vm1531 = vcmp.lt.s32.totalorder %v1377, 0
      %vm1532 = vcmp.lt.s32.totalorder %v1384, 0
      %vm1533 = vcmp.lt.s32.totalorder %v1391, 0
      %vm1534 = vcmp.lt.s32.totalorder %v1398, 0
      %vm1535 = vcmp.lt.s32.totalorder %v1405, 0
      %vm1536 = vcmp.lt.s32.totalorder %v1412, 0
      %vm1537 = vcmp.lt.s32.totalorder %v1419, 0
      %vm1538 = vcmp.lt.s32.totalorder %v1426, 0
      %vm1539 = vcmp.lt.s32.totalorder %v1433, 0
      %vm1540 = vcmp.lt.s32.totalorder %v1440, 0
      %vm1541 = vcmp.lt.s32.totalorder %v1447, 0
      %vm1542 = vcmp.lt.s32.totalorder %v1454, 0
      %vm1543 = vcmp.lt.s32.totalorder %v1461, 0
      %vm1544 = vcmp.lt.s32.totalorder %v1468, 0
      %vm1545 = vcmp.lt.s32.totalorder %v1475, 0
      %vm1546 = vcmp.lt.s32.totalorder %v1482, 0
      %vm1547 = vmand %vm1515, %vm1483
      %vm1548 = vmand %vm1516, %vm1484
      %vm1549 = vmand %vm1517, %vm1485
      %vm1550 = vmand %vm1518, %vm1486
      %vm1551 = vmand %vm1519, %vm1487
      %vm1552 = vmand %vm1520, %vm1488
      %vm1553 = vmand %vm1521, %vm1489
      %vm1554 = vmand %vm1522, %vm1490
      %vm1555 = vmand %vm1523, %vm1491
      %vm1556 = vmand %vm1524, %vm1492
      %vm1557 = vmand %vm1525, %vm1493
      %vm1558 = vmand %vm1526, %vm1494
      %vm1559 = vmand %vm1527, %vm1495
      %vm1560 = vmand %vm1528, %vm1496
      %vm1561 = vmand %vm1529, %vm1497
      %vm1562 = vmand %vm1530, %vm1498
      %vm1563 = vmand %vm1531, %vm1499
      %vm1564 = vmand %vm1532, %vm1500
      %vm1565 = vmand %vm1533, %vm1501
      %vm1566 = vmand %vm1534, %vm1502
      %vm1567 = vmand %vm1535, %vm1503
      %vm1568 = vmand %vm1536, %vm1504
      %vm1569 = vmand %vm1537, %vm1505
      %vm1570 = vmand %vm1538, %vm1506
      %vm1571 = vmand %vm1539, %vm1507
      %vm1572 = vmand %vm1540, %vm1508
      %vm1573 = vmand %vm1541, %vm1509
      %vm1574 = vmand %vm1542, %vm1510
      %vm1575 = vmand %vm1543, %vm1511
      %vm1576 = vmand %vm1544, %vm1512
      %vm1577 = vmand %vm1545, %vm1513
      %vm1578 = vmand %vm1546, %vm1514
      %v1579 = vadd.s32 %v1265, 16
      %v1580 = vadd.s32 %v1272, 16
      %v1581 = vadd.s32 %v1279, 16
      %v1582 = vadd.s32 %v1286, 16
      %v1583 = vadd.s32 %v1293, 16
      %v1584 = vadd.s32 %v1300, 16
      %v1585 = vadd.s32 %v1307, 16
      %v1586 = vadd.s32 %v1314, 16
      %v1587 = vadd.s32 %v1321, 16
      %v1588 = vadd.s32 %v1328, 16
      %v1589 = vadd.s32 %v1335, 16
      %v1590 = vadd.s32 %v1342, 16
      %v1591 = vadd.s32 %v1349, 16
      %v1592 = vadd.s32 %v1356, 16
      %v1593 = vadd.s32 %v1363, 16
      %v1594 = vadd.s32 %v1370, 16
      %v1595 = vadd.s32 %v1377, 16
      %v1596 = vadd.s32 %v1384, 16
      %v1597 = vadd.s32 %v1391, 16
      %v1598 = vadd.s32 %v1398, 16
      %v1599 = vadd.s32 %v1405, 16
      %v1600 = vadd.s32 %v1412, 16
      %v1601 = vadd.s32 %v1419, 16
      %v1602 = vadd.s32 %v1426, 16
      %v1603 = vadd.s32 %v1433, 16
      %v1604 = vadd.s32 %v1440, 16
      %v1605 = vadd.s32 %v1447, 16
      %v1606 = vadd.s32 %v1454, 16
      %v1607 = vadd.s32 %v1461, 16
      %v1608 = vadd.s32 %v1468, 16
      %v1609 = vadd.s32 %v1475, 16
      %v1610 = vadd.s32 %v1482, 16
      %v1611 = vsel %vm1547, %v1579, %v1265
      %v1612 = vsel %vm1548, %v1580, %v1272
      %v1613 = vsel %vm1549, %v1581, %v1279
      %v1614 = vsel %vm1550, %v1582, %v1286
      %v1615 = vsel %vm1551, %v1583, %v1293
      %v1616 = vsel %vm1552, %v1584, %v1300
      %v1617 = vsel %vm1553, %v1585, %v1307
      %v1618 = vsel %vm1554, %v1586, %v1314
      %v1619 = vsel %vm1555, %v1587, %v1321
      %v1620 = vsel %vm1556, %v1588, %v1328
      %v1621 = vsel %vm1557, %v1589, %v1335
      %v1622 = vsel %vm1558, %v1590, %v1342
      %v1623 = vsel %vm1559, %v1591, %v1349
      %v1624 = vsel %vm1560, %v1592, %v1356
      %v1625 = vsel %vm1561, %v1593, %v1363
      %v1626 = vsel %vm1562, %v1594, %v1370
      %v1627 = vsel %vm1563, %v1595, %v1377
      %v1628 = vsel %vm1564, %v1596, %v1384
      %v1629 = vsel %vm1565, %v1597, %v1391
      %v1630 = vsel %vm1566, %v1598, %v1398
      %v1631 = vsel %vm1567, %v1599, %v1405
      %v1632 = vsel %vm1568, %v1600, %v1412
      %v1633 = vsel %vm1569, %v1601, %v1419
      %v1634 = vsel %vm1570, %v1602, %v1426
      %v1635 = vsel %vm1571, %v1603, %v1433
      %v1636 = vsel %vm1572, %v1604, %v1440
      %v1637 = vsel %vm1573, %v1605, %v1447
      %v1638 = vsel %vm1574, %v1606, %v1454
      %v1639 = vsel %vm1575, %v1607, %v1461
      %v1640 = vsel %vm1576, %v1608, %v1468
      %v1641 = vsel %vm1577, %v1609, %v1475
      %v1642 = vsel %vm1578, %v1610, %v1482
      %vm1643 = vcmp.ne.s32.totalorder %v1611, 15
      %vm1644 = vcmp.ne.s32.totalorder %v1612, 15
      %vm1645 = vcmp.ne.s32.totalorder %v1613, 15
      %vm1646 = vcmp.ne.s32.totalorder %v1614, 15
      %vm1647 = vcmp.ne.s32.totalorder %v1615, 15
      %vm1648 = vcmp.ne.s32.totalorder %v1616, 15
      %vm1649 = vcmp.ne.s32.totalorder %v1617, 15
      %vm1650 = vcmp.ne.s32.totalorder %v1618, 15
      %vm1651 = vcmp.ne.s32.totalorder %v1619, 15
      %vm1652 = vcmp.ne.s32.totalorder %v1620, 15
      %vm1653 = vcmp.ne.s32.totalorder %v1621, 15
      %vm1654 = vcmp.ne.s32.totalorder %v1622, 15
      %vm1655 = vcmp.ne.s32.totalorder %v1623, 15
      %vm1656 = vcmp.ne.s32.totalorder %v1624, 15
      %vm1657 = vcmp.ne.s32.totalorder %v1625, 15
      %vm1658 = vcmp.ne.s32.totalorder %v1626, 15
      %vm1659 = vcmp.ne.s32.totalorder %v1627, 15
      %vm1660 = vcmp.ne.s32.totalorder %v1628, 15
      %vm1661 = vcmp.ne.s32.totalorder %v1629, 15
      %vm1662 = vcmp.ne.s32.totalorder %v1630, 15
      %vm1663 = vcmp.ne.s32.totalorder %v1631, 15
      %vm1664 = vcmp.ne.s32.totalorder %v1632, 15
      %vm1665 = vcmp.ne.s32.totalorder %v1633, 15
      %vm1666 = vcmp.ne.s32.totalorder %v1634, 15
      %vm1667 = vcmp.ne.s32.totalorder %v1635, 15
      %vm1668 = vcmp.ne.s32.totalorder %v1636, 15
      %vm1669 = vcmp.ne.s32.totalorder %v1637, 15
      %vm1670 = vcmp.ne.s32.totalorder %v1638, 15
      %vm1671 = vcmp.ne.s32.totalorder %v1639, 15
      %vm1672 = vcmp.ne.s32.totalorder %v1640, 15
      %vm1673 = vcmp.ne.s32.totalorder %v1641, 15
      %vm1674 = vcmp.ne.s32.totalorder %v1642, 15
      %v1675 = vsel %vm1643, 1, 0
      %v1676 = vsel %vm1644, 1, 0
      %v1677 = vsel %vm1645, 1, 0
      %v1678 = vsel %vm1646, 1, 0
      %v1679 = vsel %vm1647, 1, 0
      %v1680 = vsel %vm1648, 1, 0
      %v1681 = vsel %vm1649, 1, 0
      %v1682 = vsel %vm1650, 1, 0
      %v1683 = vsel %vm1651, 1, 0
      %v1684 = vsel %vm1652, 1, 0
      %v1685 = vsel %vm1653, 1, 0
      %v1686 = vsel %vm1654, 1, 0
      %v1687 = vsel %vm1655, 1, 0
      %v1688 = vsel %vm1656, 1, 0
      %v1689 = vsel %vm1657, 1, 0
      %v1690 = vsel %vm1658, 1, 0
      %v1691 = vsel %vm1659, 1, 0
      %v1692 = vsel %vm1660, 1, 0
      %v1693 = vsel %vm1661, 1, 0
      %v1694 = vsel %vm1662, 1, 0
      %v1695 = vsel %vm1663, 1, 0
      %v1696 = vsel %vm1664, 1, 0
      %v1697 = vsel %vm1665, 1, 0
      %v1698 = vsel %vm1666, 1, 0
      %v1699 = vsel %vm1667, 1, 0
      %v1700 = vsel %vm1668, 1, 0
      %v1701 = vsel %vm1669, 1, 0
      %v1702 = vsel %vm1670, 1, 0
      %v1703 = vsel %vm1671, 1, 0
      %v1704 = vsel %vm1672, 1, 0
      %v1705 = vsel %vm1673, 1, 0
      %v1706 = vsel %vm1674, 1, 0
      %vm1707 = vcmp.eq.s32.totalorder %v1675, 1
      %vm1708 = vcmp.eq.s32.totalorder %v1676, 1
      %vm1709 = vcmp.eq.s32.totalorder %v1677, 1
      %vm1710 = vcmp.eq.s32.totalorder %v1678, 1
      %vm1711 = vcmp.eq.s32.totalorder %v1679, 1
      %vm1712 = vcmp.eq.s32.totalorder %v1680, 1
      %vm1713 = vcmp.eq.s32.totalorder %v1681, 1
      %vm1714 = vcmp.eq.s32.totalorder %v1682, 1
      %vm1715 = vcmp.eq.s32.totalorder %v1683, 1
      %vm1716 = vcmp.eq.s32.totalorder %v1684, 1
      %vm1717 = vcmp.eq.s32.totalorder %v1685, 1
      %vm1718 = vcmp.eq.s32.totalorder %v1686, 1
      %vm1719 = vcmp.eq.s32.totalorder %v1687, 1
      %vm1720 = vcmp.eq.s32.totalorder %v1688, 1
      %vm1721 = vcmp.eq.s32.totalorder %v1689, 1
      %vm1722 = vcmp.eq.s32.totalorder %v1690, 1
      %vm1723 = vcmp.eq.s32.totalorder %v1691, 1
      %vm1724 = vcmp.eq.s32.totalorder %v1692, 1
      %vm1725 = vcmp.eq.s32.totalorder %v1693, 1
      %vm1726 = vcmp.eq.s32.totalorder %v1694, 1
      %vm1727 = vcmp.eq.s32.totalorder %v1695, 1
      %vm1728 = vcmp.eq.s32.totalorder %v1696, 1
      %vm1729 = vcmp.eq.s32.totalorder %v1697, 1
      %vm1730 = vcmp.eq.s32.totalorder %v1698, 1
      %vm1731 = vcmp.eq.s32.totalorder %v1699, 1
      %vm1732 = vcmp.eq.s32.totalorder %v1700, 1
      %vm1733 = vcmp.eq.s32.totalorder %v1701, 1
      %vm1734 = vcmp.eq.s32.totalorder %v1702, 1
      %vm1735 = vcmp.eq.s32.totalorder %v1703, 1
      %vm1736 = vcmp.eq.s32.totalorder %v1704, 1
      %vm1737 = vcmp.eq.s32.totalorder %v1705, 1
      %vm1738 = vcmp.eq.s32.totalorder %v1706, 1
      %v1739 = vsel %vm1707, %v1186, 0.0
      %v1740 = vsel %vm1708, %v1187, 0.0
      %v1741 = vsel %vm1709, %v1188, 0.0
      %v1742 = vsel %vm1710, %v1189, 0.0
      %v1743 = vsel %vm1711, %v1190, 0.0
      %v1744 = vsel %vm1712, %v1191, 0.0
      %v1745 = vsel %vm1713, %v1192, 0.0
      %v1746 = vsel %vm1714, %v1193, 0.0
      %v1747 = vsel %vm1715, %v1194, 0.0
      %v1748 = vsel %vm1716, %v1195, 0.0
      %v1749 = vsel %vm1717, %v1196, 0.0
      %v1750 = vsel %vm1718, %v1197, 0.0
      %v1751 = vsel %vm1719, %v1198, 0.0
      %v1752 = vsel %vm1720, %v1199, 0.0
      %v1753 = vsel %vm1721, %v1200, 0.0
      %v1754 = vsel %vm1722, %v1201, 0.0
      %v1755 = vsel %vm1723, %v1202, 0.0
      %v1756 = vsel %vm1724, %v1203, 0.0
      %v1757 = vsel %vm1725, %v1204, 0.0
      %v1758 = vsel %vm1726, %v1205, 0.0
      %v1759 = vsel %vm1727, %v1206, 0.0
      %v1760 = vsel %vm1728, %v1207, 0.0
      %v1761 = vsel %vm1729, %v1208, 0.0
      %v1762 = vsel %vm1730, %v1209, 0.0
      %v1763 = vsel %vm1731, %v1210, 0.0
      %v1764 = vsel %vm1732, %v1211, 0.0
      %v1765 = vsel %vm1733, %v1212, 0.0
      %v1766 = vsel %vm1734, %v1213, 0.0
      %v1767 = vsel %vm1735, %v1214, 0.0
      %v1768 = vsel %vm1736, %v1215, 0.0
      %v1769 = vsel %vm1737, %v1216, 0.0
      %v1770 = vsel %vm1738, %v1217, 0.0
      %1771 = vst.msk [vmem:[#allocation2 + $0x11] sm:$0xff] %vm439, %v1739
      %1772 = vst.msk [vmem:[#allocation2 + $0x19] sm:$0xff] %vm439, %v1740
      %1773 = vst.msk [vmem:[#allocation2 + $0x21] sm:$0xff] %vm439, %v1741
      %1774 = vst.msk [vmem:[#allocation2 + $0x29] sm:$0xff] %vm439, %v1742
      %1775 = vst.msk [vmem:[#allocation2 + $0x31] sm:$0xff] %vm439, %v1743
      %1776 = vst.msk [vmem:[#allocation2 + $0x39] sm:$0xff] %vm439, %v1744
      %1777 = vst.msk [vmem:[#allocation2 + $0x41] sm:$0xff] %vm439, %v1745
      %1778 = vst.msk [vmem:[#allocation2 + $0x49] sm:$0xff] %vm439, %v1746
      %1779 = vst.msk [vmem:[#allocation2 + $0x51] sm:$0xff] %vm439, %v1747
      %1780 = vst.msk [vmem:[#allocation2 + $0x59] sm:$0xff] %vm439, %v1748
      %1781 = vst.msk [vmem:[#allocation2 + $0x61] sm:$0xff] %vm439, %v1749
      %1782 = vst.msk [vmem:[#allocation2 + $0x69] sm:$0xff] %vm439, %v1750
      %1783 = vst.msk [vmem:[#allocation2 + $0x71] sm:$0xff] %vm439, %v1751
      %1784 = vst.msk [vmem:[#allocation2 + $0x79] sm:$0xff] %vm439, %v1752
      %1785 = vst.msk [vmem:[#allocation2 + $0x81] sm:$0xff] %vm439, %v1753
      %1786 = vst.msk [vmem:[#allocation2 + $0x89] sm:$0xff] %vm439, %v1754
      %1787 = vst.msk [vmem:[#allocation2 + $0x91] sm:$0xff] %vm439, %v1755
      %1788 = vst.msk [vmem:[#allocation2 + $0x99] sm:$0xff] %vm439, %v1756
      %1789 = vst.msk [vmem:[#allocation2 + $0xa1] sm:$0xff] %vm439, %v1757
      %1790 = vst.msk [vmem:[#allocation2 + $0xa9] sm:$0xff] %vm439, %v1758
      %1791 = vst.msk [vmem:[#allocation2 + $0xb1] sm:$0xff] %vm439, %v1759
      %1792 = vst.msk [vmem:[#allocation2 + $0xb9] sm:$0xff] %vm439, %v1760
      %1793 = vst.msk [vmem:[#allocation2 + $0xc1] sm:$0xff] %vm439, %v1761
      %1794 = vst.msk [vmem:[#allocation2 + $0xc9] sm:$0xff] %vm439, %v1762
      %1795 = vst.msk [vmem:[#allocation2 + $0xd1] sm:$0xff] %vm439, %v1763
      %1796 = vst.msk [vmem:[#allocation2 + $0xd9] sm:$0xff] %vm439, %v1764
      %1797 = vst.msk [vmem:[#allocation2 + $0xe1] sm:$0xff] %vm439, %v1765
      %1798 = vst.msk [vmem:[#allocation2 + $0xe9] sm:$0xff] %vm439, %v1766
      %1799 = vst.msk [vmem:[#allocation2 + $0xf1] sm:$0xff] %vm439, %v1767
      %1800 = vst.msk [vmem:[#allocation2 + $0xf9] sm:$0xff] %vm439, %v1768
      %1801 = vst.msk [vmem:[#allocation2 + $0x101] sm:$0xff] %vm439, %v1769
      %1802 = vst.msk [vmem:[#allocation2 + $0x109] sm:$0xff] %vm439, %v1770
      %1835 = vrot.lane.b32.xlu0 %v1186, 32
      %v1836 = vpop.permute.xlu0 %1835
      %1837 = vrot.lane.b32.xlu0 %v1187, 32
      %v1838 = vpop.permute.xlu0 %1837
      %1839 = vrot.lane.b32.xlu0 %v1188, 32
      %v1840 = vpop.permute.xlu0 %1839
      %1841 = vrot.lane.b32.xlu0 %v1189, 32
      %v1842 = vpop.permute.xlu0 %1841
      %1843 = vrot.lane.b32.xlu0 %v1190, 32
      %v1844 = vpop.permute.xlu0 %1843
      %1845 = vrot.lane.b32.xlu0 %v1191, 32
      %v1846 = vpop.permute.xlu0 %1845
      %1847 = vrot.lane.b32.xlu0 %v1192, 32
      %v1848 = vpop.permute.xlu0 %1847
      %1849 = vrot.lane.b32.xlu0 %v1193, 32
      %v1850 = vpop.permute.xlu0 %1849
      %1851 = vrot.lane.b32.xlu0 %v1194, 32
      %v1852 = vpop.permute.xlu0 %1851
      %1853 = vrot.lane.b32.xlu0 %v1195, 32
      %v1854 = vpop.permute.xlu0 %1853
      %1855 = vrot.lane.b32.xlu0 %v1196, 32
      %v1856 = vpop.permute.xlu0 %1855
      %1857 = vrot.lane.b32.xlu0 %v1197, 32
      %v1858 = vpop.permute.xlu0 %1857
      %1859 = vrot.lane.b32.xlu0 %v1198, 32
      %v1860 = vpop.permute.xlu0 %1859
      %1861 = vrot.lane.b32.xlu0 %v1199, 32
      %v1862 = vpop.permute.xlu0 %1861
      %1863 = vrot.lane.b32.xlu0 %v1200, 32
      %v1864 = vpop.permute.xlu0 %1863
      %1865 = vrot.lane.b32.xlu0 %v1201, 32
      %v1866 = vpop.permute.xlu0 %1865
      %1867 = vrot.lane.b32.xlu0 %v1202, 32
      %v1868 = vpop.permute.xlu0 %1867
      %1869 = vrot.lane.b32.xlu0 %v1203, 32
      %v1870 = vpop.permute.xlu0 %1869
      %1871 = vrot.lane.b32.xlu0 %v1204, 32
      %v1872 = vpop.permute.xlu0 %1871
      %1873 = vrot.lane.b32.xlu0 %v1205, 32
      %v1874 = vpop.permute.xlu0 %1873
      %1875 = vrot.lane.b32.xlu0 %v1206, 32
      %v1876 = vpop.permute.xlu0 %1875
      %1877 = vrot.lane.b32.xlu0 %v1207, 32
      %v1878 = vpop.permute.xlu0 %1877
      %1879 = vrot.lane.b32.xlu0 %v1208, 32
      %v1880 = vpop.permute.xlu0 %1879
      %1881 = vrot.lane.b32.xlu0 %v1209, 32
      %v1882 = vpop.permute.xlu0 %1881
      %1883 = vrot.lane.b32.xlu0 %v1210, 32
      %v1884 = vpop.permute.xlu0 %1883
      %1885 = vrot.lane.b32.xlu0 %v1211, 32
      %v1886 = vpop.permute.xlu0 %1885
      %1887 = vrot.lane.b32.xlu0 %v1212, 32
      %v1888 = vpop.permute.xlu0 %1887
      %1889 = vrot.lane.b32.xlu0 %v1213, 32
      %v1890 = vpop.permute.xlu0 %1889
      %1891 = vrot.lane.b32.xlu0 %v1214, 32
      %v1892 = vpop.permute.xlu0 %1891
      %1893 = vrot.lane.b32.xlu0 %v1215, 32
      %v1894 = vpop.permute.xlu0 %1893
      %1895 = vrot.lane.b32.xlu0 %v1216, 32
      %v1896 = vpop.permute.xlu0 %1895
      %1897 = vrot.lane.b32.xlu0 %v1217, 32
      %v1898 = vpop.permute.xlu0 %1897
      %vm1931 = vcmask 523520
      %1932 = vst.msk [vmem:[#allocation2 + $0x10] sm:$0xff] %vm1931, %v1836
      %1933 = vst.msk [vmem:[#allocation2 + $0x18] sm:$0xff] %vm1931, %v1838
      %1934 = vst.msk [vmem:[#allocation2 + $0x20] sm:$0xff] %vm1931, %v1840
      %1935 = vst.msk [vmem:[#allocation2 + $0x28] sm:$0xff] %vm1931, %v1842
      %1936 = vst.msk [vmem:[#allocation2 + $0x30] sm:$0xff] %vm1931, %v1844
      %1937 = vst.msk [vmem:[#allocation2 + $0x38] sm:$0xff] %vm1931, %v1846
      %1938 = vst.msk [vmem:[#allocation2 + $0x40] sm:$0xff] %vm1931, %v1848
      %1939 = vst.msk [vmem:[#allocation2 + $0x48] sm:$0xff] %vm1931, %v1850
      %1940 = vst.msk [vmem:[#allocation2 + $0x50] sm:$0xff] %vm1931, %v1852
      %1941 = vst.msk [vmem:[#allocation2 + $0x58] sm:$0xff] %vm1931, %v1854
      %1942 = vst.msk [vmem:[#allocation2 + $0x60] sm:$0xff] %vm1931, %v1856
      %1943 = vst.msk [vmem:[#allocation2 + $0x68] sm:$0xff] %vm1931, %v1858
      %1944 = vst.msk [vmem:[#allocation2 + $0x70] sm:$0xff] %vm1931, %v1860
      %1945 = vst.msk [vmem:[#allocation2 + $0x78] sm:$0xff] %vm1931, %v1862
      %1946 = vst.msk [vmem:[#allocation2 + $0x80] sm:$0xff] %vm1931, %v1864
      %1947 = vst.msk [vmem:[#allocation2 + $0x88] sm:$0xff] %vm1931, %v1866
      %1948 = vst.msk [vmem:[#allocation2 + $0x90] sm:$0xff] %vm1931, %v1868
      %1949 = vst.msk [vmem:[#allocation2 + $0x98] sm:$0xff] %vm1931, %v1870
      %1950 = vst.msk [vmem:[#allocation2 + $0xa0] sm:$0xff] %vm1931, %v1872
      %1951 = vst.msk [vmem:[#allocation2 + $0xa8] sm:$0xff] %vm1931, %v1874
      %1952 = vst.msk [vmem:[#allocation2 + $0xb0] sm:$0xff] %vm1931, %v1876
      %1953 = vst.msk [vmem:[#allocation2 + $0xb8] sm:$0xff] %vm1931, %v1878
      %1954 = vst.msk [vmem:[#allocation2 + $0xc0] sm:$0xff] %vm1931, %v1880
      %1955 = vst.msk [vmem:[#allocation2 + $0xc8] sm:$0xff] %vm1931, %v1882
      %1956 = vst.msk [vmem:[#allocation2 + $0xd0] sm:$0xff] %vm1931, %v1884
      %1957 = vst.msk [vmem:[#allocation2 + $0xd8] sm:$0xff] %vm1931, %v1886
      %1958 = vst.msk [vmem:[#allocation2 + $0xe0] sm:$0xff] %vm1931, %v1888
      %1959 = vst.msk [vmem:[#allocation2 + $0xe8] sm:$0xff] %vm1931, %v1890
      %1960 = vst.msk [vmem:[#allocation2 + $0xf0] sm:$0xff] %vm1931, %v1892
      %1961 = vst.msk [vmem:[#allocation2 + $0xf8] sm:$0xff] %vm1931, %v1894
      %1962 = vst.msk [vmem:[#allocation2 + $0x100] sm:$0xff] %vm1931, %v1896
      %1963 = vst.msk [vmem:[#allocation2 + $0x108] sm:$0xff] %vm1931, %v1898
      %vm1964 = vcmp.ne.s32.totalorder %v1611, 0
      %vm1965 = vcmp.ne.s32.totalorder %v1612, 0
      %vm1966 = vcmp.ne.s32.totalorder %v1613, 0
      %vm1967 = vcmp.ne.s32.totalorder %v1614, 0
      %vm1968 = vcmp.ne.s32.totalorder %v1615, 0
      %vm1969 = vcmp.ne.s32.totalorder %v1616, 0
      %vm1970 = vcmp.ne.s32.totalorder %v1617, 0
      %vm1971 = vcmp.ne.s32.totalorder %v1618, 0
      %vm1972 = vcmp.ne.s32.totalorder %v1619, 0
      %vm1973 = vcmp.ne.s32.totalorder %v1620, 0
      %vm1974 = vcmp.ne.s32.totalorder %v1621, 0
      %vm1975 = vcmp.ne.s32.totalorder %v1622, 0
      %vm1976 = vcmp.ne.s32.totalorder %v1623, 0
      %vm1977 = vcmp.ne.s32.totalorder %v1624, 0
      %vm1978 = vcmp.ne.s32.totalorder %v1625, 0
      %vm1979 = vcmp.ne.s32.totalorder %v1626, 0
      %vm1980 = vcmp.ne.s32.totalorder %v1627, 0
      %vm1981 = vcmp.ne.s32.totalorder %v1628, 0
      %vm1982 = vcmp.ne.s32.totalorder %v1629, 0
      %vm1983 = vcmp.ne.s32.totalorder %v1630, 0
      %vm1984 = vcmp.ne.s32.totalorder %v1631, 0
      %vm1985 = vcmp.ne.s32.totalorder %v1632, 0
      %vm1986 = vcmp.ne.s32.totalorder %v1633, 0
      %vm1987 = vcmp.ne.s32.totalorder %v1634, 0
      %vm1988 = vcmp.ne.s32.totalorder %v1635, 0
      %vm1989 = vcmp.ne.s32.totalorder %v1636, 0
      %vm1990 = vcmp.ne.s32.totalorder %v1637, 0
      %vm1991 = vcmp.ne.s32.totalorder %v1638, 0
      %vm1992 = vcmp.ne.s32.totalorder %v1639, 0
      %vm1993 = vcmp.ne.s32.totalorder %v1640, 0
      %vm1994 = vcmp.ne.s32.totalorder %v1641, 0
      %vm1995 = vcmp.ne.s32.totalorder %v1642, 0
      %v1996 = vsel %vm1964, 1, 0
      %v1997 = vsel %vm1965, 1, 0
      %v1998 = vsel %vm1966, 1, 0
      %v1999 = vsel %vm1967, 1, 0
      %v2000 = vsel %vm1968, 1, 0
      %v2001 = vsel %vm1969, 1, 0
      %v2002 = vsel %vm1970, 1, 0
      %v2003 = vsel %vm1971, 1, 0
      %v2004 = vsel %vm1972, 1, 0
      %v2005 = vsel %vm1973, 1, 0
      %v2006 = vsel %vm1974, 1, 0
      %v2007 = vsel %vm1975, 1, 0
      %v2008 = vsel %vm1976, 1, 0
      %v2009 = vsel %vm1977, 1, 0
      %v2010 = vsel %vm1978, 1, 0
      %v2011 = vsel %vm1979, 1, 0
      %v2012 = vsel %vm1980, 1, 0
      %v2013 = vsel %vm1981, 1, 0
      %v2014 = vsel %vm1982, 1, 0
      %v2015 = vsel %vm1983, 1, 0
      %v2016 = vsel %vm1984, 1, 0
      %v2017 = vsel %vm1985, 1, 0
      %v2018 = vsel %vm1986, 1, 0
      %v2019 = vsel %vm1987, 1, 0
      %v2020 = vsel %vm1988, 1, 0
      %v2021 = vsel %vm1989, 1, 0
      %v2022 = vsel %vm1990, 1, 0
      %v2023 = vsel %vm1991, 1, 0
      %v2024 = vsel %vm1992, 1, 0
      %v2025 = vsel %vm1993, 1, 0
      %v2026 = vsel %vm1994, 1, 0
      %v2027 = vsel %vm1995, 1, 0
      %vm2028 = vcmp.eq.s32.totalorder %v1996, 1
      %vm2029 = vcmp.eq.s32.totalorder %v1997, 1
      %vm2030 = vcmp.eq.s32.totalorder %v1998, 1
      %vm2031 = vcmp.eq.s32.totalorder %v1999, 1
      %vm2032 = vcmp.eq.s32.totalorder %v2000, 1
      %vm2033 = vcmp.eq.s32.totalorder %v2001, 1
      %vm2034 = vcmp.eq.s32.totalorder %v2002, 1
      %vm2035 = vcmp.eq.s32.totalorder %v2003, 1
      %vm2036 = vcmp.eq.s32.totalorder %v2004, 1
      %vm2037 = vcmp.eq.s32.totalorder %v2005, 1
      %vm2038 = vcmp.eq.s32.totalorder %v2006, 1
      %vm2039 = vcmp.eq.s32.totalorder %v2007, 1
      %vm2040 = vcmp.eq.s32.totalorder %v2008, 1
      %vm2041 = vcmp.eq.s32.totalorder %v2009, 1
      %vm2042 = vcmp.eq.s32.totalorder %v2010, 1
      %vm2043 = vcmp.eq.s32.totalorder %v2011, 1
      %vm2044 = vcmp.eq.s32.totalorder %v2012, 1
      %vm2045 = vcmp.eq.s32.totalorder %v2013, 1
      %vm2046 = vcmp.eq.s32.totalorder %v2014, 1
      %vm2047 = vcmp.eq.s32.totalorder %v2015, 1
      %vm2048 = vcmp.eq.s32.totalorder %v2016, 1
      %vm2049 = vcmp.eq.s32.totalorder %v2017, 1
      %vm2050 = vcmp.eq.s32.totalorder %v2018, 1
      %vm2051 = vcmp.eq.s32.totalorder %v2019, 1
      %vm2052 = vcmp.eq.s32.totalorder %v2020, 1
      %vm2053 = vcmp.eq.s32.totalorder %v2021, 1
      %vm2054 = vcmp.eq.s32.totalorder %v2022, 1
      %vm2055 = vcmp.eq.s32.totalorder %v2023, 1
      %vm2056 = vcmp.eq.s32.totalorder %v2024, 1
      %vm2057 = vcmp.eq.s32.totalorder %v2025, 1
      %vm2058 = vcmp.eq.s32.totalorder %v2026, 1
      %vm2059 = vcmp.eq.s32.totalorder %v2027, 1
      %v2060 = vsel %vm2028, %v1186, 0.0
      %v2061 = vsel %vm2029, %v1187, 0.0
      %v2062 = vsel %vm2030, %v1188, 0.0
      %v2063 = vsel %vm2031, %v1189, 0.0
      %v2064 = vsel %vm2032, %v1190, 0.0
      %v2065 = vsel %vm2033, %v1191, 0.0
      %v2066 = vsel %vm2034, %v1192, 0.0
      %v2067 = vsel %vm2035, %v1193, 0.0
      %v2068 = vsel %vm2036, %v1194, 0.0
      %v2069 = vsel %vm2037, %v1195, 0.0
      %v2070 = vsel %vm2038, %v1196, 0.0
      %v2071 = vsel %vm2039, %v1197, 0.0
      %v2072 = vsel %vm2040, %v1198, 0.0
      %v2073 = vsel %vm2041, %v1199, 0.0
      %v2074 = vsel %vm2042, %v1200, 0.0
      %v2075 = vsel %vm2043, %v1201, 0.0
      %v2076 = vsel %vm2044, %v1202, 0.0
      %v2077 = vsel %vm2045, %v1203, 0.0
      %v2078 = vsel %vm2046, %v1204, 0.0
      %v2079 = vsel %vm2047, %v1205, 0.0
      %v2080 = vsel %vm2048, %v1206, 0.0
      %v2081 = vsel %vm2049, %v1207, 0.0
      %v2082 = vsel %vm2050, %v1208, 0.0
      %v2083 = vsel %vm2051, %v1209, 0.0
      %v2084 = vsel %vm2052, %v1210, 0.0
      %v2085 = vsel %vm2053, %v1211, 0.0
      %v2086 = vsel %vm2054, %v1212, 0.0
      %v2087 = vsel %vm2055, %v1213, 0.0
      %v2088 = vsel %vm2056, %v1214, 0.0
      %v2089 = vsel %vm2057, %v1215, 0.0
      %v2090 = vsel %vm2058, %v1216, 0.0
      %v2091 = vsel %vm2059, %v1217, 0.0
      %2124 = vrot.lane.b32.xlu0 %v2060, 64
      %v2125 = vpop.permute.xlu0 %2124
      %2126 = vrot.lane.b32.xlu0 %v2061, 64
      %v2127 = vpop.permute.xlu0 %2126
      %2128 = vrot.lane.b32.xlu0 %v2062, 64
      %v2129 = vpop.permute.xlu0 %2128
      %2130 = vrot.lane.b32.xlu0 %v2063, 64
      %v2131 = vpop.permute.xlu0 %2130
      %2132 = vrot.lane.b32.xlu0 %v2064, 64
      %v2133 = vpop.permute.xlu0 %2132
      %2134 = vrot.lane.b32.xlu0 %v2065, 64
      %v2135 = vpop.permute.xlu0 %2134
      %2136 = vrot.lane.b32.xlu0 %v2066, 64
      %v2137 = vpop.permute.xlu0 %2136
      %2138 = vrot.lane.b32.xlu0 %v2067, 64
      %v2139 = vpop.permute.xlu0 %2138
      %2140 = vrot.lane.b32.xlu0 %v2068, 64
      %v2141 = vpop.permute.xlu0 %2140
      %2142 = vrot.lane.b32.xlu0 %v2069, 64
      %v2143 = vpop.permute.xlu0 %2142
      %2144 = vrot.lane.b32.xlu0 %v2070, 64
      %v2145 = vpop.permute.xlu0 %2144
      %2146 = vrot.lane.b32.xlu0 %v2071, 64
      %v2147 = vpop.permute.xlu0 %2146
      %2148 = vrot.lane.b32.xlu0 %v2072, 64
      %v2149 = vpop.permute.xlu0 %2148
      %2150 = vrot.lane.b32.xlu0 %v2073, 64
      %v2151 = vpop.permute.xlu0 %2150
      %2152 = vrot.lane.b32.xlu0 %v2074, 64
      %v2153 = vpop.permute.xlu0 %2152
      %2154 = vrot.lane.b32.xlu0 %v2075, 64
      %v2155 = vpop.permute.xlu0 %2154
      %2156 = vrot.lane.b32.xlu0 %v2076, 64
      %v2157 = vpop.permute.xlu0 %2156
      %2158 = vrot.lane.b32.xlu0 %v2077, 64
      %v2159 = vpop.permute.xlu0 %2158
      %2160 = vrot.lane.b32.xlu0 %v2078, 64
      %v2161 = vpop.permute.xlu0 %2160
      %2162 = vrot.lane.b32.xlu0 %v2079, 64
      %v2163 = vpop.permute.xlu0 %2162
      %2164 = vrot.lane.b32.xlu0 %v2080, 64
      %v2165 = vpop.permute.xlu0 %2164
      %2166 = vrot.lane.b32.xlu0 %v2081, 64
      %v2167 = vpop.permute.xlu0 %2166
      %2168 = vrot.lane.b32.xlu0 %v2082, 64
      %v2169 = vpop.permute.xlu0 %2168
      %2170 = vrot.lane.b32.xlu0 %v2083, 64
      %v2171 = vpop.permute.xlu0 %2170
      %2172 = vrot.lane.b32.xlu0 %v2084, 64
      %v2173 = vpop.permute.xlu0 %2172
      %2174 = vrot.lane.b32.xlu0 %v2085, 64
      %v2175 = vpop.permute.xlu0 %2174
      %2176 = vrot.lane.b32.xlu0 %v2086, 64
      %v2177 = vpop.permute.xlu0 %2176
      %2178 = vrot.lane.b32.xlu0 %v2087, 64
      %v2179 = vpop.permute.xlu0 %2178
      %2180 = vrot.lane.b32.xlu0 %v2088, 64
      %v2181 = vpop.permute.xlu0 %2180
      %2182 = vrot.lane.b32.xlu0 %v2089, 64
      %v2183 = vpop.permute.xlu0 %2182
      %2184 = vrot.lane.b32.xlu0 %v2090, 64
      %v2185 = vpop.permute.xlu0 %2184
      %2186 = vrot.lane.b32.xlu0 %v2091, 64
      %v2187 = vpop.permute.xlu0 %2186
      %vm2220 = vcmask 785920
      %2221 = vst.msk [vmem:[#allocation2 + $0xf] sm:$0xff] %vm2220, %v2125
      %2222 = vst.msk [vmem:[#allocation2 + $0x17] sm:$0xff] %vm2220, %v2127
      %2223 = vst.msk [vmem:[#allocation2 + $0x1f] sm:$0xff] %vm2220, %v2129
      %2224 = vst.msk [vmem:[#allocation2 + $0x27] sm:$0xff] %vm2220, %v2131
      %2225 = vst.msk [vmem:[#allocation2 + $0x2f] sm:$0xff] %vm2220, %v2133
      %2226 = vst.msk [vmem:[#allocation2 + $0x37] sm:$0xff] %vm2220, %v2135
      %2227 = vst.msk [vmem:[#allocation2 + $0x3f] sm:$0xff] %vm2220, %v2137
      %2228 = vst.msk [vmem:[#allocation2 + $0x47] sm:$0xff] %vm2220, %v2139
      %2229 = vst.msk [vmem:[#allocation2 + $0x4f] sm:$0xff] %vm2220, %v2141
      %2230 = vst.msk [vmem:[#allocation2 + $0x57] sm:$0xff] %vm2220, %v2143
      %2231 = vst.msk [vmem:[#allocation2 + $0x5f] sm:$0xff] %vm2220, %v2145
      %2232 = vst.msk [vmem:[#allocation2 + $0x67] sm:$0xff] %vm2220, %v2147
      %2233 = vst.msk [vmem:[#allocation2 + $0x6f] sm:$0xff] %vm2220, %v2149
      %2234 = vst.msk [vmem:[#allocation2 + $0x77] sm:$0xff] %vm2220, %v2151
      %2235 = vst.msk [vmem:[#allocation2 + $0x7f] sm:$0xff] %vm2220, %v2153
      %2236 = vst.msk [vmem:[#allocation2 + $0x87] sm:$0xff] %vm2220, %v2155
      %2237 = vst.msk [vmem:[#allocation2 + $0x8f] sm:$0xff] %vm2220, %v2157
      %2238 = vst.msk [vmem:[#allocation2 + $0x97] sm:$0xff] %vm2220, %v2159
      %2239 = vst.msk [vmem:[#allocation2 + $0x9f] sm:$0xff] %vm2220, %v2161
      %2240 = vst.msk [vmem:[#allocation2 + $0xa7] sm:$0xff] %vm2220, %v2163
      %2241 = vst.msk [vmem:[#allocation2 + $0xaf] sm:$0xff] %vm2220, %v2165
      %2242 = vst.msk [vmem:[#allocation2 + $0xb7] sm:$0xff] %vm2220, %v2167
      %2243 = vst.msk [vmem:[#allocation2 + $0xbf] sm:$0xff] %vm2220, %v2169
      %2244 = vst.msk [vmem:[#allocation2 + $0xc7] sm:$0xff] %vm2220, %v2171
      %2245 = vst.msk [vmem:[#allocation2 + $0xcf] sm:$0xff] %vm2220, %v2173
      %2246 = vst.msk [vmem:[#allocation2 + $0xd7] sm:$0xff] %vm2220, %v2175
      %2247 = vst.msk [vmem:[#allocation2 + $0xdf] sm:$0xff] %vm2220, %v2177
      %2248 = vst.msk [vmem:[#allocation2 + $0xe7] sm:$0xff] %vm2220, %v2179
      %2249 = vst.msk [vmem:[#allocation2 + $0xef] sm:$0xff] %vm2220, %v2181
      %2250 = vst.msk [vmem:[#allocation2 + $0xf7] sm:$0xff] %vm2220, %v2183
      %2251 = vst.msk [vmem:[#allocation2 + $0xff] sm:$0xff] %vm2220, %v2185
      %2252 = vst.msk [vmem:[#allocation2 + $0x107] sm:$0xff] %vm2220, %v2187
      %v2253 = vld [vmem:[#allocation2] sm:$0xff]
      %v2254 = vld [vmem:[#allocation2 + $0x8] sm:$0xff]
      %v2255 = vld [vmem:[#allocation2 + $0x10] sm:$0xff]
      %v2256 = vld [vmem:[#allocation2 + $0x18] sm:$0xff]
      %v2257 = vld [vmem:[#allocation2 + $0x20] sm:$0xff]
      %v2258 = vld [vmem:[#allocation2 + $0x28] sm:$0xff]
      %v2259 = vld [vmem:[#allocation2 + $0x30] sm:$0xff]
      %v2260 = vld [vmem:[#allocation2 + $0x38] sm:$0xff]
      %v2261 = vld [vmem:[#allocation2 + $0x40] sm:$0xff]
      %v2262 = vld [vmem:[#allocation2 + $0x48] sm:$0xff]
      %v2263 = vld [vmem:[#allocation2 + $0x50] sm:$0xff]
      %v2264 = vld [vmem:[#allocation2 + $0x58] sm:$0xff]
      %v2265 = vld [vmem:[#allocation2 + $0x60] sm:$0xff]
      %v2266 = vld [vmem:[#allocation2 + $0x68] sm:$0xff]
      %v2267 = vld [vmem:[#allocation2 + $0x70] sm:$0xff]
      %v2268 = vld [vmem:[#allocation2 + $0x78] sm:$0xff]
      %v2269 = vld [vmem:[#allocation2 + $0x80] sm:$0xff]
      %v2270 = vld [vmem:[#allocation2 + $0x88] sm:$0xff]
      %v2271 = vld [vmem:[#allocation2 + $0x90] sm:$0xff]
      %v2272 = vld [vmem:[#allocation2 + $0x98] sm:$0xff]
      %v2273 = vld [vmem:[#allocation2 + $0xa0] sm:$0xff]
      %v2274 = vld [vmem:[#allocation2 + $0xa8] sm:$0xff]
      %v2275 = vld [vmem:[#allocation2 + $0xb0] sm:$0xff]
      %v2276 = vld [vmem:[#allocation2 + $0xb8] sm:$0xff]
      %v2277 = vld [vmem:[#allocation2 + $0xc0] sm:$0xff]
      %v2278 = vld [vmem:[#allocation2 + $0xc8] sm:$0xff]
      %v2279 = vld [vmem:[#allocation2 + $0xd0] sm:$0xff]
      %v2280 = vld [vmem:[#allocation2 + $0xd8] sm:$0xff]
      %v2281 = vld [vmem:[#allocation2 + $0xe0] sm:$0xff]
      %v2282 = vld [vmem:[#allocation2 + $0xe8] sm:$0xff]
      %v2283 = vld [vmem:[#allocation2 + $0xf0] sm:$0xff]
      %v2284 = vld [vmem:[#allocation2 + $0xf8] sm:$0xff]
      %v2285 = vpack.c.bf16 %v2254, %v2253
      %v2286 = vpack.c.bf16 %v2256, %v2255
      %v2287 = vpack.c.bf16 %v2258, %v2257
      %v2288 = vpack.c.bf16 %v2260, %v2259
      %v2289 = vpack.c.bf16 %v2262, %v2261
      %v2290 = vpack.c.bf16 %v2264, %v2263
      %v2291 = vpack.c.bf16 %v2266, %v2265
      %v2292 = vpack.c.bf16 %v2268, %v2267
      %v2293 = vpack.c.bf16 %v2270, %v2269
      %v2294 = vpack.c.bf16 %v2272, %v2271
      %v2295 = vpack.c.bf16 %v2274, %v2273
      %v2296 = vpack.c.bf16 %v2276, %v2275
      %v2297 = vpack.c.bf16 %v2278, %v2277
      %v2298 = vpack.c.bf16 %v2280, %v2279
      %v2299 = vpack.c.bf16 %v2282, %v2281
      %v2300 = vpack.c.bf16 %v2284, %v2283
      %v2301 = vld [vmem:[%s5] sm:$0xf]
      %v2302 = vld [vmem:[%s5 + $0x4] sm:$0xf]
      %v2303 = vld [vmem:[%s5 + $0x8] sm:$0xf]
      %v2304 = vld [vmem:[%s5 + $0xc] sm:$0xf]
      %v2305 = vld [vmem:[%s5 + $0x10] sm:$0xf]
      %v2306 = vld [vmem:[%s5 + $0x14] sm:$0xf]
      %v2307 = vld [vmem:[%s5 + $0x18] sm:$0xf]
      %v2308 = vld [vmem:[%s5 + $0x1c] sm:$0xf]
      %v2309 = vld [vmem:[%s5 + $0x20] sm:$0xf]
      %v2310 = vld [vmem:[%s5 + $0x24] sm:$0xf]
      %v2311 = vld [vmem:[%s5 + $0x28] sm:$0xf]
      %v2312 = vld [vmem:[%s5 + $0x2c] sm:$0xf]
      %v2313 = vld [vmem:[#allocation2 + $0x100] sm:$0xff]
      %v2314 = vld [vmem:[#allocation2 + $0x108] sm:$0xff]
      %v2315 = vpack.c.bf16 %v2314, %v2313
      %v2316 = vld [vmem:[%s5 + $0x30] sm:$0xf]
      %v2317 = vld [vmem:[%s5 + $0x34] sm:$0xf]
      %v2318 = vld [vmem:[%s5 + $0x38] sm:$0xf]
      %v2319 = vld [vmem:[%s5 + $0x3c] sm:$0xf]
      %v2320 = vld [vmem:[%s5 + $0x40] sm:$0xf]
      %v2321 = vld [vmem:[%s5 + $0x44] sm:$0xf]
      %v2322 = vld [vmem:[%s5 + $0x48] sm:$0xf]
      %v2323 = vld [vmem:[%s5 + $0x4c] sm:$0xf]
      %v2324 = vld [vmem:[%s5 + $0x50] sm:$0xf]
      %v2325 = vld [vmem:[%s5 + $0x54] sm:$0xf]
      %v2326 = vld [vmem:[%s5 + $0x58] sm:$0xf]
      %v2327 = vld [vmem:[%s5 + $0x5c] sm:$0xf]
      %v2340 = vunpack.c.l.b16 %v2316
      %v2341 = vunpack.c.l.b16 %v2317
      %v2342 = vunpack.c.l.b16 %v2318
      %v2343 = vunpack.c.l.b16 %v2319
      %v2344 = vunpack.c.l.b16 %v2320
      %v2345 = vunpack.c.l.b16 %v2321
      %v2346 = vunpack.c.l.b16 %v2322
      %v2347 = vunpack.c.l.b16 %v2323
      %v2348 = vunpack.c.l.b16 %v2324
      %v2349 = vunpack.c.l.b16 %v2325
      %v2350 = vunpack.c.l.b16 %v2326
      %v2351 = vunpack.c.l.b16 %v2327
      %v2352 = vpack.c.b16 %v2341, %v2340
      %v2353 = vpack.c.b16 %v2343, %v2342
      %v2354 = vpack.c.b16 %v2345, %v2344
      %v2355 = vpack.c.b16 %v2347, %v2346
      %v2356 = vpack.c.b16 %v2349, %v2348
      %v2357 = vpack.c.b16 %v2351, %v2350
      %v2365 = vsel %vm1218, %v2286, 0
      %v2368 = vsel %vm1218, %v2287, 0
      %v2371 = vsel %vm1218, %v2288, 0
      %v2374 = vsel %vm1218, %v2289, 0
      %v2377 = vsel %vm1218, %v2290, 0
      %v2380 = vsel %vm1218, %v2291, 0
      %v2383 = vsel %vm1218, %v2292, 0
      %v2386 = vsel %vm1218, %v2293, 0
      %v2389 = vsel %vm1218, %v2294, 0
      %v2392 = vsel %vm1218, %v2295, 0
      %v2395 = vsel %vm1218, %v2296, 0
      %v2398 = vsel %vm1218, %v2297, 0
      %v2401 = vsel %vm1218, %v2298, 0
      %v2404 = vsel %vm1218, %v2299, 0
      %v2407 = vsel %vm1218, %v2300, 0
      %v2410 = vsel %vm1218, %v2315, 0
      %2412 = vmatprep.subr.bf16.mxu0 0
      %2413 = vmatpush1.bf16.msra.mxu0 %v2352
      %2414 = vmatprep.subr.bf16.mxu0 0
      %2415 = vmatpush1.bf16.msra.mxu0 %v2353
      %2416 = vmatprep.subr.bf16.mxu0 0
      %2417 = vmatpush1.bf16.msra.mxu0 %v2354
      %2418 = vmatprep.subr.bf16.mxu0 0
      %2419 = vmatpush1.bf16.msra.mxu0 %v2355
      %2420 = vmatprep.subr.bf16.mxu0 0
      %2421 = vmatpush1.bf16.msra.mxu0 %v2356
      %2422 = vmatprep.subr.bf16.mxu0 0
      %2423 = vmatpush1.bf16.msra.mxu0 %v2357
      %2424 = vmatprep.subr.bf16.mxu0 0
      %2425 = vmatpush1.bf16.msra.mxu0 0
      %2426 = vmatprep.subr.bf16.mxu0 0
      %2427 = vmatpush1.bf16.msra.mxu0 0
      %2428 = vmatprep.subr.bf16.mxu0 0
      %2429 = vmatpush1.bf16.msra.mxu0 0
      %2430 = vmatprep.subr.bf16.mxu0 0
      %2431 = vmatpush1.bf16.msra.mxu0 0
      %2432 = vmatprep.subr.bf16.mxu0 0
      %2433 = vmatpush1.bf16.msra.mxu0 0
      %2434 = vmatprep.subr.bf16.mxu0 0
      %2435 = vmatpush1.bf16.msra.mxu0 0
      %2436 = vmatprep.subr.bf16.mxu0 0
      %2437 = vmatpush1.bf16.msra.mxu0 0
      %2438 = vmatprep.subr.bf16.mxu0 0
      %2439 = vmatpush1.bf16.msra.mxu0 0
      %2440 = vmatprep.subr.bf16.mxu0 0
      %2441 = vmatpush1.bf16.msra.mxu0 0
      %2442 = vmatprep.subr.bf16.mxu0 0
      %2443 = vmatpush1.bf16.msra.mxu0 0
      %2444 = vmatprep.mubr.bf16.mxu0 0
      %2445 = vmatmul.mubr.bf16.gmra.mrb[0].mxu0 %v2365
      %v2446 = vpop.f32.mrb[0].mxu0
      %v2447 = vadd.f32 0.0, %v2446
      %v2448 = vpop.f32.mrb[0].mxu0
      %v2449 = vpop.f32.mrb[0].mxu0
      %v2450 = vadd.f32 0.0, %v2449
      %v2451 = vpop.f32.mrb[0].mxu0
      %2452 = vmatprep.mubr.bf16.mxu0 0
      %2453 = vmatmul.mubr.bf16.gmra.mrb[0].mxu0 %v2368
      %v2454 = vpop.f32.mrb[0].mxu0
      %v2455 = vadd.f32 0.0, %v2454
      %v2456 = vpop.f32.mrb[0].mxu0
      %v2457 = vpop.f32.mrb[0].mxu0
      %v2458 = vadd.f32 0.0, %v2457
      %v2459 = vpop.f32.mrb[0].mxu0
      %2460 = vmatprep.mubr.bf16.mxu0 0
      %2461 = vmatmul.mubr.bf16.gmra.mrb[0].mxu0 %v2371
      %v2462 = vpop.f32.mrb[0].mxu0
      %v2463 = vadd.f32 0.0, %v2462
      %v2464 = vpop.f32.mrb[0].mxu0
      %v2465 = vpop.f32.mrb[0].mxu0
      %v2466 = vadd.f32 0.0, %v2465
      %v2467 = vpop.f32.mrb[0].mxu0
      %2468 = vmatprep.mubr.bf16.mxu0 0
      %2469 = vmatmul.mubr.bf16.gmra.mrb[0].mxu0 %v2374
      %v2470 = vpop.f32.mrb[0].mxu0
      %v2471 = vadd.f32 0.0, %v2470
      %v2472 = vpop.f32.mrb[0].mxu0
      %v2473 = vpop.f32.mrb[0].mxu0
      %v2474 = vadd.f32 0.0, %v2473
      %v2475 = vpop.f32.mrb[0].mxu0
      %2476 = vmatprep.mubr.bf16.mxu0 0
      %2477 = vmatmul.mubr.bf16.gmra.mrb[0].mxu0 %v2377
      %v2478 = vpop.f32.mrb[0].mxu0
      %v2479 = vadd.f32 0.0, %v2478
      %v2480 = vpop.f32.mrb[0].mxu0
      %v2481 = vpop.f32.mrb[0].mxu0
      %v2482 = vadd.f32 0.0, %v2481
      %v2483 = vpop.f32.mrb[0].mxu0
      %2484 = vmatprep.mubr.bf16.mxu0 0
      %2485 = vmatmul.mubr.bf16.gmra.mrb[0].mxu0 %v2380
      %v2486 = vpop.f32.mrb[0].mxu0
      %v2487 = vadd.f32 0.0, %v2486
      %v2488 = vpop.f32.mrb[0].mxu0
      %v2489 = vpop.f32.mrb[0].mxu0
      %v2490 = vadd.f32 0.0, %v2489
      %v2491 = vpop.f32.mrb[0].mxu0
      %2492 = vmatprep.mubr.bf16.mxu0 0
      %2493 = vmatmul.mubr.bf16.gmra.mrb[0].mxu0 %v2383
      %v2494 = vpop.f32.mrb[0].mxu0
      %v2495 = vadd.f32 0.0, %v2494
      %v2496 = vpop.f32.mrb[0].mxu0
      %v2497 = vpop.f32.mrb[0].mxu0
      %v2498 = vadd.f32 0.0, %v2497
      %v2499 = vpop.f32.mrb[0].mxu0
      %2500 = vmatprep.mubr.bf16.mxu0 0
      %2501 = vmatmul.mubr.bf16.gmra.mrb[0].mxu0 %v2386
      %v2502 = vpop.f32.mrb[0].mxu0
      %v2503 = vadd.f32 0.0, %v2502
      %v2504 = vpop.f32.mrb[0].mxu0
      %v2505 = vpop.f32.mrb[0].mxu0
      %v2506 = vadd.f32 0.0, %v2505
      %v2507 = vpop.f32.mrb[0].mxu0
      %2508 = vmatprep.mubr.bf16.mxu0 0
      %2509 = vmatmul.mubr.bf16.gmra.mrb[0].mxu0 %v2389
      %v2510 = vpop.f32.mrb[0].mxu0
      %v2511 = vadd.f32 0.0, %v2510
      %v2512 = vpop.f32.mrb[0].mxu0
      %v2513 = vpop.f32.mrb[0].mxu0
      %v2514 = vadd.f32 0.0, %v2513
      %v2515 = vpop.f32.mrb[0].mxu0
      %2516 = vmatprep.mubr.bf16.mxu0 0
      %2517 = vmatmul.mubr.bf16.gmra.mrb[0].mxu0 %v2392
      %v2518 = vpop.f32.mrb[0].mxu0
      %v2519 = vadd.f32 0.0, %v2518
      %v2520 = vpop.f32.mrb[0].mxu0
      %v2521 = vpop.f32.mrb[0].mxu0
      %v2522 = vadd.f32 0.0, %v2521
      %v2523 = vpop.f32.mrb[0].mxu0
      %2524 = vmatprep.mubr.bf16.mxu0 0
      %2525 = vmatmul.mubr.bf16.gmra.mrb[0].mxu0 %v2395
      %v2526 = vpop.f32.mrb[0].mxu0
      %v2527 = vadd.f32 0.0, %v2526
      %v2528 = vpop.f32.mrb[0].mxu0
      %v2529 = vpop.f32.mrb[0].mxu0
      %v2530 = vadd.f32 0.0, %v2529
      %v2531 = vpop.f32.mrb[0].mxu0
      %2532 = vmatprep.mubr.bf16.mxu0 0
      %2533 = vmatmul.mubr.bf16.gmra.mrb[0].mxu0 %v2398
      %v2534 = vpop.f32.mrb[0].mxu0
      %v2535 = vadd.f32 0.0, %v2534
      %v2536 = vpop.f32.mrb[0].mxu0
      %v2537 = vpop.f32.mrb[0].mxu0
      %v2538 = vadd.f32 0.0, %v2537
      %v2539 = vpop.f32.mrb[0].mxu0
      %2540 = vmatprep.mubr.bf16.mxu0 0
      %2541 = vmatmul.mubr.bf16.gmra.mrb[0].mxu0 %v2401
      %v2542 = vpop.f32.mrb[0].mxu0
      %v2543 = vadd.f32 0.0, %v2542
      %v2544 = vpop.f32.mrb[0].mxu0
      %v2545 = vpop.f32.mrb[0].mxu0
      %v2546 = vadd.f32 0.0, %v2545
      %v2547 = vpop.f32.mrb[0].mxu0
      %2548 = vmatprep.mubr.bf16.mxu0 0
      %2549 = vmatmul.mubr.bf16.gmra.mrb[0].mxu0 %v2404
      %v2550 = vpop.f32.mrb[0].mxu0
      %v2551 = vadd.f32 0.0, %v2550
      %v2552 = vpop.f32.mrb[0].mxu0
      %v2553 = vpop.f32.mrb[0].mxu0
      %v2554 = vadd.f32 0.0, %v2553
      %v2555 = vpop.f32.mrb[0].mxu0
      %2556 = vmatprep.mubr.bf16.mxu0 0
      %2557 = vmatmul.mubr.bf16.gmra.mrb[0].mxu0 %v2407
      %v2558 = vpop.f32.mrb[0].mxu0
      %v2559 = vadd.f32 0.0, %v2558
      %v2560 = vpop.f32.mrb[0].mxu0
      %v2561 = vpop.f32.mrb[0].mxu0
      %v2562 = vadd.f32 0.0, %v2561
      %v2563 = vpop.f32.mrb[0].mxu0
      %2564 = vmatprep.mubr.bf16.mxu0 0
      %2565 = vmatmul.mubr.bf16.gmra.mrb[0].mxu0 %v2410
      %v2566 = vpop.f32.mrb[0].mxu0
      %v2567 = vadd.f32 0.0, %v2566
      %v2568 = vpop.f32.mrb[0].mxu0
      %v2569 = vpop.f32.mrb[0].mxu0
      %v2570 = vadd.f32 0.0, %v2569
      %v2571 = vpop.f32.mrb[0].mxu0
      %2572 = vdwg.mxu0
      %v2585 = vunpack.c.l.b16 %v2301
      %v2586 = vunpack.c.l.b16 %v2302
      %v2587 = vunpack.c.l.b16 %v2303
      %v2588 = vunpack.c.l.b16 %v2304
      %v2589 = vunpack.c.l.b16 %v2305
      %v2590 = vunpack.c.l.b16 %v2306
      %v2591 = vunpack.c.l.b16 %v2307
      %v2592 = vunpack.c.l.b16 %v2308
      %v2593 = vunpack.c.l.b16 %v2309
      %v2594 = vunpack.c.l.b16 %v2310
      %v2595 = vunpack.c.l.b16 %v2311
      %v2596 = vunpack.c.l.b16 %v2312
      %v2597 = vpack.c.b16 %v2586, %v2585
      %v2598 = vpack.c.b16 %v2588, %v2587
      %v2599 = vpack.c.b16 %v2590, %v2589
      %v2600 = vpack.c.b16 %v2592, %v2591
      %v2601 = vpack.c.b16 %v2594, %v2593
      %v2602 = vpack.c.b16 %v2596, %v2595
      %v2610 = vsel %vm1218, %v2285, 0
      %2612 = vmatprep.subr.bf16.mxu0 0
      %2613 = vmatpush1.bf16.msra.mxu0 %v2597
      %2614 = vmatprep.subr.bf16.mxu0 0
      %2615 = vmatpush1.bf16.msra.mxu0 %v2598
      %2616 = vmatprep.subr.bf16.mxu0 0
      %2617 = vmatpush1.bf16.msra.mxu0 %v2599
      %2618 = vmatprep.subr.bf16.mxu0 0
      %2619 = vmatpush1.bf16.msra.mxu0 %v2600
      %2620 = vmatprep.subr.bf16.mxu0 0
      %2621 = vmatpush1.bf16.msra.mxu0 %v2601
      %2622 = vmatprep.subr.bf16.mxu0 0
      %2623 = vmatpush1.bf16.msra.mxu0 %v2602
      %2624 = vmatprep.subr.bf16.mxu0 0
      %2625 = vmatpush1.bf16.msra.mxu0 0
      %2626 = vmatprep.subr.bf16.mxu0 0
      %2627 = vmatpush1.bf16.msra.mxu0 0
      %2628 = vmatprep.subr.bf16.mxu0 0
      %2629 = vmatpush1.bf16.msra.mxu0 0
      %2630 = vmatprep.subr.bf16.mxu0 0
      %2631 = vmatpush1.bf16.msra.mxu0 0
      %2632 = vmatprep.subr.bf16.mxu0 0
      %2633 = vmatpush1.bf16.msra.mxu0 0
      %2634 = vmatprep.subr.bf16.mxu0 0
      %2635 = vmatpush1.bf16.msra.mxu0 0
      %2636 = vmatprep.subr.bf16.mxu0 0
      %2637 = vmatpush1.bf16.msra.mxu0 0
      %2638 = vmatprep.subr.bf16.mxu0 0
      %2639 = vmatpush1.bf16.msra.mxu0 0
      %2640 = vmatprep.subr.bf16.mxu0 0
      %2641 = vmatpush1.bf16.msra.mxu0 0
      %2642 = vmatprep.subr.bf16.mxu0 0
      %2643 = vmatpush1.bf16.msra.mxu0 0
      %2644 = vmatprep.mubr.bf16.mxu0 0
      %2645 = vmatmul.mubr.bf16.gmra.mrb[0].mxu0 %v2610
      %v2646 = vpop.f32.mrb[0].mxu0
      %v2647 = vadd.f32 %v2447, %v2646
      %v2648 = vpop.f32.mrb[0].mxu0
      %v2649 = vpop.f32.mrb[0].mxu0
      %v2650 = vadd.f32 %v2450, %v2649
      %v2651 = vpop.f32.mrb[0].mxu0
      %2652 = vmatprep.mubr.bf16.mxu0 0
      %2653 = vmatmul.mubr.bf16.gmra.mrb[0].mxu0 %v2365
      %v2654 = vpop.f32.mrb[0].mxu0
      %v2655 = vadd.f32 %v2455, %v2654
      %v2656 = vpop.f32.mrb[0].mxu0
      %v2657 = vpop.f32.mrb[0].mxu0
      %v2658 = vadd.f32 %v2458, %v2657
      %v2659 = vpop.f32.mrb[0].mxu0
      %2660 = vmatprep.mubr.bf16.mxu0 0
      %2661 = vmatmul.mubr.bf16.gmra.mrb[0].mxu0 %v2368
      %v2662 = vpop.f32.mrb[0].mxu0
      %v2663 = vadd.f32 %v2463, %v2662
      %v2664 = vpop.f32.mrb[0].mxu0
      %v2665 = vpop.f32.mrb[0].mxu0
      %v2666 = vadd.f32 %v2466, %v2665
      %v2667 = vpop.f32.mrb[0].mxu0
      %2668 = vmatprep.mubr.bf16.mxu0 0
      %2669 = vmatmul.mubr.bf16.gmra.mrb[0].mxu0 %v2371
      %v2670 = vpop.f32.mrb[0].mxu0
      %v2671 = vadd.f32 %v2471, %v2670
      %v2672 = vpop.f32.mrb[0].mxu0
      %v2673 = vpop.f32.mrb[0].mxu0
      %v2674 = vadd.f32 %v2474, %v2673
      %v2675 = vpop.f32.mrb[0].mxu0
      %2676 = vmatprep.mubr.bf16.mxu0 0
      %2677 = vmatmul.mubr.bf16.gmra.mrb[0].mxu0 %v2374
      %v2678 = vpop.f32.mrb[0].mxu0
      %v2679 = vadd.f32 %v2479, %v2678
      %v2680 = vpop.f32.mrb[0].mxu0
      %v2681 = vpop.f32.mrb[0].mxu0
      %v2682 = vadd.f32 %v2482, %v2681
      %v2683 = vpop.f32.mrb[0].mxu0
      %2684 = vmatprep.mubr.bf16.mxu0 0
      %2685 = vmatmul.mubr.bf16.gmra.mrb[0].mxu0 %v2377
      %v2686 = vpop.f32.mrb[0].mxu0
      %v2687 = vadd.f32 %v2487, %v2686
      %v2688 = vpop.f32.mrb[0].mxu0
      %v2689 = vpop.f32.mrb[0].mxu0
      %v2690 = vadd.f32 %v2490, %v2689
      %v2691 = vpop.f32.mrb[0].mxu0
      %2692 = vmatprep.mubr.bf16.mxu0 0
      %2693 = vmatmul.mubr.bf16.gmra.mrb[0].mxu0 %v2380
      %v2694 = vpop.f32.mrb[0].mxu0
      %v2695 = vadd.f32 %v2495, %v2694
      %v2696 = vpop.f32.mrb[0].mxu0
      %v2697 = vpop.f32.mrb[0].mxu0
      %v2698 = vadd.f32 %v2498, %v2697
      %v2699 = vpop.f32.mrb[0].mxu0
      %2700 = vmatprep.mubr.bf16.mxu0 0
      %2701 = vmatmul.mubr.bf16.gmra.mrb[0].mxu0 %v2383
      %v2702 = vpop.f32.mrb[0].mxu0
      %v2703 = vadd.f32 %v2503, %v2702
      %v2704 = vpop.f32.mrb[0].mxu0
      %v2705 = vpop.f32.mrb[0].mxu0
      %v2706 = vadd.f32 %v2506, %v2705
      %v2707 = vpop.f32.mrb[0].mxu0
      %2708 = vmatprep.mubr.bf16.mxu0 0
      %2709 = vmatmul.mubr.bf16.gmra.mrb[0].mxu0 %v2386
      %v2710 = vpop.f32.mrb[0].mxu0
      %v2711 = vadd.f32 %v2511, %v2710
      %v2712 = vpop.f32.mrb[0].mxu0
      %v2713 = vpop.f32.mrb[0].mxu0
      %v2714 = vadd.f32 %v2514, %v2713
      %v2715 = vpop.f32.mrb[0].mxu0
      %2716 = vmatprep.mubr.bf16.mxu0 0
      %2717 = vmatmul.mubr.bf16.gmra.mrb[0].mxu0 %v2389
      %v2718 = vpop.f32.mrb[0].mxu0
      %v2719 = vadd.f32 %v2519, %v2718
      %v2720 = vpop.f32.mrb[0].mxu0
      %v2721 = vpop.f32.mrb[0].mxu0
      %v2722 = vadd.f32 %v2522, %v2721
      %v2723 = vpop.f32.mrb[0].mxu0
      %2724 = vmatprep.mubr.bf16.mxu0 0
      %2725 = vmatmul.mubr.bf16.gmra.mrb[0].mxu0 %v2392
      %v2726 = vpop.f32.mrb[0].mxu0
      %v2727 = vadd.f32 %v2527, %v2726
      %v2728 = vpop.f32.mrb[0].mxu0
      %v2729 = vpop.f32.mrb[0].mxu0
      %v2730 = vadd.f32 %v2530, %v2729
      %v2731 = vpop.f32.mrb[0].mxu0
      %2732 = vmatprep.mubr.bf16.mxu0 0
      %2733 = vmatmul.mubr.bf16.gmra.mrb[0].mxu0 %v2395
      %v2734 = vpop.f32.mrb[0].mxu0
      %v2735 = vadd.f32 %v2535, %v2734
      %v2736 = vpop.f32.mrb[0].mxu0
      %v2737 = vpop.f32.mrb[0].mxu0
      %v2738 = vadd.f32 %v2538, %v2737
      %v2739 = vpop.f32.mrb[0].mxu0
      %2740 = vmatprep.mubr.bf16.mxu0 0
      %2741 = vmatmul.mubr.bf16.gmra.mrb[0].mxu0 %v2398
      %v2742 = vpop.f32.mrb[0].mxu0
      %v2743 = vadd.f32 %v2543, %v2742
      %v2744 = vpop.f32.mrb[0].mxu0
      %v2745 = vpop.f32.mrb[0].mxu0
      %v2746 = vadd.f32 %v2546, %v2745
      %v2747 = vpop.f32.mrb[0].mxu0
      %2748 = vmatprep.mubr.bf16.mxu0 0
      %2749 = vmatmul.mubr.bf16.gmra.mrb[0].mxu0 %v2401
      %v2750 = vpop.f32.mrb[0].mxu0
      %v2751 = vadd.f32 %v2551, %v2750
      %v2752 = vpop.f32.mrb[0].mxu0
      %v2753 = vpop.f32.mrb[0].mxu0
      %v2754 = vadd.f32 %v2554, %v2753
      %v2755 = vpop.f32.mrb[0].mxu0
      %2756 = vmatprep.mubr.bf16.mxu0 0
      %2757 = vmatmul.mubr.bf16.gmra.mrb[0].mxu0 %v2404
      %v2758 = vpop.f32.mrb[0].mxu0
      %v2759 = vadd.f32 %v2559, %v2758
      %v2760 = vpop.f32.mrb[0].mxu0
      %v2761 = vpop.f32.mrb[0].mxu0
      %v2762 = vadd.f32 %v2562, %v2761
      %v2763 = vpop.f32.mrb[0].mxu0
      %2764 = vmatprep.mubr.bf16.mxu0 0
      %2765 = vmatmul.mubr.bf16.gmra.mrb[0].mxu0 %v2407
      %v2766 = vpop.f32.mrb[0].mxu0
      %v2767 = vadd.f32 %v2567, %v2766
      %v2768 = vpop.f32.mrb[0].mxu0
      %v2769 = vpop.f32.mrb[0].mxu0
      %v2770 = vadd.f32 %v2570, %v2769
      %v2771 = vpop.f32.mrb[0].mxu0
      %2772 = vdwg.mxu0
      %v2773 = vld [vmem:[#allocation2 + $0x20] sm:$0xff]
      %v2774 = vld [vmem:[#allocation2 + $0x28] sm:$0xff]
      %v2775 = vld [vmem:[#allocation2 + $0x30] sm:$0xff]
      %v2776 = vld [vmem:[#allocation2 + $0x38] sm:$0xff]
      %v2777 = vld [vmem:[#allocation2 + $0x40] sm:$0xff]
      %v2778 = vld [vmem:[#allocation2 + $0x48] sm:$0xff]
      %v2779 = vld [vmem:[#allocation2 + $0x50] sm:$0xff]
      %v2780 = vld [vmem:[#allocation2 + $0x58] sm:$0xff]
      %v2781 = vld [vmem:[#allocation2 + $0x60] sm:$0xff]
      %v2782 = vld [vmem:[#allocation2 + $0x68] sm:$0xff]
      %v2783 = vld [vmem:[#allocation2 + $0x70] sm:$0xff]
      %v2784 = vld [vmem:[#allocation2 + $0x78] sm:$0xff]
      %v2785 = vld [vmem:[#allocation2 + $0x80] sm:$0xff]
      %v2786 = vld [vmem:[#allocation2 + $0x88] sm:$0xff]
      %v2787 = vld [vmem:[#allocation2 + $0x90] sm:$0xff]
      %v2788 = vld [vmem:[#allocation2 + $0x98] sm:$0xff]
      %v2789 = vld [vmem:[#allocation2 + $0xa0] sm:$0xff]
      %v2790 = vld [vmem:[#allocation2 + $0xa8] sm:$0xff]
      %v2791 = vld [vmem:[#allocation2 + $0xb0] sm:$0xff]
      %v2792 = vld [vmem:[#allocation2 + $0xb8] sm:$0xff]
      %v2793 = vld [vmem:[#allocation2 + $0xc0] sm:$0xff]
      %v2794 = vld [vmem:[#allocation2 + $0xc8] sm:$0xff]
      %v2795 = vld [vmem:[#allocation2 + $0xd0] sm:$0xff]
      %v2796 = vld [vmem:[#allocation2 + $0xd8] sm:$0xff]
      %v2797 = vld [vmem:[#allocation2 + $0xe0] sm:$0xff]
      %v2798 = vld [vmem:[#allocation2 + $0xe8] sm:$0xff]
      %v2799 = vld [vmem:[#allocation2 + $0xf0] sm:$0xff]
      %v2800 = vld [vmem:[#allocation2 + $0xf8] sm:$0xff]
      %v2801 = vld [vmem:[#allocation2 + $0x100] sm:$0xff]
      %v2802 = vld [vmem:[#allocation2 + $0x108] sm:$0xff]
      %v2803 = vld [vmem:[#allocation2 + $0x110] sm:$0xff]
      %v2804 = vld [vmem:[#allocation2 + $0x118] sm:$0xff]
      %v2805 = vpack.c.bf16 %v2774, %v2773
      %v2806 = vpack.c.bf16 %v2776, %v2775
      %v2807 = vpack.c.bf16 %v2778, %v2777
      %v2808 = vpack.c.bf16 %v2780, %v2779
      %v2809 = vpack.c.bf16 %v2782, %v2781
      %v2810 = vpack.c.bf16 %v2784, %v2783
      %v2811 = vpack.c.bf16 %v2786, %v2785
      %v2812 = vpack.c.bf16 %v2788, %v2787
      %v2813 = vpack.c.bf16 %v2790, %v2789
      %v2814 = vpack.c.bf16 %v2792, %v2791
      %v2815 = vpack.c.bf16 %v2794, %v2793
      %v2816 = vpack.c.bf16 %v2796, %v2795
      %v2817 = vpack.c.bf16 %v2798, %v2797
      %v2818 = vpack.c.bf16 %v2800, %v2799
      %v2819 = vpack.c.bf16 %v2802, %v2801
      %v2820 = vpack.c.bf16 %v2804, %v2803
      %v2821 = vld [vmem:[%s5 + $0x60] sm:$0xf]
      %v2822 = vld [vmem:[%s5 + $0x64] sm:$0xf]
      %v2823 = vld [vmem:[%s5 + $0x68] sm:$0xf]
      %v2824 = vld [vmem:[%s5 + $0x6c] sm:$0xf]
      %v2825 = vld [vmem:[%s5 + $0x70] sm:$0xf]
      %v2826 = vld [vmem:[%s5 + $0x74] sm:$0xf]
      %v2827 = vld [vmem:[%s5 + $0x78] sm:$0xf]
      %v2828 = vld [vmem:[%s5 + $0x7c] sm:$0xf]
      %v2829 = vld [vmem:[%s5 + $0x80] sm:$0xf]
      %v2830 = vld [vmem:[%s5 + $0x84] sm:$0xf]
      %v2831 = vld [vmem:[%s5 + $0x88] sm:$0xf]
      %v2832 = vld [vmem:[%s5 + $0x8c] sm:$0xf]
      %v2845 = vunpack.c.l.b16 %v2821
      %v2846 = vunpack.c.l.b16 %v2822
      %v2847 = vunpack.c.l.b16 %v2823
      %v2848 = vunpack.c.l.b16 %v2824
      %v2849 = vunpack.c.l.b16 %v2825
      %v2850 = vunpack.c.l.b16 %v2826
      %v2851 = vunpack.c.l.b16 %v2827
      %v2852 = vunpack.c.l.b16 %v2828
      %v2853 = vunpack.c.l.b16 %v2829
      %v2854 = vunpack.c.l.b16 %v2830
      %v2855 = vunpack.c.l.b16 %v2831
      %v2856 = vunpack.c.l.b16 %v2832
      %v2857 = vpack.c.b16 %v2846, %v2845
      %v2858 = vpack.c.b16 %v2848, %v2847
      %v2859 = vpack.c.b16 %v2850, %v2849
      %v2860 = vpack.c.b16 %v2852, %v2851
      %v2861 = vpack.c.b16 %v2854, %v2853
      %v2862 = vpack.c.b16 %v2856, %v2855
      %v2870 = vsel %vm1218, %v2805, 0
      %v2873 = vsel %vm1218, %v2806, 0
      %v2876 = vsel %vm1218, %v2807, 0
      %v2879 = vsel %vm1218, %v2808, 0
      %v2882 = vsel %vm1218, %v2809, 0
      %v2885 = vsel %vm1218, %v2810, 0
      %v2888 = vsel %vm1218, %v2811, 0
      %v2891 = vsel %vm1218, %v2812, 0
      %v2894 = vsel %vm1218, %v2813, 0
      %v2897 = vsel %vm1218, %v2814, 0
      %v2900 = vsel %vm1218, %v2815, 0
      %v2903 = vsel %vm1218, %v2816, 0
      %v2906 = vsel %vm1218, %v2817, 0
      %v2909 = vsel %vm1218, %v2818, 0
      %v2912 = vsel %vm1218, %v2819, 0
      %v2915 = vsel %vm1218, %v2820, 0
      %2917 = vmatprep.subr.bf16.mxu0 0
      %2918 = vmatpush1.bf16.msra.mxu0 %v2857
      %2919 = vmatprep.subr.bf16.mxu0 0
      %2920 = vmatpush1.bf16.msra.mxu0 %v2858
      %2921 = vmatprep.subr.bf16.mxu0 0
      %2922 = vmatpush1.bf16.msra.mxu0 %v2859
      %2923 = vmatprep.subr.bf16.mxu0 0
      %2924 = vmatpush1.bf16.msra.mxu0 %v2860
      %2925 = vmatprep.subr.bf16.mxu0 0
      %2926 = vmatpush1.bf16.msra.mxu0 %v2861
      %2927 = vmatprep.subr.bf16.mxu0 0
      %2928 = vmatpush1.bf16.msra.mxu0 %v2862
      %2929 = vmatprep.subr.bf16.mxu0 0
      %2930 = vmatpush1.bf16.msra.mxu0 0
      %2931 = vmatprep.subr.bf16.mxu0 0
      %2932 = vmatpush1.bf16.msra.mxu0 0
      %2933 = vmatprep.subr.bf16.mxu0 0
      %2934 = vmatpush1.bf16.msra.mxu0 0
      %2935 = vmatprep.subr.bf16.mxu0 0
      %2936 = vmatpush1.bf16.msra.mxu0 0
      %2937 = vmatprep.subr.bf16.mxu0 0
      %2938 = vmatpush1.bf16.msra.mxu0 0
      %2939 = vmatprep.subr.bf16.mxu0 0
      %2940 = vmatpush1.bf16.msra.mxu0 0
      %2941 = vmatprep.subr.bf16.mxu0 0
      %2942 = vmatpush1.bf16.msra.mxu0 0
      %2943 = vmatprep.subr.bf16.mxu0 0
      %2944 = vmatpush1.bf16.msra.mxu0 0
      %2945 = vmatprep.subr.bf16.mxu0 0
      %2946 = vmatpush1.bf16.msra.mxu0 0
      %2947 = vmatprep.subr.bf16.mxu0 0
      %2948 = vmatpush1.bf16.msra.mxu0 0
      %2949 = vmatprep.mubr.bf16.mxu0 0
      %2950 = vmatmul.mubr.bf16.gmra.mrb[0].mxu0 %v2870
      %v2951 = vpop.f32.mrb[0].mxu0
      %v2952 = vadd.f32 0.0, %v2951
      %v2953 = vpop.f32.mrb[0].mxu0
      %v2954 = vpop.f32.mrb[0].mxu0
      %v2955 = vadd.f32 0.0, %v2954
      %v2956 = vpop.f32.mrb[0].mxu0
      %2957 = vmatprep.mubr.bf16.mxu0 0
      %2958 = vmatmul.mubr.bf16.gmra.mrb[0].mxu0 %v2873
      %v2959 = vpop.f32.mrb[0].mxu0
      %v2960 = vadd.f32 0.0, %v2959
      %v2961 = vpop.f32.mrb[0].mxu0
      %v2962 = vpop.f32.mrb[0].mxu0
      %v2963 = vadd.f32 0.0, %v2962
      %v2964 = vpop.f32.mrb[0].mxu0
      %2965 = vmatprep.mubr.bf16.mxu0 0
      %2966 = vmatmul.mubr.bf16.gmra.mrb[0].mxu0 %v2876
      %v2967 = vpop.f32.mrb[0].mxu0
      %v2968 = vadd.f32 0.0, %v2967
      %v2969 = vpop.f32.mrb[0].mxu0
      %v2970 = vpop.f32.mrb[0].mxu0
      %v2971 = vadd.f32 0.0, %v2970
      %v2972 = vpop.f32.mrb[0].mxu0
      %2973 = vmatprep.mubr.bf16.mxu0 0
      %2974 = vmatmul.mubr.bf16.gmra.mrb[0].mxu0 %v2879
      %v2975 = vpop.f32.mrb[0].mxu0
      %v2976 = vadd.f32 0.0, %v2975
      %v2977 = vpop.f32.mrb[0].mxu0
      %v2978 = vpop.f32.mrb[0].mxu0
      %v2979 = vadd.f32 0.0, %v2978
      %v2980 = vpop.f32.mrb[0].mxu0
      %2981 = vmatprep.mubr.bf16.mxu0 0
      %2982 = vmatmul.mubr.bf16.gmra.mrb[0].mxu0 %v2882
      %v2983 = vpop.f32.mrb[0].mxu0
      %v2984 = vadd.f32 0.0, %v2983
      %v2985 = vpop.f32.mrb[0].mxu0
      %v2986 = vpop.f32.mrb[0].mxu0
      %v2987 = vadd.f32 0.0, %v2986
      %v2988 = vpop.f32.mrb[0].mxu0
      %2989 = vmatprep.mubr.bf16.mxu0 0
      %2990 = vmatmul.mubr.bf16.gmra.mrb[0].mxu0 %v2885
      %v2991 = vpop.f32.mrb[0].mxu0
      %v2992 = vadd.f32 0.0, %v2991
      %v2993 = vpop.f32.mrb[0].mxu0
      %v2994 = vpop.f32.mrb[0].mxu0
      %v2995 = vadd.f32 0.0, %v2994
      %v2996 = vpop.f32.mrb[0].mxu0
      %2997 = vmatprep.mubr.bf16.mxu0 0
      %2998 = vmatmul.mubr.bf16.gmra.mrb[0].mxu0 %v2888
      %v2999 = vpop.f32.mrb[0].mxu0
      %v3000 = vadd.f32 0.0, %v2999
      %v3001 = vpop.f32.mrb[0].mxu0
      %v3002 = vpop.f32.mrb[0].mxu0
      %v3003 = vadd.f32 0.0, %v3002
      %v3004 = vpop.f32.mrb[0].mxu0
      %3005 = vmatprep.mubr.bf16.mxu0 0
      %3006 = vmatmul.mubr.bf16.gmra.mrb[0].mxu0 %v2891
      %v3007 = vpop.f32.mrb[0].mxu0
      %v3008 = vadd.f32 0.0, %v3007
      %v3009 = vpop.f32.mrb[0].mxu0
      %v3010 = vpop.f32.mrb[0].mxu0
      %v3011 = vadd.f32 0.0, %v3010
      %v3012 = vpop.f32.mrb[0].mxu0
      %3013 = vmatprep.mubr.bf16.mxu0 0
      %3014 = vmatmul.mubr.bf16.gmra.mrb[0].mxu0 %v2894
      %v3015 = vpop.f32.mrb[0].mxu0
      %v3016 = vadd.f32 0.0, %v3015
      %v3017 = vpop.f32.mrb[0].mxu0
      %v3018 = vpop.f32.mrb[0].mxu0
      %v3019 = vadd.f32 0.0, %v3018
      %v3020 = vpop.f32.mrb[0].mxu0
      %3021 = vmatprep.mubr.bf16.mxu0 0
      %3022 = vmatmul.mubr.bf16.gmra.mrb[0].mxu0 %v2897
      %v3023 = vpop.f32.mrb[0].mxu0
      %v3024 = vadd.f32 0.0, %v3023
      %v3025 = vpop.f32.mrb[0].mxu0
      %v3026 = vpop.f32.mrb[0].mxu0
      %v3027 = vadd.f32 0.0, %v3026
      %v3028 = vpop.f32.mrb[0].mxu0
      %3029 = vmatprep.mubr.bf16.mxu0 0
      %3030 = vmatmul.mubr.bf16.gmra.mrb[0].mxu0 %v2900
      %v3031 = vpop.f32.mrb[0].mxu0
      %v3032 = vadd.f32 0.0, %v3031
      %v3033 = vpop.f32.mrb[0].mxu0
      %v3034 = vpop.f32.mrb[0].mxu0
      %v3035 = vadd.f32 0.0, %v3034
      %v3036 = vpop.f32.mrb[0].mxu0
      %3037 = vmatprep.mubr.bf16.mxu0 0
      %3038 = vmatmul.mubr.bf16.gmra.mrb[0].mxu0 %v2903
      %v3039 = vpop.f32.mrb[0].mxu0
      %v3040 = vadd.f32 0.0, %v3039
      %v3041 = vpop.f32.mrb[0].mxu0
      %v3042 = vpop.f32.mrb[0].mxu0
      %v3043 = vadd.f32 0.0, %v3042
      %v3044 = vpop.f32.mrb[0].mxu0
      %3045 = vmatprep.mubr.bf16.mxu0 0
      %3046 = vmatmul.mubr.bf16.gmra.mrb[0].mxu0 %v2906
      %v3047 = vpop.f32.mrb[0].mxu0
      %v3048 = vadd.f32 0.0, %v3047
      %v3049 = vpop.f32.mrb[0].mxu0
      %v3050 = vpop.f32.mrb[0].mxu0
      %v3051 = vadd.f32 0.0, %v3050
      %v3052 = vpop.f32.mrb[0].mxu0
      %3053 = vmatprep.mubr.bf16.mxu0 0
      %3054 = vmatmul.mubr.bf16.gmra.mrb[0].mxu0 %v2909
      %v3055 = vpop.f32.mrb[0].mxu0
      %v3056 = vadd.f32 0.0, %v3055
      %v3057 = vpop.f32.mrb[0].mxu0
      %v3058 = vpop.f32.mrb[0].mxu0
      %v3059 = vadd.f32 0.0, %v3058
      %v3060 = vpop.f32.mrb[0].mxu0
      %3061 = vmatprep.mubr.bf16.mxu0 0
      %3062 = vmatmul.mubr.bf16.gmra.mrb[0].mxu0 %v2912
      %v3063 = vpop.f32.mrb[0].mxu0
      %v3064 = vadd.f32 0.0, %v3063
      %v3065 = vpop.f32.mrb[0].mxu0
      %v3066 = vpop.f32.mrb[0].mxu0
      %v3067 = vadd.f32 0.0, %v3066
      %v3068 = vpop.f32.mrb[0].mxu0
      %3069 = vmatprep.mubr.bf16.mxu0 0
      %3070 = vmatmul.mubr.bf16.gmra.mrb[0].mxu0 %v2915
      %v3071 = vpop.f32.mrb[0].mxu0
      %v3072 = vadd.f32 0.0, %v3071
      %v3073 = vpop.f32.mrb[0].mxu0
      %v3074 = vpop.f32.mrb[0].mxu0
      %v3075 = vadd.f32 0.0, %v3074
      %v3076 = vpop.f32.mrb[0].mxu0
      %3077 = vdwg.mxu0
      %v3078 = vadd.f32 %v2647, %v2952
      %v3079 = vadd.f32 %v2650, %v2955
      %v3080 = vadd.f32 %v2655, %v2960
      %v3081 = vadd.f32 %v2658, %v2963
      %v3082 = vadd.f32 %v2663, %v2968
      %v3083 = vadd.f32 %v2666, %v2971
      %v3084 = vadd.f32 %v2671, %v2976
      %v3085 = vadd.f32 %v2674, %v2979
      %v3086 = vadd.f32 %v2679, %v2984
      %v3087 = vadd.f32 %v2682, %v2987
      %v3088 = vadd.f32 %v2687, %v2992
      %v3089 = vadd.f32 %v2690, %v2995
      %v3090 = vadd.f32 %v2695, %v3000
      %v3091 = vadd.f32 %v2698, %v3003
      %v3092 = vadd.f32 %v2703, %v3008
      %v3093 = vadd.f32 %v2706, %v3011
      %v3094 = vadd.f32 %v2711, %v3016
      %v3095 = vadd.f32 %v2714, %v3019
      %v3096 = vadd.f32 %v2719, %v3024
      %v3097 = vadd.f32 %v2722, %v3027
      %v3098 = vadd.f32 %v2727, %v3032
      %v3099 = vadd.f32 %v2730, %v3035
      %v3100 = vadd.f32 %v2735, %v3040
      %v3101 = vadd.f32 %v2738, %v3043
      %v3102 = vadd.f32 %v2743, %v3048
      %v3103 = vadd.f32 %v2746, %v3051
      %v3104 = vadd.f32 %v2751, %v3056
      %v3105 = vadd.f32 %v2754, %v3059
      %v3106 = vadd.f32 %v2759, %v3064
      %v3107 = vadd.f32 %v2762, %v3067
      %v3108 = vadd.f32 %v2767, %v3072
      %v3109 = vadd.f32 %v2770, %v3075
      %v3110 = vld [vmem:[%s6] sm:$0x1]
      %v3112 = vlaneseq
      %v3113 = vshrl.u32 %v3112, 7
      %v3114 = vsub.s32 0, %v3113
      %v3115 = vrot.slane %v3110, %v3114
      %v3117 = vadd.f32 %v3078, %v3115
      %v3118 = vadd.f32 %v3079, %v3115
      %v3119 = vadd.f32 %v3080, %v3115
      %v3120 = vadd.f32 %v3081, %v3115
      %v3121 = vadd.f32 %v3082, %v3115
      %v3122 = vadd.f32 %v3083, %v3115
      %v3123 = vadd.f32 %v3084, %v3115
      %v3124 = vadd.f32 %v3085, %v3115
      %v3125 = vadd.f32 %v3086, %v3115
      %v3126 = vadd.f32 %v3087, %v3115
      %v3127 = vadd.f32 %v3088, %v3115
      %v3128 = vadd.f32 %v3089, %v3115
      %v3129 = vadd.f32 %v3090, %v3115
      %v3130 = vadd.f32 %v3091, %v3115
      %v3131 = vadd.f32 %v3092, %v3115
      %v3132 = vadd.f32 %v3093, %v3115
      %v3133 = vadd.f32 %v3094, %v3115
      %v3134 = vadd.f32 %v3095, %v3115
      %v3135 = vadd.f32 %v3096, %v3115
      %v3136 = vadd.f32 %v3097, %v3115
      %v3137 = vadd.f32 %v3098, %v3115
      %v3138 = vadd.f32 %v3099, %v3115
      %v3139 = vadd.f32 %v3100, %v3115
      %v3140 = vadd.f32 %v3101, %v3115
      %v3141 = vadd.f32 %v3102, %v3115
      %v3142 = vadd.f32 %v3103, %v3115
      %v3143 = vadd.f32 %v3104, %v3115
      %v3144 = vadd.f32 %v3105, %v3115
      %v3145 = vadd.f32 %v3106, %v3115
      %v3146 = vadd.f32 %v3107, %v3115
      %v3147 = vadd.f32 %v3108, %v3115
      %v3148 = vadd.f32 %v3109, %v3115
      %v3149 = vld [vmem:[%s368] sm:$0x1]
      %v3150 = vld [vmem:[%s8] sm:$0xf]
      %v3151 = vld [vmem:[%s8 + $0x4] sm:$0xf]
      %v3152 = vld [vmem:[%s8 + $0x8] sm:$0xf]
      %v3153 = vld [vmem:[%s8 + $0xc] sm:$0xf]
      %v3154 = vld [vmem:[%s9] sm:$0x1]
      %v3159 = vunpack.c.l.b16 %v3150
      %v3160 = vunpack.c.l.b16 %v3151
      %v3161 = vunpack.c.l.b16 %v3152
      %v3162 = vunpack.c.l.b16 %v3153
      %v3163 = vpack.c.b16 %v3160, %v3159
      %v3164 = vpack.c.b16 %v3162, %v3161
      %v3168 = vsel %vm439, %v3149, 0
      %3170 = vmatprep.subr.bf16.mxu0 0
      %3171 = vmatpush1.bf16.msra.mxu0 %v3163
      %3172 = vmatprep.subr.bf16.mxu0 0
      %3173 = vmatpush1.bf16.msra.mxu0 %v3164
      %3174 = vmatprep.subr.bf16.mxu0 0
      %3175 = vmatpush1.bf16.msra.mxu0 0
      %3176 = vmatprep.subr.bf16.mxu0 0
      %3177 = vmatpush1.bf16.msra.mxu0 0
      %3178 = vmatprep.subr.bf16.mxu0 0
      %3179 = vmatpush1.bf16.msra.mxu0 0
      %3180 = vmatprep.subr.bf16.mxu0 0
      %3181 = vmatpush1.bf16.msra.mxu0 0
      %3182 = vmatprep.subr.bf16.mxu0 0
      %3183 = vmatpush1.bf16.msra.mxu0 0
      %3184 = vmatprep.subr.bf16.mxu0 0
      %3185 = vmatpush1.bf16.msra.mxu0 0
      %3186 = vmatprep.subr.bf16.mxu0 0
      %3187 = vmatpush1.bf16.msra.mxu0 0
      %3188 = vmatprep.subr.bf16.mxu0 0
      %3189 = vmatpush1.bf16.msra.mxu0 0
      %3190 = vmatprep.subr.bf16.mxu0 0
      %3191 = vmatpush1.bf16.msra.mxu0 0
      %3192 = vmatprep.subr.bf16.mxu0 0
      %3193 = vmatpush1.bf16.msra.mxu0 0
      %3194 = vmatprep.subr.bf16.mxu0 0
      %3195 = vmatpush1.bf16.msra.mxu0 0
      %3196 = vmatprep.subr.bf16.mxu0 0
      %3197 = vmatpush1.bf16.msra.mxu0 0
      %3198 = vmatprep.subr.bf16.mxu0 0
      %3199 = vmatpush1.bf16.msra.mxu0 0
      %3200 = vmatprep.subr.bf16.mxu0 0
      %3201 = vmatpush1.bf16.msra.mxu0 0
      %3202 = vmatprep.mubr.bf16.mxu0 0
      %3203 = vmatmul.mubr.bf16.gmra.mrb[0].mxu0 %v3168
      %v3204 = vpop.f32.mrb[0].mxu0
      %v3205 = vadd.f32 %v3154, %v3204
      %v3206 = vpop.f32.mrb[0].mxu0
      %v3207 = vpop.f32.mrb[0].mxu0
      %v3208 = vpop.f32.mrb[0].mxu0
      %3209 = vdwg.mxu0
      %v3210 = vlaneseq
      %v3211 = vshrl.u32 %v3210, 7
      %v3212 = vsub.s32 0, %v3211
      %v3213 = vrot.slane %v3205, %v3212
      %v3214 = vadd.f32 %v3117, %v3213
      %v3215 = vadd.f32 %v3118, %v3213
      %v3216 = vadd.f32 %v3119, %v3213
      %v3217 = vadd.f32 %v3120, %v3213
      %v3218 = vadd.f32 %v3121, %v3213
      %v3219 = vadd.f32 %v3122, %v3213
      %v3220 = vadd.f32 %v3123, %v3213
      %v3221 = vadd.f32 %v3124, %v3213
      %v3222 = vadd.f32 %v3125, %v3213
      %v3223 = vadd.f32 %v3126, %v3213
      %v3224 = vadd.f32 %v3127, %v3213
      %v3225 = vadd.f32 %v3128, %v3213
      %v3226 = vadd.f32 %v3129, %v3213
      %v3227 = vadd.f32 %v3130, %v3213
      %v3228 = vadd.f32 %v3131, %v3213
      %v3229 = vadd.f32 %v3132, %v3213
      %v3230 = vadd.f32 %v3133, %v3213
      %v3231 = vadd.f32 %v3134, %v3213
      %v3232 = vadd.f32 %v3135, %v3213
      %v3233 = vadd.f32 %v3136, %v3213
      %v3234 = vadd.f32 %v3137, %v3213
      %v3235 = vadd.f32 %v3138, %v3213
      %v3236 = vadd.f32 %v3139, %v3213
      %v3237 = vadd.f32 %v3140, %v3213
      %v3238 = vadd.f32 %v3141, %v3213
      %v3239 = vadd.f32 %v3142, %v3213
      %v3240 = vadd.f32 %v3143, %v3213
      %v3241 = vadd.f32 %v3144, %v3213
      %v3242 = vadd.f32 %v3145, %v3213
      %v3243 = vadd.f32 %v3146, %v3213
      %v3244 = vadd.f32 %v3147, %v3213
      %v3245 = vadd.f32 %v3148, %v3213
      %v3246 = vpack.c.bf16 %v3215, %v3214
      %v3247 = vpack.c.bf16 %v3217, %v3216
      %v3248 = vpack.c.bf16 %v3219, %v3218
      %v3249 = vpack.c.bf16 %v3221, %v3220
      %v3250 = vpack.c.bf16 %v3223, %v3222
      %v3251 = vpack.c.bf16 %v3225, %v3224
      %v3252 = vpack.c.bf16 %v3227, %v3226
      %v3253 = vpack.c.bf16 %v3229, %v3228
      %v3254 = vpack.c.bf16 %v3231, %v3230
      %v3255 = vpack.c.bf16 %v3233, %v3232
      %v3256 = vpack.c.bf16 %v3235, %v3234
      %v3257 = vpack.c.bf16 %v3237, %v3236
      %v3258 = vpack.c.bf16 %v3239, %v3238
      %v3259 = vpack.c.bf16 %v3241, %v3240
      %v3260 = vpack.c.bf16 %v3243, %v3242
      %v3261 = vpack.c.bf16 %v3245, %v3244
      %v3278 = vunpack.c.l.b16 %v3246
      %v3279 = vunpack.c.h.b16 %v3246
      %v3280 = vunpack.c.l.b16 %v3247
      %v3281 = vunpack.c.h.b16 %v3247
      %v3282 = vunpack.c.l.b16 %v3248
      %v3283 = vunpack.c.h.b16 %v3248
      %v3284 = vunpack.c.l.b16 %v3249
      %v3285 = vunpack.c.h.b16 %v3249
      %v3286 = vunpack.c.l.b16 %v3250
      %v3287 = vunpack.c.h.b16 %v3250
      %v3288 = vunpack.c.l.b16 %v3251
      %v3289 = vunpack.c.h.b16 %v3251
      %v3290 = vunpack.c.l.b16 %v3252
      %v3291 = vunpack.c.h.b16 %v3252
      %v3292 = vunpack.c.l.b16 %v3253
      %v3293 = vunpack.c.h.b16 %v3253
      %v3294 = vunpack.c.l.b16 %v3254
      %v3295 = vunpack.c.h.b16 %v3254
      %v3296 = vunpack.c.l.b16 %v3255
      %v3297 = vunpack.c.h.b16 %v3255
      %v3298 = vunpack.c.l.b16 %v3256
      %v3299 = vunpack.c.h.b16 %v3256
      %v3300 = vunpack.c.l.b16 %v3257
      %v3301 = vunpack.c.h.b16 %v3257
      %v3302 = vunpack.c.l.b16 %v3258
      %v3303 = vunpack.c.h.b16 %v3258
      %v3304 = vunpack.c.l.b16 %v3259
      %v3305 = vunpack.c.h.b16 %v3259
      %v3306 = vunpack.c.l.b16 %v3260
      %v3307 = vunpack.c.h.b16 %v3260
      %v3308 = vunpack.c.l.b16 %v3261
      %v3309 = vunpack.c.h.b16 %v3261
      %v3310 = vpack.c.b16 %v3278, %v3278
      %v3311 = vpack.c.b16 %v3279, %v3279
      %v3312 = vpack.c.b16 %v3280, %v3280
      %v3313 = vpack.c.b16 %v3281, %v3281
      %v3314 = vpack.c.b16 %v3282, %v3282
      %v3315 = vpack.c.b16 %v3283, %v3283
      %v3316 = vpack.c.b16 %v3284, %v3284
      %v3317 = vpack.c.b16 %v3285, %v3285
      %v3318 = vpack.c.b16 %v3286, %v3286
      %v3319 = vpack.c.b16 %v3287, %v3287
      %v3320 = vpack.c.b16 %v3288, %v3288
      %v3321 = vpack.c.b16 %v3289, %v3289
      %v3322 = vpack.c.b16 %v3290, %v3290
      %v3323 = vpack.c.b16 %v3291, %v3291
      %v3324 = vpack.c.b16 %v3292, %v3292
      %v3325 = vpack.c.b16 %v3293, %v3293
      %v3326 = vpack.c.b16 %v3294, %v3294
      %v3327 = vpack.c.b16 %v3295, %v3295
      %v3328 = vpack.c.b16 %v3296, %v3296
      %v3329 = vpack.c.b16 %v3297, %v3297
      %v3330 = vpack.c.b16 %v3298, %v3298
      %v3331 = vpack.c.b16 %v3299, %v3299
      %v3332 = vpack.c.b16 %v3300, %v3300
      %v3333 = vpack.c.b16 %v3301, %v3301
      %v3334 = vpack.c.b16 %v3302, %v3302
      %v3335 = vpack.c.b16 %v3303, %v3303
      %v3336 = vpack.c.b16 %v3304, %v3304
      %v3337 = vpack.c.b16 %v3305, %v3305
      %v3338 = vpack.c.b16 %v3306, %v3306
      %v3339 = vpack.c.b16 %v3307, %v3307
      %v3340 = vpack.c.b16 %v3308, %v3308
      %v3341 = vpack.c.b16 %v3309, %v3309
      %vm3374 = vcmask 519168
      %3375 = vst.msk [vmem:[%s373] sm:$0xf] %vm3374, %v3310
      %3376 = vst.msk [vmem:[%s373 + $0x4] sm:$0xf] %vm3374, %v3311
      %3377 = vst.msk [vmem:[%s373 + $0x8] sm:$0xf] %vm3374, %v3312
      %3378 = vst.msk [vmem:[%s373 + $0xc] sm:$0xf] %vm3374, %v3313
      %3379 = vst.msk [vmem:[%s373 + $0x10] sm:$0xf] %vm3374, %v3314
      %3380 = vst.msk [vmem:[%s373 + $0x14] sm:$0xf] %vm3374, %v3315
      %3381 = vst.msk [vmem:[%s373 + $0x18] sm:$0xf] %vm3374, %v3316
      %3382 = vst.msk [vmem:[%s373 + $0x1c] sm:$0xf] %vm3374, %v3317
      %3383 = vst.msk [vmem:[%s373 + $0x20] sm:$0xf] %vm3374, %v3318
      %3384 = vst.msk [vmem:[%s373 + $0x24] sm:$0xf] %vm3374, %v3319
      %3385 = vst.msk [vmem:[%s373 + $0x28] sm:$0xf] %vm3374, %v3320
      %3386 = vst.msk [vmem:[%s373 + $0x2c] sm:$0xf] %vm3374, %v3321
      %3387 = vst.msk [vmem:[%s373 + $0x30] sm:$0xf] %vm3374, %v3322
      %3388 = vst.msk [vmem:[%s373 + $0x34] sm:$0xf] %vm3374, %v3323
      %3389 = vst.msk [vmem:[%s373 + $0x38] sm:$0xf] %vm3374, %v3324
      %3390 = vst.msk [vmem:[%s373 + $0x3c] sm:$0xf] %vm3374, %v3325
      %3391 = vst.msk [vmem:[%s373 + $0x40] sm:$0xf] %vm3374, %v3326
      %3392 = vst.msk [vmem:[%s373 + $0x44] sm:$0xf] %vm3374, %v3327
      %3393 = vst.msk [vmem:[%s373 + $0x48] sm:$0xf] %vm3374, %v3328
      %3394 = vst.msk [vmem:[%s373 + $0x4c] sm:$0xf] %vm3374, %v3329
      %3395 = vst.msk [vmem:[%s373 + $0x50] sm:$0xf] %vm3374, %v3330
      %3396 = vst.msk [vmem:[%s373 + $0x54] sm:$0xf] %vm3374, %v3331
      %3397 = vst.msk [vmem:[%s373 + $0x58] sm:$0xf] %vm3374, %v3332
      %3398 = vst.msk [vmem:[%s373 + $0x5c] sm:$0xf] %vm3374, %v3333
      %3399 = vst.msk [vmem:[%s373 + $0x60] sm:$0xf] %vm3374, %v3334
      %3400 = vst.msk [vmem:[%s373 + $0x64] sm:$0xf] %vm3374, %v3335
      %3401 = vst.msk [vmem:[%s373 + $0x68] sm:$0xf] %vm3374, %v3336
      %3402 = vst.msk [vmem:[%s373 + $0x6c] sm:$0xf] %vm3374, %v3337
      %3403 = vst.msk [vmem:[%s373 + $0x70] sm:$0xf] %vm3374, %v3338
      %3404 = vst.msk [vmem:[%s373 + $0x74] sm:$0xf] %vm3374, %v3339
      %3405 = vst.msk [vmem:[%s373 + $0x78] sm:$0xf] %vm3374, %v3340
      %3406 = vst.msk [vmem:[%s373 + $0x7c] sm:$0xf] %vm3374, %v3341
      %p3407 = scmp.lt.s32.totalorder %s21, 1
      %s3408 = scalar_select %p3407, %s21, 1
      %s3409 = smul.addr %s3408, 32
      %s3410 = smul.addr %s3409, 4
      %s3411 = scalar_lea.vmem %s10, %s3410
      // Predicated region
      $region61: #{tpu_custom_call.1} parent=59 // pred_check
        %p3412 = pneg %p259
      $region62: #{tpu_custom_call.1} parent=59 // pred_check_branch
        %3414 = sbr.rel (%p3412) target = $region64
      $region63: #{tpu_custom_call.1} parent=59 // pred_region
        _
      $region64: #{tpu_custom_call.1} parent=59 // pred_fallthru
        _
    $region60: #{tpu_custom_call.1} parent=5 // pred_fallthru
      _
    %p3415 = scmp.le.s32.totalorder 2, %s16
    // Predicated region
    $region65: #{tpu_custom_call.1} parent=5 // pred_check
      %p3416 = pneg %p3415
    $region66: #{tpu_custom_call.1} parent=5 // pred_check_branch
      %3418 = sbr.rel (%p3416) target = $region68
    $region67: #{tpu_custom_call.1} parent=5 // pred_region
      %s3419 = ssub.s32 %s16, 2
      // Predicated region
      $region69: #{tpu_custom_call.1} parent=67 // pred_check
        %p3420 = pneg %p265
      $region70: #{tpu_custom_call.1} parent=67 // pred_check_branch
        %3422 = sbr.rel (%p3420) target = $region72
      $region71: #{tpu_custom_call.1} parent=67 // pred_region
        %p3423 = scmp.lt.s32.totalorder %s22, 1
        %s3424 = scalar_select %p3423, %s22, 1
        %s3425 = smul.addr %s3424, 32
        %s3426 = smul.addr %s3425, 4
        %s3427 = scalar_lea.vmem %s10, %s3426
      $region72: #{tpu_custom_call.1} parent=67 // pred_fallthru
        _
    $region68: #{tpu_custom_call.1} parent=5 // pred_fallthru
      _
  $region6: #{tpu_custom_call.1} parent=0 // loop_footer
    %s20 = sadd.s32 1, %s16
  $region7: #{tpu_custom_call.1} parent=0 // loop_footer_branch
    %15 = sbr.rel target = $region3
  $region8: #{tpu_custom_call.1} parent=0 // loop_exit
    _

</llo_original>
